<compile_context>
chip_gen: v7x
topology: tpu7x:2x2x1
jax: 0.10.0
libtpu: 0.0.40
codegen_flags: <defaults>
</compile_context>

<pallas_src>
import jax
import jax.numpy as jnp
from jax import lax
from jax.experimental import pallas as pl
from jax.experimental.pallas import tpu as pltpu


# ----------------------------------------------------------------------------
# Fused kernel: GCN (all snapshots) + batched layer-0 projection + 2-layer
# LSTM recurrence (PyTorch i,f,g,o gate order) + final Linear.
# ----------------------------------------------------------------------------
def _make_fused_kernel(L, B, N, Hs, Ht, Fp):
    R = B * N
    G = 4 * Ht

    def kernel(x3_ref, wgcn_ref, a_ref, w_ref, b_ref, out_ref, xproj_ref):
        bf16, f32 = jnp.bfloat16, jnp.float32

        # ---- unpack weight / bias slabs (static, sublane-aligned slices) ----
        wih0 = w_ref[0:Hs, 0:G]                       # (Hs, 4Ht) bf16
        whh0 = w_ref[Hs:Hs + Ht, 0:G]                 # (Ht, 4Ht) bf16
        wih1 = w_ref[Hs + Ht:Hs + 2 * Ht, 0:G]        # (Ht, 4Ht) bf16
        whh1 = w_ref[Hs + 2 * Ht:Hs + 3 * Ht, 0:G]    # (Ht, 4Ht) bf16
        wfc = w_ref[Hs + 3 * Ht:Hs + 4 * Ht, 0:Fp]    # (Ht, Fp)  bf16
        b0 = b_ref[0:1, 0:G]                          # (1, 4Ht)  f32
        b1 = b_ref[8:9, 0:G]                          # (1, 4Ht)  f32
        bfc = b_ref[16:17, 0:Fp]                      # (1, Fp)   f32

        # ---- GCN over every (t, b) snapshot (hoisted; no recurrence dep) ----
        # support[(t,b,m), h] = sum_c x[b,t,m,c] * W_gcn[c,h]   (dropout = id)
        support = jnp.dot(x3_ref[...], wgcn_ref[...],
                          preferred_element_type=f32)            # (L*B*N, Hs)
        # gcn[(t,b,n), h] = relu( sum_m adj[n,m] * support[(t,b,m), h] )
        gcn = jnp.dot(a_ref[...], support.astype(bf16),
                      preferred_element_type=f32)                # (L*B*N, Hs)
        gcn = jnp.maximum(gcn, 0.0).astype(bf16)

        # ---- layer-0 input projection: all L steps in one M = L*R matmul ----
        xproj_ref[...] = jnp.dot(gcn, wih0, preferred_element_type=f32) + b0

        # ---- 2-layer LSTM recurrence + FC on the last hidden state ----------
        def cell(g, c_prev):
            i_g = jax.nn.sigmoid(g[:, 0:Ht])
            f_g = jax.nn.sigmoid(g[:, Ht:2 * Ht])
            g_g = jnp.tanh(g[:, 2 * Ht:3 * Ht])
            o_g = jax.nn.sigmoid(g[:, 3 * Ht:4 * Ht])
            c_new = f_g * c_prev + i_g * g_g
            h_new = o_g * jnp.tanh(c_new)
            return h_new, c_new

        zeros = jnp.zeros((R, Ht), f32)
        h0, c0, h1, c1 = zeros, zeros, zeros, zeros

        # L is small & static -> fully unrolled recurrence.
        for t in range(L):
            # depends only on the PREVIOUS step's h1 -> issues while layer-0
            # work for step t is still in flight (shorter serial chain).
            g1_rec = jnp.dot(h1.astype(bf16), whh1, preferred_element_type=f32)
            # layer 0: only the hidden-state dot is on the critical path.
            g0 = (xproj_ref[t * R:(t + 1) * R, :]
                  + jnp.dot(h0.astype(bf16), whh0, preferred_element_type=f32))
            h0, c0 = cell(g0, c0)
            # layer 1 (inter-layer dropout = identity in eval mode)
            g1 = (g1_rec
                  + jnp.dot(h0.astype(bf16), wih1, preferred_element_type=f32)
                  + b1)
            h1, c1 = cell(g1, c1)

        # final Linear; lane-padded output -> unmasked stores.
        out = jnp.dot(h1.astype(bf16), wfc, preferred_element_type=f32) + bfc
        out_ref[...] = out

    return kernel


def fused_forward(x3, w_gcn, a_big, w_slab, b_slab, *, L, B, N, Hs, Ht, Fp):
    R = B * N
    LBN = L * B * N
    Cin_p = x3.shape[1]
    kernel = _make_fused_kernel(L, B, N, Hs, Ht, Fp)
    full = lambda i: (0, 0)
    return pl.pallas_call(
        kernel,
        out_shape=jax.ShapeDtypeStruct((R, Fp), jnp.float32),
        grid=(1,),
        in_specs=[
            pl.BlockSpec((LBN, Cin_p), full),
            pl.BlockSpec((Cin_p, Hs), full),
            pl.BlockSpec((LBN, LBN), full),
            pl.BlockSpec((Hs + 4 * Ht, w_slab.shape[1]), full),
            pl.BlockSpec((24, b_slab.shape[1]), full),
        ],
        out_specs=pl.BlockSpec((R, Fp), full),
        scratch_shapes=[pltpu.VMEM((L * R, 4 * Ht), jnp.float32)],
        compiler_params=pltpu.CompilerParams(
            dimension_semantics=("arbitrary",),
        ),
    )(x3, w_gcn, a_big, w_slab, b_slab)


# ----------------------------------------------------------------------------
# Full DSTAGNNEnhanced forward (one Pallas kernel + minimal JAX glue)
# ----------------------------------------------------------------------------
@jax.jit
def dstagnn_forward(x, adj, params):
    B, L, N, Cin = x.shape
    Hs = params["w_gcn"].shape[1]
    Ht = params["whh0"].shape[0]
    F = params["wfc"].shape[1]
    G = 4 * Ht
    R = B * N
    Fp = max(128, ((F + 127) // 128) * 128)       # lane-padded FC width
    Wcol = max(G, Fp)

    # shape assumptions that keep every in-kernel slice sublane/lane aligned
    assert Hs % 8 == 0 and Ht % 8 == 0 and R % 8 == 0 and (L * B * N) % 8 == 0

    # ---- input, time-major, rows (t, b, m); contraction dim padded to 8 ----
    Cin_p = ((Cin + 7) // 8) * 8
    x3 = jnp.transpose(x, (1, 0, 2, 3)).reshape(L * B * N, Cin)
    if Cin_p != Cin:
        x3 = jnp.pad(x3, ((0, 0), (0, Cin_p - Cin)))
    x3 = x3.astype(jnp.bfloat16)

    w_gcn = params["w_gcn"]
    if Cin_p != Cin:
        w_gcn = jnp.pad(w_gcn, ((0, Cin_p - Cin), (0, 0)))
    w_gcn = w_gcn.astype(jnp.bfloat16)

    # block-diagonal adjacency: rows/cols (t,b,node) -> GCN output already in
    # the LSTM's (t, b, n) row layout, zero in-kernel reshapes.
    a_big = jnp.kron(jnp.eye(L * B, dtype=adj.dtype), adj).astype(jnp.bfloat16)

    # ---- pack the 8 LSTM/FC operands into 2 slabs --------------------------
    w_slab = jnp.zeros((Hs + 4 * Ht, Wcol), jnp.float32)
    w_slab = w_slab.at[0:Hs, 0:G].set(params["wih0"])
    w_slab = w_slab.at[Hs:Hs + Ht, 0:G].set(params["whh0"])
    w_slab = w_slab.at[Hs + Ht:Hs + 2 * Ht, 0:G].set(params["wih1"])
    w_slab = w_slab.at[Hs + 2 * Ht:Hs + 3 * Ht, 0:G].set(params["whh1"])
    w_slab = w_slab.at[Hs + 3 * Ht:Hs + 4 * Ht, 0:F].set(params["wfc"])
    w_slab = w_slab.astype(jnp.bfloat16)

    b_slab = jnp.zeros((24, Wcol), jnp.float32)          # rows 0 / 8 / 16
    b_slab = b_slab.at[0:1, 0:G].set(params["b0"])
    b_slab = b_slab.at[8:9, 0:G].set(params["b1"])
    b_slab = b_slab.at[16:17, 0:F].set(params["bfc"])

    out_pad = fused_forward(x3, w_gcn, a_big, w_slab, b_slab,
                            L=L, B=B, N=N, Hs=Hs, Ht=Ht, Fp=Fp)   # (R, Fp)
    return out_pad[:, :F].reshape(B, N, F)


# ----------------------------------------------------------------------------
# Pure-JAX f32 reference (mirrors PyTorch eval-mode forward) for validation
# ----------------------------------------------------------------------------
def reference_forward(x, adj, params):
    B, L, N, Cin = x.shape
    sp = jnp.einsum("blnc,ch->blnh", x, params["w_gcn"])
    sp = jnp.einsum("mn,blnh->blmh", adj, sp)
    sp = jnp.maximum(sp, 0.0)
    Hs = sp.shape[-1]
    feats = jnp.transpose(sp, (0, 2, 1, 3)).reshape(B * N, L, Hs)
    xs_tm = jnp.transpose(feats, (1, 0, 2))

    R = B * N
    Ht = params["whh0"].shape[0]
    H = Ht

    def lstm_cell(x_in, h, c, wih, whh, b):
        g = x_in @ wih + h @ whh + b
        i_g = jax.nn.sigmoid(g[:, 0:H])
        f_g = jax.nn.sigmoid(g[:, H:2 * H])
        g_g = jnp.tanh(g[:, 2 * H:3 * H])
        o_g = jax.nn.sigmoid(g[:, 3 * H:4 * H])
        c_new = f_g * c + i_g * g_g
        h_new = o_g * jnp.tanh(c_new)
        return h_new, c_new

    def step(carry, x_t):
        h0, c0, h1, c1 = carry
        h0, c0 = lstm_cell(x_t, h0, c0, params["wih0"], params["whh0"], params["b0"])
        h1, c1 = lstm_cell(h0, h1, c1, params["wih1"], params["whh1"], params["b1"])
        return (h0, c0, h1, c1), None

    init = tuple(jnp.zeros((R, Ht), jnp.float32) for _ in range(4))
    (h0, c0, h1, c1), _ = lax.scan(step, init, xs_tm)
    out = h1 @ params["wfc"] + params["bfc"]
    return out.reshape(B, N, -1)


# ----------------------------------------------------------------------------
def make_params(key, in_channels, spatial_hidden, temporal_hidden, forecast_horizon):
    ks = jax.random.split(key, 10)
    Hs, Ht, F = spatial_hidden, temporal_hidden, forecast_horizon
    s = 0.2
    return {
        # GraphConvolution weight (in_features, out_features)
        "w_gcn": jax.random.normal(ks[0], (in_channels, Hs), jnp.float32) * s,
        # LSTM layer 0 (PyTorch weight_ih_l0.T / weight_hh_l0.T, b = b_ih + b_hh)
        "wih0": jax.random.normal(ks[1], (Hs, 4 * Ht), jnp.float32) * s,
        "whh0": jax.random.normal(ks[2], (Ht, 4 * Ht), jnp.float32) * s,
        "b0": jax.random.normal(ks[3], (1, 4 * Ht), jnp.float32) * s,
        # LSTM layer 1
        "wih1": jax.random.normal(ks[4], (Ht, 4 * Ht), jnp.float32) * s,
        "whh1": jax.random.normal(ks[5], (Ht, 4 * Ht), jnp.float32) * s,
        "b1": jax.random.normal(ks[6], (1, 4 * Ht), jnp.float32) * s,
        # Final Linear (temporal_hidden -> forecast_horizon): stored transposed
        "wfc": jax.random.normal(ks[7], (Ht, F), jnp.float32) * s,
        "bfc": jax.random.normal(ks[8], (1, F), jnp.float32) * s,
    }


if __name__ == "__main__":
    # Small, module-consistent shapes
    B, L, N, Cin = 2, 8, 16, 4          # batch, lookback, num_nodes, in_channels
    Hs, Ht, F = 32, 32, 4               # spatial_hidden, temporal_hidden, forecast_horizon

    key = jax.random.PRNGKey(0)
    kx, kadj, kp = jax.random.split(key, 3)

    x = jax.random.normal(kx, (B, L, N, Cin), jnp.float32)
    adj_raw = jax.random.uniform(kadj, (N, N), jnp.float32)
    adj = adj_raw / jnp.sum(adj_raw, axis=1, keepdims=True)       # row-normalized adjacency

    params = make_params(kp, Cin, Hs, Ht, F)

    out = dstagnn_forward(x, adj, params)
    out = jax.block_until_ready(out)
    assert out.shape == (B, N, F), out.shape

    # bf16 MXU inputs (f32 accumulation) -> compare against f32 reference
    ref = reference_forward(x, adj, params)
    assert jnp.allclose(out, ref, rtol=2e-2, atol=2e-2), (
        float(jnp.max(jnp.abs(out - ref))))

    print("KERNEL_OK")
</pallas_src>

<mosaic_0001>
module attributes {stable_mosaic.version = 11 : i64} {
  func.func @kernel(%arg0: i32, %arg1: memref<256x8xbf16, #tpu.memory_space<vmem>>, %arg2: memref<8x32xbf16, #tpu.memory_space<vmem>>, %arg3: memref<256x256xbf16, #tpu.memory_space<vmem>>, %arg4: memref<160x128xbf16, #tpu.memory_space<vmem>>, %arg5: memref<24x128xf32, #tpu.memory_space<vmem>>, %arg6: memref<32x128xf32, #tpu.memory_space<vmem>>, %arg7: memref<256x128xf32, #tpu.memory_space<vmem>>) attributes {dimension_semantics = [#tpu.dimension_semantics<arbitrary>], iteration_bounds = array<i64: 1>, scalar_prefetch = 0 : i64, scratch_operands = 1 : i64, tpu.core_type = #tpu.core_type<tc>, window_params = [{pipeline_mode = #tpu.pipeline_mode<synchronous>, transform_indices = @transform_0, window_bounds = array<i64: 256, 8>}, {pipeline_mode = #tpu.pipeline_mode<synchronous>, transform_indices = @transform_1, window_bounds = array<i64: 8, 32>}, {pipeline_mode = #tpu.pipeline_mode<synchronous>, transform_indices = @transform_2, window_bounds = array<i64: 256, 256>}, {pipeline_mode = #tpu.pipeline_mode<synchronous>, transform_indices = @transform_3, window_bounds = array<i64: 160, 128>}, {pipeline_mode = #tpu.pipeline_mode<synchronous>, transform_indices = @transform_4, window_bounds = array<i64: 24, 128>}, {pipeline_mode = #tpu.pipeline_mode<synchronous>, transform_indices = @transform_5, window_bounds = array<i64: 32, 128>}]} {
    %c0 = arith.constant 0 : index
    %c0_0 = arith.constant 0 : index
    %0 = vector.load %arg4[%c0, %c0_0] : memref<160x128xbf16, #tpu.memory_space<vmem>>, vector<32x128xbf16>
    %c32 = arith.constant 32 : index
    %c0_1 = arith.constant 0 : index
    %1 = vector.load %arg4[%c32, %c0_1] : memref<160x128xbf16, #tpu.memory_space<vmem>>, vector<32x128xbf16>
    %c64 = arith.constant 64 : index
    %c0_2 = arith.constant 0 : index
    %2 = vector.load %arg4[%c64, %c0_2] : memref<160x128xbf16, #tpu.memory_space<vmem>>, vector<32x128xbf16>
    %c96 = arith.constant 96 : index
    %c0_3 = arith.constant 0 : index
    %3 = vector.load %arg4[%c96, %c0_3] : memref<160x128xbf16, #tpu.memory_space<vmem>>, vector<32x128xbf16>
    %c128 = arith.constant 128 : index
    %c0_4 = arith.constant 0 : index
    %4 = vector.load %arg4[%c128, %c0_4] : memref<160x128xbf16, #tpu.memory_space<vmem>>, vector<32x128xbf16>
    %c0_5 = arith.constant 0 : index
    %c0_6 = arith.constant 0 : index
    %5 = vector.load %arg5[%c0_5, %c0_6] : memref<24x128xf32, #tpu.memory_space<vmem>>, vector<1x128xf32>
    %c8 = arith.constant 8 : index
    %c0_7 = arith.constant 0 : index
    %6 = vector.load %arg5[%c8, %c0_7] : memref<24x128xf32, #tpu.memory_space<vmem>>, vector<1x128xf32>
    %c16 = arith.constant 16 : index
    %c0_8 = arith.constant 0 : index
    %7 = vector.load %arg5[%c16, %c0_8] : memref<24x128xf32, #tpu.memory_space<vmem>>, vector<1x128xf32>
    %c0_9 = arith.constant 0 : index
    %c0_10 = arith.constant 0 : index
    %8 = vector.load %arg1[%c0_9, %c0_10] : memref<256x8xbf16, #tpu.memory_space<vmem>>, vector<256x8xbf16>
    %c0_11 = arith.constant 0 : index
    %c0_12 = arith.constant 0 : index
    %9 = vector.load %arg2[%c0_11, %c0_12] : memref<8x32xbf16, #tpu.memory_space<vmem>>, vector<8x32xbf16>
    %cst = arith.constant dense<0.000000e+00> : vector<256x32xf32>
    %10 = tpu.matmul %8, %9, %cst {dimension_numbers = #tpu.dot_dimension_numbers<[1], [0], [0], [1], [0, 0, 1, 1], [], []>} : vector<256x8xbf16>, vector<8x32xbf16>, vector<256x32xf32> -> vector<256x32xf32>
    %c0_13 = arith.constant 0 : index
    %c0_14 = arith.constant 0 : index
    %11 = vector.load %arg3[%c0_13, %c0_14] : memref<256x256xbf16, #tpu.memory_space<vmem>>, vector<256x256xbf16>
    %12 = arith.truncf %10 : vector<256x32xf32> to vector<256x32xbf16>
    %cst_15 = arith.constant dense<0.000000e+00> : vector<256x32xf32>
    %13 = tpu.matmul %11, %12, %cst_15 {dimension_numbers = #tpu.dot_dimension_numbers<[1], [0], [0], [1], [0, 0, 1, 1], [], []>} : vector<256x256xbf16>, vector<256x32xbf16>, vector<256x32xf32> -> vector<256x32xf32>
    %cst_16 = arith.constant 0.000000e+00 : f32
    %14 = vector.broadcast %cst_16 : f32 to vector<256x32xf32>
    %15 = arith.maximumf %13, %14 : vector<256x32xf32>
    %16 = arith.truncf %15 : vector<256x32xf32> to vector<256x32xbf16>
    %cst_17 = arith.constant dense<0.000000e+00> : vector<256x128xf32>
    %17 = tpu.matmul %16, %0, %cst_17 {dimension_numbers = #tpu.dot_dimension_numbers<[1], [0], [0], [1], [0, 0, 1, 1], [], []>} : vector<256x32xbf16>, vector<32x128xbf16>, vector<256x128xf32> -> vector<256x128xf32>
    %18 = vector.broadcast %5 : vector<1x128xf32> to vector<256x128xf32>
    %19 = arith.addf %17, %18 : vector<256x128xf32>
    %c0_18 = arith.constant 0 : index
    %c0_19 = arith.constant 0 : index
    %20 = vector.load %arg7[%c0_18, %c0_19] : memref<256x128xf32, #tpu.memory_space<vmem>>, vector<256x128xf32>
    tpu.vector_store %arg7[%c0_18, %c0_19], %19 {strides = array<i32>} : memref<256x128xf32, #tpu.memory_space<vmem>>, vector<256x128xf32>,
    %cst_20 = arith.constant 0.000000e+00 : f32
    %21 = vector.broadcast %cst_20 : f32 to vector<32x32xf32>
    %22 = arith.truncf %21 : vector<32x32xf32> to vector<32x32xbf16>
    %cst_21 = arith.constant dense<0.000000e+00> : vector<32x128xf32>
    %23 = tpu.matmul %22, %3, %cst_21 {dimension_numbers = #tpu.dot_dimension_numbers<[1], [0], [0], [1], [0, 0, 1, 1], [], []>} : vector<32x32xbf16>, vector<32x128xbf16>, vector<32x128xf32> -> vector<32x128xf32>
    %c0_22 = arith.constant 0 : index
    %c0_23 = arith.constant 0 : index
    %24 = vector.load %arg7[%c0_22, %c0_23] : memref<256x128xf32, #tpu.memory_space<vmem>>, vector<32x128xf32>
    %25 = arith.truncf %21 : vector<32x32xf32> to vector<32x32xbf16>
    %cst_24 = arith.constant dense<0.000000e+00> : vector<32x128xf32>
    %26 = tpu.matmul %25, %1, %cst_24 {dimension_numbers = #tpu.dot_dimension_numbers<[1], [0], [0], [1], [0, 0, 1, 1], [], []>} : vector<32x32xbf16>, vector<32x128xbf16>, vector<32x128xf32> -> vector<32x128xf32>
    %27 = arith.addf %24, %26 : vector<32x128xf32>
    %28 = vector.extract_strided_slice %27 {offsets = [0, 0], sizes = [32, 32], strides = [1, 1]} : vector<32x128xf32> to vector<32x32xf32>
    %29 = arith.negf %28 : vector<32x32xf32>
    %30 = math.exp %29 : vector<32x32xf32>
    %cst_25 = arith.constant 1.000000e+00 : f32
    %31 = vector.broadcast %cst_25 : f32 to vector<32x32xf32>
    %32 = arith.addf %31, %30 : vector<32x32xf32>
    %33 = arith.divf %31, %32 : vector<32x32xf32>
    %34 = vector.extract_strided_slice %27 {offsets = [0, 32], sizes = [32, 32], strides = [1, 1]} : vector<32x128xf32> to vector<32x32xf32>
    %35 = arith.negf %34 : vector<32x32xf32>
    %36 = math.exp %35 : vector<32x32xf32>
    %cst_26 = arith.constant 1.000000e+00 : f32
    %37 = vector.broadcast %cst_26 : f32 to vector<32x32xf32>
    %38 = arith.addf %37, %36 : vector<32x32xf32>
    %39 = arith.divf %37, %38 : vector<32x32xf32>
    %40 = vector.extract_strided_slice %27 {offsets = [0, 64], sizes = [32, 32], strides = [1, 1]} : vector<32x128xf32> to vector<32x32xf32>
    %41 = math.tanh %40 : vector<32x32xf32>
    %42 = vector.extract_strided_slice %27 {offsets = [0, 96], sizes = [32, 32], strides = [1, 1]} : vector<32x128xf32> to vector<32x32xf32>
    %43 = arith.negf %42 : vector<32x32xf32>
    %44 = math.exp %43 : vector<32x32xf32>
    %cst_27 = arith.constant 1.000000e+00 : f32
    %45 = vector.broadcast %cst_27 : f32 to vector<32x32xf32>
    %46 = arith.addf %45, %44 : vector<32x32xf32>
    %47 = arith.divf %45, %46 : vector<32x32xf32>
    %48 = arith.mulf %39, %21 : vector<32x32xf32>
    %49 = arith.mulf %33, %41 : vector<32x32xf32>
    %50 = arith.addf %48, %49 : vector<32x32xf32>
    %51 = math.tanh %50 : vector<32x32xf32>
    %52 = arith.mulf %47, %51 : vector<32x32xf32>
    %53 = arith.truncf %52 : vector<32x32xf32> to vector<32x32xbf16>
    %cst_28 = arith.constant dense<0.000000e+00> : vector<32x128xf32>
    %54 = tpu.matmul %53, %2, %cst_28 {dimension_numbers = #tpu.dot_dimension_numbers<[1], [0], [0], [1], [0, 0, 1, 1], [], []>} : vector<32x32xbf16>, vector<32x128xbf16>, vector<32x128xf32> -> vector<32x128xf32>
    %55 = arith.addf %23, %54 : vector<32x128xf32>
    %56 = vector.broadcast %6 : vector<1x128xf32> to vector<32x128xf32>
    %57 = arith.addf %55, %56 : vector<32x128xf32>
    %58 = vector.extract_strided_slice %57 {offsets = [0, 0], sizes = [32, 32], strides = [1, 1]} : vector<32x128xf32> to vector<32x32xf32>
    %59 = arith.negf %58 : vector<32x32xf32>
    %60 = math.exp %59 : vector<32x32xf32>
    %cst_29 = arith.constant 1.000000e+00 : f32
    %61 = vector.broadcast %cst_29 : f32 to vector<32x32xf32>
    %62 = arith.addf %61, %60 : vector<32x32xf32>
    %63 = arith.divf %61, %62 : vector<32x32xf32>
    %64 = vector.extract_strided_slice %57 {offsets = [0, 32], sizes = [32, 32], strides = [1, 1]} : vector<32x128xf32> to vector<32x32xf32>
    %65 = arith.negf %64 : vector<32x32xf32>
    %66 = math.exp %65 : vector<32x32xf32>
    %cst_30 = arith.constant 1.000000e+00 : f32
    %67 = vector.broadcast %cst_30 : f32 to vector<32x32xf32>
    %68 = arith.addf %67, %66 : vector<32x32xf32>
    %69 = arith.divf %67, %68 : vector<32x32xf32>
    %70 = vector.extract_strided_slice %57 {offsets = [0, 64], sizes = [32, 32], strides = [1, 1]} : vector<32x128xf32> to vector<32x32xf32>
    %71 = math.tanh %70 : vector<32x32xf32>
    %72 = vector.extract_strided_slice %57 {offsets = [0, 96], sizes = [32, 32], strides = [1, 1]} : vector<32x128xf32> to vector<32x32xf32>
    %73 = arith.negf %72 : vector<32x32xf32>
    %74 = math.exp %73 : vector<32x32xf32>
    %cst_31 = arith.constant 1.000000e+00 : f32
    %75 = vector.broadcast %cst_31 : f32 to vector<32x32xf32>
    %76 = arith.addf %75, %74 : vector<32x32xf32>
    %77 = arith.divf %75, %76 : vector<32x32xf32>
    %78 = arith.mulf %69, %21 : vector<32x32xf32>
    %79 = arith.mulf %63, %71 : vector<32x32xf32>
    %80 = arith.addf %78, %79 : vector<32x32xf32>
    %81 = math.tanh %80 : vector<32x32xf32>
    %82 = arith.mulf %77, %81 : vector<32x32xf32>
    %83 = arith.truncf %82 : vector<32x32xf32> to vector<32x32xbf16>
    %cst_32 = arith.constant dense<0.000000e+00> : vector<32x128xf32>
    %84 = tpu.matmul %83, %3, %cst_32 {dimension_numbers = #tpu.dot_dimension_numbers<[1], [0], [0], [1], [0, 0, 1, 1], [], []>} : vector<32x32xbf16>, vector<32x128xbf16>, vector<32x128xf32> -> vector<32x128xf32>
    %c32_33 = arith.constant 32 : index
    %c0_34 = arith.constant 0 : index
    %85 = vector.load %arg7[%c32_33, %c0_34] : memref<256x128xf32, #tpu.memory_space<vmem>>, vector<32x128xf32>
    %86 = arith.truncf %52 : vector<32x32xf32> to vector<32x32xbf16>
    %cst_35 = arith.constant dense<0.000000e+00> : vector<32x128xf32>
    %87 = tpu.matmul %86, %1, %cst_35 {dimension_numbers = #tpu.dot_dimension_numbers<[1], [0], [0], [1], [0, 0, 1, 1], [], []>} : vector<32x32xbf16>, vector<32x128xbf16>, vector<32x128xf32> -> vector<32x128xf32>
    %88 = arith.addf %85, %87 : vector<32x128xf32>
    %89 = vector.extract_strided_slice %88 {offsets = [0, 0], sizes = [32, 32], strides = [1, 1]} : vector<32x128xf32> to vector<32x32xf32>
    %90 = arith.negf %89 : vector<32x32xf32>
    %91 = math.exp %90 : vector<32x32xf32>
    %cst_36 = arith.constant 1.000000e+00 : f32
    %92 = vector.broadcast %cst_36 : f32 to vector<32x32xf32>
    %93 = arith.addf %92, %91 : vector<32x32xf32>
    %94 = arith.divf %92, %93 : vector<32x32xf32>
    %95 = vector.extract_strided_slice %88 {offsets = [0, 32], sizes = [32, 32], strides = [1, 1]} : vector<32x128xf32> to vector<32x32xf32>
    %96 = arith.negf %95 : vector<32x32xf32>
    %97 = math.exp %96 : vector<32x32xf32>
    %cst_37 = arith.constant 1.000000e+00 : f32
    %98 = vector.broadcast %cst_37 : f32 to vector<32x32xf32>
    %99 = arith.addf %98, %97 : vector<32x32xf32>
    %100 = arith.divf %98, %99 : vector<32x32xf32>
    %101 = vector.extract_strided_slice %88 {offsets = [0, 64], sizes = [32, 32], strides = [1, 1]} : vector<32x128xf32> to vector<32x32xf32>
    %102 = math.tanh %101 : vector<32x32xf32>
    %103 = vector.extract_strided_slice %88 {offsets = [0, 96], sizes = [32, 32], strides = [1, 1]} : vector<32x128xf32> to vector<32x32xf32>
    %104 = arith.negf %103 : vector<32x32xf32>
    %105 = math.exp %104 : vector<32x32xf32>
    %cst_38 = arith.constant 1.000000e+00 : f32
    %106 = vector.broadcast %cst_38 : f32 to vector<32x32xf32>
    %107 = arith.addf %106, %105 : vector<32x32xf32>
    %108 = arith.divf %106, %107 : vector<32x32xf32>
    %109 = arith.mulf %100, %50 : vector<32x32xf32>
    %110 = arith.mulf %94, %102 : vector<32x32xf32>
    %111 = arith.addf %109, %110 : vector<32x32xf32>
    %112 = math.tanh %111 : vector<32x32xf32>
    %113 = arith.mulf %108, %112 : vector<32x32xf32>
    %114 = arith.truncf %113 : vector<32x32xf32> to vector<32x32xbf16>
    %cst_39 = arith.constant dense<0.000000e+00> : vector<32x128xf32>
    %115 = tpu.matmul %114, %2, %cst_39 {dimension_numbers = #tpu.dot_dimension_numbers<[1], [0], [0], [1], [0, 0, 1, 1], [], []>} : vector<32x32xbf16>, vector<32x128xbf16>, vector<32x128xf32> -> vector<32x128xf32>
    %116 = arith.addf %84, %115 : vector<32x128xf32>
    %117 = vector.broadcast %6 : vector<1x128xf32> to vector<32x128xf32>
    %118 = arith.addf %116, %117 : vector<32x128xf32>
    %119 = vector.extract_strided_slice %118 {offsets = [0, 0], sizes = [32, 32], strides = [1, 1]} : vector<32x128xf32> to vector<32x32xf32>
    %120 = arith.negf %119 : vector<32x32xf32>
    %121 = math.exp %120 : vector<32x32xf32>
    %cst_40 = arith.constant 1.000000e+00 : f32
    %122 = vector.broadcast %cst_40 : f32 to vector<32x32xf32>
    %123 = arith.addf %122, %121 : vector<32x32xf32>
    %124 = arith.divf %122, %123 : vector<32x32xf32>
    %125 = vector.extract_strided_slice %118 {offsets = [0, 32], sizes = [32, 32], strides = [1, 1]} : vector<32x128xf32> to vector<32x32xf32>
    %126 = arith.negf %125 : vector<32x32xf32>
    %127 = math.exp %126 : vector<32x32xf32>
    %cst_41 = arith.constant 1.000000e+00 : f32
    %128 = vector.broadcast %cst_41 : f32 to vector<32x32xf32>
    %129 = arith.addf %128, %127 : vector<32x32xf32>
    %130 = arith.divf %128, %129 : vector<32x32xf32>
    %131 = vector.extract_strided_slice %118 {offsets = [0, 64], sizes = [32, 32], strides = [1, 1]} : vector<32x128xf32> to vector<32x32xf32>
    %132 = math.tanh %131 : vector<32x32xf32>
    %133 = vector.extract_strided_slice %118 {offsets = [0, 96], sizes = [32, 32], strides = [1, 1]} : vector<32x128xf32> to vector<32x32xf32>
    %134 = arith.negf %133 : vector<32x32xf32>
    %135 = math.exp %134 : vector<32x32xf32>
    %cst_42 = arith.constant 1.000000e+00 : f32
    %136 = vector.broadcast %cst_42 : f32 to vector<32x32xf32>
    %137 = arith.addf %136, %135 : vector<32x32xf32>
    %138 = arith.divf %136, %137 : vector<32x32xf32>
    %139 = arith.mulf %130, %80 : vector<32x32xf32>
    %140 = arith.mulf %124, %132 : vector<32x32xf32>
    %141 = arith.addf %139, %140 : vector<32x32xf32>
    %142 = math.tanh %141 : vector<32x32xf32>
    %143 = arith.mulf %138, %142 : vector<32x32xf32>
    %144 = arith.truncf %143 : vector<32x32xf32> to vector<32x32xbf16>
    %cst_43 = arith.constant dense<0.000000e+00> : vector<32x128xf32>
    %145 = tpu.matmul %144, %3, %cst_43 {dimension_numbers = #tpu.dot_dimension_numbers<[1], [0], [0], [1], [0, 0, 1, 1], [], []>} : vector<32x32xbf16>, vector<32x128xbf16>, vector<32x128xf32> -> vector<32x128xf32>
    %c64_44 = arith.constant 64 : index
    %c0_45 = arith.constant 0 : index
    %146 = vector.load %arg7[%c64_44, %c0_45] : memref<256x128xf32, #tpu.memory_space<vmem>>, vector<32x128xf32>
    %147 = arith.truncf %113 : vector<32x32xf32> to vector<32x32xbf16>
    %cst_46 = arith.constant dense<0.000000e+00> : vector<32x128xf32>
    %148 = tpu.matmul %147, %1, %cst_46 {dimension_numbers = #tpu.dot_dimension_numbers<[1], [0], [0], [1], [0, 0, 1, 1], [], []>} : vector<32x32xbf16>, vector<32x128xbf16>, vector<32x128xf32> -> vector<32x128xf32>
    %149 = arith.addf %146, %148 : vector<32x128xf32>
    %150 = vector.extract_strided_slice %149 {offsets = [0, 0], sizes = [32, 32], strides = [1, 1]} : vector<32x128xf32> to vector<32x32xf32>
    %151 = arith.negf %150 : vector<32x32xf32>
    %152 = math.exp %151 : vector<32x32xf32>
    %cst_47 = arith.constant 1.000000e+00 : f32
    %153 = vector.broadcast %cst_47 : f32 to vector<32x32xf32>
    %154 = arith.addf %153, %152 : vector<32x32xf32>
    %155 = arith.divf %153, %154 : vector<32x32xf32>
    %156 = vector.extract_strided_slice %149 {offsets = [0, 32], sizes = [32, 32], strides = [1, 1]} : vector<32x128xf32> to vector<32x32xf32>
    %157 = arith.negf %156 : vector<32x32xf32>
    %158 = math.exp %157 : vector<32x32xf32>
    %cst_48 = arith.constant 1.000000e+00 : f32
    %159 = vector.broadcast %cst_48 : f32 to vector<32x32xf32>
    %160 = arith.addf %159, %158 : vector<32x32xf32>
    %161 = arith.divf %159, %160 : vector<32x32xf32>
    %162 = vector.extract_strided_slice %149 {offsets = [0, 64], sizes = [32, 32], strides = [1, 1]} : vector<32x128xf32> to vector<32x32xf32>
    %163 = math.tanh %162 : vector<32x32xf32>
    %164 = vector.extract_strided_slice %149 {offsets = [0, 96], sizes = [32, 32], strides = [1, 1]} : vector<32x128xf32> to vector<32x32xf32>
    %165 = arith.negf %164 : vector<32x32xf32>
    %166 = math.exp %165 : vector<32x32xf32>
    %cst_49 = arith.constant 1.000000e+00 : f32
    %167 = vector.broadcast %cst_49 : f32 to vector<32x32xf32>
    %168 = arith.addf %167, %166 : vector<32x32xf32>
    %169 = arith.divf %167, %168 : vector<32x32xf32>
    %170 = arith.mulf %161, %111 : vector<32x32xf32>
    %171 = arith.mulf %155, %163 : vector<32x32xf32>
    %172 = arith.addf %170, %171 : vector<32x32xf32>
    %173 = math.tanh %172 : vector<32x32xf32>
    %174 = arith.mulf %169, %173 : vector<32x32xf32>
    %175 = arith.truncf %174 : vector<32x32xf32> to vector<32x32xbf16>
    %cst_50 = arith.constant dense<0.000000e+00> : vector<32x128xf32>
    %176 = tpu.matmul %175, %2, %cst_50 {dimension_numbers = #tpu.dot_dimension_numbers<[1], [0], [0], [1], [0, 0, 1, 1], [], []>} : vector<32x32xbf16>, vector<32x128xbf16>, vector<32x128xf32> -> vector<32x128xf32>
    %177 = arith.addf %145, %176 : vector<32x128xf32>
    %178 = vector.broadcast %6 : vector<1x128xf32> to vector<32x128xf32>
    %179 = arith.addf %177, %178 : vector<32x128xf32>
    %180 = vector.extract_strided_slice %179 {offsets = [0, 0], sizes = [32, 32], strides = [1, 1]} : vector<32x128xf32> to vector<32x32xf32>
    %181 = arith.negf %180 : vector<32x32xf32>
    %182 = math.exp %181 : vector<32x32xf32>
    %cst_51 = arith.constant 1.000000e+00 : f32
    %183 = vector.broadcast %cst_51 : f32 to vector<32x32xf32>
    %184 = arith.addf %183, %182 : vector<32x32xf32>
    %185 = arith.divf %183, %184 : vector<32x32xf32>
    %186 = vector.extract_strided_slice %179 {offsets = [0, 32], sizes = [32, 32], strides = [1, 1]} : vector<32x128xf32> to vector<32x32xf32>
    %187 = arith.negf %186 : vector<32x32xf32>
    %188 = math.exp %187 : vector<32x32xf32>
    %cst_52 = arith.constant 1.000000e+00 : f32
    %189 = vector.broadcast %cst_52 : f32 to vector<32x32xf32>
    %190 = arith.addf %189, %188 : vector<32x32xf32>
    %191 = arith.divf %189, %190 : vector<32x32xf32>
    %192 = vector.extract_strided_slice %179 {offsets = [0, 64], sizes = [32, 32], strides = [1, 1]} : vector<32x128xf32> to vector<32x32xf32>
    %193 = math.tanh %192 : vector<32x32xf32>
    %194 = vector.extract_strided_slice %179 {offsets = [0, 96], sizes = [32, 32], strides = [1, 1]} : vector<32x128xf32> to vector<32x32xf32>
    %195 = arith.negf %194 : vector<32x32xf32>
    %196 = math.exp %195 : vector<32x32xf32>
    %cst_53 = arith.constant 1.000000e+00 : f32
    %197 = vector.broadcast %cst_53 : f32 to vector<32x32xf32>
    %198 = arith.addf %197, %196 : vector<32x32xf32>
    %199 = arith.divf %197, %198 : vector<32x32xf32>
    %200 = arith.mulf %191, %141 : vector<32x32xf32>
    %201 = arith.mulf %185, %193 : vector<32x32xf32>
    %202 = arith.addf %200, %201 : vector<32x32xf32>
    %203 = math.tanh %202 : vector<32x32xf32>
    %204 = arith.mulf %199, %203 : vector<32x32xf32>
    %205 = arith.truncf %204 : vector<32x32xf32> to vector<32x32xbf16>
    %cst_54 = arith.constant dense<0.000000e+00> : vector<32x128xf32>
    %206 = tpu.matmul %205, %3, %cst_54 {dimension_numbers = #tpu.dot_dimension_numbers<[1], [0], [0], [1], [0, 0, 1, 1], [], []>} : vector<32x32xbf16>, vector<32x128xbf16>, vector<32x128xf32> -> vector<32x128xf32>
    %c96_55 = arith.constant 96 : index
    %c0_56 = arith.constant 0 : index
    %207 = vector.load %arg7[%c96_55, %c0_56] : memref<256x128xf32, #tpu.memory_space<vmem>>, vector<32x128xf32>
    %208 = arith.truncf %174 : vector<32x32xf32> to vector<32x32xbf16>
    %cst_57 = arith.constant dense<0.000000e+00> : vector<32x128xf32>
    %209 = tpu.matmul %208, %1, %cst_57 {dimension_numbers = #tpu.dot_dimension_numbers<[1], [0], [0], [1], [0, 0, 1, 1], [], []>} : vector<32x32xbf16>, vector<32x128xbf16>, vector<32x128xf32> -> vector<32x128xf32>
    %210 = arith.addf %207, %209 : vector<32x128xf32>
    %211 = vector.extract_strided_slice %210 {offsets = [0, 0], sizes = [32, 32], strides = [1, 1]} : vector<32x128xf32> to vector<32x32xf32>
    %212 = arith.negf %211 : vector<32x32xf32>
    %213 = math.exp %212 : vector<32x32xf32>
    %cst_58 = arith.constant 1.000000e+00 : f32
    %214 = vector.broadcast %cst_58 : f32 to vector<32x32xf32>
    %215 = arith.addf %214, %213 : vector<32x32xf32>
    %216 = arith.divf %214, %215 : vector<32x32xf32>
    %217 = vector.extract_strided_slice %210 {offsets = [0, 32], sizes = [32, 32], strides = [1, 1]} : vector<32x128xf32> to vector<32x32xf32>
    %218 = arith.negf %217 : vector<32x32xf32>
    %219 = math.exp %218 : vector<32x32xf32>
    %cst_59 = arith.constant 1.000000e+00 : f32
    %220 = vector.broadcast %cst_59 : f32 to vector<32x32xf32>
    %221 = arith.addf %220, %219 : vector<32x32xf32>
    %222 = arith.divf %220, %221 : vector<32x32xf32>
    %223 = vector.extract_strided_slice %210 {offsets = [0, 64], sizes = [32, 32], strides = [1, 1]} : vector<32x128xf32> to vector<32x32xf32>
    %224 = math.tanh %223 : vector<32x32xf32>
    %225 = vector.extract_strided_slice %210 {offsets = [0, 96], sizes = [32, 32], strides = [1, 1]} : vector<32x128xf32> to vector<32x32xf32>
    %226 = arith.negf %225 : vector<32x32xf32>
    %227 = math.exp %226 : vector<32x32xf32>
    %cst_60 = arith.constant 1.000000e+00 : f32
    %228 = vector.broadcast %cst_60 : f32 to vector<32x32xf32>
    %229 = arith.addf %228, %227 : vector<32x32xf32>
    %230 = arith.divf %228, %229 : vector<32x32xf32>
    %231 = arith.mulf %222, %172 : vector<32x32xf32>
    %232 = arith.mulf %216, %224 : vector<32x32xf32>
    %233 = arith.addf %231, %232 : vector<32x32xf32>
    %234 = math.tanh %233 : vector<32x32xf32>
    %235 = arith.mulf %230, %234 : vector<32x32xf32>
    %236 = arith.truncf %235 : vector<32x32xf32> to vector<32x32xbf16>
    %cst_61 = arith.constant dense<0.000000e+00> : vector<32x128xf32>
    %237 = tpu.matmul %236, %2, %cst_61 {dimension_numbers = #tpu.dot_dimension_numbers<[1], [0], [0], [1], [0, 0, 1, 1], [], []>} : vector<32x32xbf16>, vector<32x128xbf16>, vector<32x128xf32> -> vector<32x128xf32>
    %238 = arith.addf %206, %237 : vector<32x128xf32>
    %239 = vector.broadcast %6 : vector<1x128xf32> to vector<32x128xf32>
    %240 = arith.addf %238, %239 : vector<32x128xf32>
    %241 = vector.extract_strided_slice %240 {offsets = [0, 0], sizes = [32, 32], strides = [1, 1]} : vector<32x128xf32> to vector<32x32xf32>
    %242 = arith.negf %241 : vector<32x32xf32>
    %243 = math.exp %242 : vector<32x32xf32>
    %cst_62 = arith.constant 1.000000e+00 : f32
    %244 = vector.broadcast %cst_62 : f32 to vector<32x32xf32>
    %245 = arith.addf %244, %243 : vector<32x32xf32>
    %246 = arith.divf %244, %245 : vector<32x32xf32>
    %247 = vector.extract_strided_slice %240 {offsets = [0, 32], sizes = [32, 32], strides = [1, 1]} : vector<32x128xf32> to vector<32x32xf32>
    %248 = arith.negf %247 : vector<32x32xf32>
    %249 = math.exp %248 : vector<32x32xf32>
    %cst_63 = arith.constant 1.000000e+00 : f32
    %250 = vector.broadcast %cst_63 : f32 to vector<32x32xf32>
    %251 = arith.addf %250, %249 : vector<32x32xf32>
    %252 = arith.divf %250, %251 : vector<32x32xf32>
    %253 = vector.extract_strided_slice %240 {offsets = [0, 64], sizes = [32, 32], strides = [1, 1]} : vector<32x128xf32> to vector<32x32xf32>
    %254 = math.tanh %253 : vector<32x32xf32>
    %255 = vector.extract_strided_slice %240 {offsets = [0, 96], sizes = [32, 32], strides = [1, 1]} : vector<32x128xf32> to vector<32x32xf32>
    %256 = arith.negf %255 : vector<32x32xf32>
    %257 = math.exp %256 : vector<32x32xf32>
    %cst_64 = arith.constant 1.000000e+00 : f32
    %258 = vector.broadcast %cst_64 : f32 to vector<32x32xf32>
    %259 = arith.addf %258, %257 : vector<32x32xf32>
    %260 = arith.divf %258, %259 : vector<32x32xf32>
    %261 = arith.mulf %252, %202 : vector<32x32xf32>
    %262 = arith.mulf %246, %254 : vector<32x32xf32>
    %263 = arith.addf %261, %262 : vector<32x32xf32>
    %264 = math.tanh %263 : vector<32x32xf32>
    %265 = arith.mulf %260, %264 : vector<32x32xf32>
    %266 = arith.truncf %265 : vector<32x32xf32> to vector<32x32xbf16>
    %cst_65 = arith.constant dense<0.000000e+00> : vector<32x128xf32>
    %267 = tpu.matmul %266, %3, %cst_65 {dimension_numbers = #tpu.dot_dimension_numbers<[1], [0], [0], [1], [0, 0, 1, 1], [], []>} : vector<32x32xbf16>, vector<32x128xbf16>, vector<32x128xf32> -> vector<32x128xf32>
    %c128_66 = arith.constant 128 : index
    %c0_67 = arith.constant 0 : index
    %268 = vector.load %arg7[%c128_66, %c0_67] : memref<256x128xf32, #tpu.memory_space<vmem>>, vector<32x128xf32>
    %269 = arith.truncf %235 : vector<32x32xf32> to vector<32x32xbf16>
    %cst_68 = arith.constant dense<0.000000e+00> : vector<32x128xf32>
    %270 = tpu.matmul %269, %1, %cst_68 {dimension_numbers = #tpu.dot_dimension_numbers<[1], [0], [0], [1], [0, 0, 1, 1], [], []>} : vector<32x32xbf16>, vector<32x128xbf16>, vector<32x128xf32> -> vector<32x128xf32>
    %271 = arith.addf %268, %270 : vector<32x128xf32>
    %272 = vector.extract_strided_slice %271 {offsets = [0, 0], sizes = [32, 32], strides = [1, 1]} : vector<32x128xf32> to vector<32x32xf32>
    %273 = arith.negf %272 : vector<32x32xf32>
    %274 = math.exp %273 : vector<32x32xf32>
    %cst_69 = arith.constant 1.000000e+00 : f32
    %275 = vector.broadcast %cst_69 : f32 to vector<32x32xf32>
    %276 = arith.addf %275, %274 : vector<32x32xf32>
    %277 = arith.divf %275, %276 : vector<32x32xf32>
    %278 = vector.extract_strided_slice %271 {offsets = [0, 32], sizes = [32, 32], strides = [1, 1]} : vector<32x128xf32> to vector<32x32xf32>
    %279 = arith.negf %278 : vector<32x32xf32>
    %280 = math.exp %279 : vector<32x32xf32>
    %cst_70 = arith.constant 1.000000e+00 : f32
    %281 = vector.broadcast %cst_70 : f32 to vector<32x32xf32>
    %282 = arith.addf %281, %280 : vector<32x32xf32>
    %283 = arith.divf %281, %282 : vector<32x32xf32>
    %284 = vector.extract_strided_slice %271 {offsets = [0, 64], sizes = [32, 32], strides = [1, 1]} : vector<32x128xf32> to vector<32x32xf32>
    %285 = math.tanh %284 : vector<32x32xf32>
    %286 = vector.extract_strided_slice %271 {offsets = [0, 96], sizes = [32, 32], strides = [1, 1]} : vector<32x128xf32> to vector<32x32xf32>
    %287 = arith.negf %286 : vector<32x32xf32>
    %288 = math.exp %287 : vector<32x32xf32>
    %cst_71 = arith.constant 1.000000e+00 : f32
    %289 = vector.broadcast %cst_71 : f32 to vector<32x32xf32>
    %290 = arith.addf %289, %288 : vector<32x32xf32>
    %291 = arith.divf %289, %290 : vector<32x32xf32>
    %292 = arith.mulf %283, %233 : vector<32x32xf32>
    %293 = arith.mulf %277, %285 : vector<32x32xf32>
    %294 = arith.addf %292, %293 : vector<32x32xf32>
    %295 = math.tanh %294 : vector<32x32xf32>
    %296 = arith.mulf %291, %295 : vector<32x32xf32>
    %297 = arith.truncf %296 : vector<32x32xf32> to vector<32x32xbf16>
    %cst_72 = arith.constant dense<0.000000e+00> : vector<32x128xf32>
    %298 = tpu.matmul %297, %2, %cst_72 {dimension_numbers = #tpu.dot_dimension_numbers<[1], [0], [0], [1], [0, 0, 1, 1], [], []>} : vector<32x32xbf16>, vector<32x128xbf16>, vector<32x128xf32> -> vector<32x128xf32>
    %299 = arith.addf %267, %298 : vector<32x128xf32>
    %300 = vector.broadcast %6 : vector<1x128xf32> to vector<32x128xf32>
    %301 = arith.addf %299, %300 : vector<32x128xf32>
    %302 = vector.extract_strided_slice %301 {offsets = [0, 0], sizes = [32, 32], strides = [1, 1]} : vector<32x128xf32> to vector<32x32xf32>
    %303 = arith.negf %302 : vector<32x32xf32>
    %304 = math.exp %303 : vector<32x32xf32>
    %cst_73 = arith.constant 1.000000e+00 : f32
    %305 = vector.broadcast %cst_73 : f32 to vector<32x32xf32>
    %306 = arith.addf %305, %304 : vector<32x32xf32>
    %307 = arith.divf %305, %306 : vector<32x32xf32>
    %308 = vector.extract_strided_slice %301 {offsets = [0, 32], sizes = [32, 32], strides = [1, 1]} : vector<32x128xf32> to vector<32x32xf32>
    %309 = arith.negf %308 : vector<32x32xf32>
    %310 = math.exp %309 : vector<32x32xf32>
    %cst_74 = arith.constant 1.000000e+00 : f32
    %311 = vector.broadcast %cst_74 : f32 to vector<32x32xf32>
    %312 = arith.addf %311, %310 : vector<32x32xf32>
    %313 = arith.divf %311, %312 : vector<32x32xf32>
    %314 = vector.extract_strided_slice %301 {offsets = [0, 64], sizes = [32, 32], strides = [1, 1]} : vector<32x128xf32> to vector<32x32xf32>
    %315 = math.tanh %314 : vector<32x32xf32>
    %316 = vector.extract_strided_slice %301 {offsets = [0, 96], sizes = [32, 32], strides = [1, 1]} : vector<32x128xf32> to vector<32x32xf32>
    %317 = arith.negf %316 : vector<32x32xf32>
    %318 = math.exp %317 : vector<32x32xf32>
    %cst_75 = arith.constant 1.000000e+00 : f32
    %319 = vector.broadcast %cst_75 : f32 to vector<32x32xf32>
    %320 = arith.addf %319, %318 : vector<32x32xf32>
    %321 = arith.divf %319, %320 : vector<32x32xf32>
    %322 = arith.mulf %313, %263 : vector<32x32xf32>
    %323 = arith.mulf %307, %315 : vector<32x32xf32>
    %324 = arith.addf %322, %323 : vector<32x32xf32>
    %325 = math.tanh %324 : vector<32x32xf32>
    %326 = arith.mulf %321, %325 : vector<32x32xf32>
    %327 = arith.truncf %326 : vector<32x32xf32> to vector<32x32xbf16>
    %cst_76 = arith.constant dense<0.000000e+00> : vector<32x128xf32>
    %328 = tpu.matmul %327, %3, %cst_76 {dimension_numbers = #tpu.dot_dimension_numbers<[1], [0], [0], [1], [0, 0, 1, 1], [], []>} : vector<32x32xbf16>, vector<32x128xbf16>, vector<32x128xf32> -> vector<32x128xf32>
    %c160 = arith.constant 160 : index
    %c0_77 = arith.constant 0 : index
    %329 = vector.load %arg7[%c160, %c0_77] : memref<256x128xf32, #tpu.memory_space<vmem>>, vector<32x128xf32>
    %330 = arith.truncf %296 : vector<32x32xf32> to vector<32x32xbf16>
    %cst_78 = arith.constant dense<0.000000e+00> : vector<32x128xf32>
    %331 = tpu.matmul %330, %1, %cst_78 {dimension_numbers = #tpu.dot_dimension_numbers<[1], [0], [0], [1], [0, 0, 1, 1], [], []>} : vector<32x32xbf16>, vector<32x128xbf16>, vector<32x128xf32> -> vector<32x128xf32>
    %332 = arith.addf %329, %331 : vector<32x128xf32>
    %333 = vector.extract_strided_slice %332 {offsets = [0, 0], sizes = [32, 32], strides = [1, 1]} : vector<32x128xf32> to vector<32x32xf32>
    %334 = arith.negf %333 : vector<32x32xf32>
    %335 = math.exp %334 : vector<32x32xf32>
    %cst_79 = arith.constant 1.000000e+00 : f32
    %336 = vector.broadcast %cst_79 : f32 to vector<32x32xf32>
    %337 = arith.addf %336, %335 : vector<32x32xf32>
    %338 = arith.divf %336, %337 : vector<32x32xf32>
    %339 = vector.extract_strided_slice %332 {offsets = [0, 32], sizes = [32, 32], strides = [1, 1]} : vector<32x128xf32> to vector<32x32xf32>
    %340 = arith.negf %339 : vector<32x32xf32>
    %341 = math.exp %340 : vector<32x32xf32>
    %cst_80 = arith.constant 1.000000e+00 : f32
    %342 = vector.broadcast %cst_80 : f32 to vector<32x32xf32>
    %343 = arith.addf %342, %341 : vector<32x32xf32>
    %344 = arith.divf %342, %343 : vector<32x32xf32>
    %345 = vector.extract_strided_slice %332 {offsets = [0, 64], sizes = [32, 32], strides = [1, 1]} : vector<32x128xf32> to vector<32x32xf32>
    %346 = math.tanh %345 : vector<32x32xf32>
    %347 = vector.extract_strided_slice %332 {offsets = [0, 96], sizes = [32, 32], strides = [1, 1]} : vector<32x128xf32> to vector<32x32xf32>
    %348 = arith.negf %347 : vector<32x32xf32>
    %349 = math.exp %348 : vector<32x32xf32>
    %cst_81 = arith.constant 1.000000e+00 : f32
    %350 = vector.broadcast %cst_81 : f32 to vector<32x32xf32>
    %351 = arith.addf %350, %349 : vector<32x32xf32>
    %352 = arith.divf %350, %351 : vector<32x32xf32>
    %353 = arith.mulf %344, %294 : vector<32x32xf32>
    %354 = arith.mulf %338, %346 : vector<32x32xf32>
    %355 = arith.addf %353, %354 : vector<32x32xf32>
    %356 = math.tanh %355 : vector<32x32xf32>
    %357 = arith.mulf %352, %356 : vector<32x32xf32>
    %358 = arith.truncf %357 : vector<32x32xf32> to vector<32x32xbf16>
    %cst_82 = arith.constant dense<0.000000e+00> : vector<32x128xf32>
    %359 = tpu.matmul %358, %2, %cst_82 {dimension_numbers = #tpu.dot_dimension_numbers<[1], [0], [0], [1], [0, 0, 1, 1], [], []>} : vector<32x32xbf16>, vector<32x128xbf16>, vector<32x128xf32> -> vector<32x128xf32>
    %360 = arith.addf %328, %359 : vector<32x128xf32>
    %361 = vector.broadcast %6 : vector<1x128xf32> to vector<32x128xf32>
    %362 = arith.addf %360, %361 : vector<32x128xf32>
    %363 = vector.extract_strided_slice %362 {offsets = [0, 0], sizes = [32, 32], strides = [1, 1]} : vector<32x128xf32> to vector<32x32xf32>
    %364 = arith.negf %363 : vector<32x32xf32>
    %365 = math.exp %364 : vector<32x32xf32>
    %cst_83 = arith.constant 1.000000e+00 : f32
    %366 = vector.broadcast %cst_83 : f32 to vector<32x32xf32>
    %367 = arith.addf %366, %365 : vector<32x32xf32>
    %368 = arith.divf %366, %367 : vector<32x32xf32>
    %369 = vector.extract_strided_slice %362 {offsets = [0, 32], sizes = [32, 32], strides = [1, 1]} : vector<32x128xf32> to vector<32x32xf32>
    %370 = arith.negf %369 : vector<32x32xf32>
    %371 = math.exp %370 : vector<32x32xf32>
    %cst_84 = arith.constant 1.000000e+00 : f32
    %372 = vector.broadcast %cst_84 : f32 to vector<32x32xf32>
    %373 = arith.addf %372, %371 : vector<32x32xf32>
    %374 = arith.divf %372, %373 : vector<32x32xf32>
    %375 = vector.extract_strided_slice %362 {offsets = [0, 64], sizes = [32, 32], strides = [1, 1]} : vector<32x128xf32> to vector<32x32xf32>
    %376 = math.tanh %375 : vector<32x32xf32>
    %377 = vector.extract_strided_slice %362 {offsets = [0, 96], sizes = [32, 32], strides = [1, 1]} : vector<32x128xf32> to vector<32x32xf32>
    %378 = arith.negf %377 : vector<32x32xf32>
    %379 = math.exp %378 : vector<32x32xf32>
    %cst_85 = arith.constant 1.000000e+00 : f32
    %380 = vector.broadcast %cst_85 : f32 to vector<32x32xf32>
    %381 = arith.addf %380, %379 : vector<32x32xf32>
    %382 = arith.divf %380, %381 : vector<32x32xf32>
    %383 = arith.mulf %374, %324 : vector<32x32xf32>
    %384 = arith.mulf %368, %376 : vector<32x32xf32>
    %385 = arith.addf %383, %384 : vector<32x32xf32>
    %386 = math.tanh %385 : vector<32x32xf32>
    %387 = arith.mulf %382, %386 : vector<32x32xf32>
    %388 = arith.truncf %387 : vector<32x32xf32> to vector<32x32xbf16>
    %cst_86 = arith.constant dense<0.000000e+00> : vector<32x128xf32>
    %389 = tpu.matmul %388, %3, %cst_86 {dimension_numbers = #tpu.dot_dimension_numbers<[1], [0], [0], [1], [0, 0, 1, 1], [], []>} : vector<32x32xbf16>, vector<32x128xbf16>, vector<32x128xf32> -> vector<32x128xf32>
    %c192 = arith.constant 192 : index
    %c0_87 = arith.constant 0 : index
    %390 = vector.load %arg7[%c192, %c0_87] : memref<256x128xf32, #tpu.memory_space<vmem>>, vector<32x128xf32>
    %391 = arith.truncf %357 : vector<32x32xf32> to vector<32x32xbf16>
    %cst_88 = arith.constant dense<0.000000e+00> : vector<32x128xf32>
    %392 = tpu.matmul %391, %1, %cst_88 {dimension_numbers = #tpu.dot_dimension_numbers<[1], [0], [0], [1], [0, 0, 1, 1], [], []>} : vector<32x32xbf16>, vector<32x128xbf16>, vector<32x128xf32> -> vector<32x128xf32>
    %393 = arith.addf %390, %392 : vector<32x128xf32>
    %394 = vector.extract_strided_slice %393 {offsets = [0, 0], sizes = [32, 32], strides = [1, 1]} : vector<32x128xf32> to vector<32x32xf32>
    %395 = arith.negf %394 : vector<32x32xf32>
    %396 = math.exp %395 : vector<32x32xf32>
    %cst_89 = arith.constant 1.000000e+00 : f32
    %397 = vector.broadcast %cst_89 : f32 to vector<32x32xf32>
    %398 = arith.addf %397, %396 : vector<32x32xf32>
    %399 = arith.divf %397, %398 : vector<32x32xf32>
    %400 = vector.extract_strided_slice %393 {offsets = [0, 32], sizes = [32, 32], strides = [1, 1]} : vector<32x128xf32> to vector<32x32xf32>
    %401 = arith.negf %400 : vector<32x32xf32>
    %402 = math.exp %401 : vector<32x32xf32>
    %cst_90 = arith.constant 1.000000e+00 : f32
    %403 = vector.broadcast %cst_90 : f32 to vector<32x32xf32>
    %404 = arith.addf %403, %402 : vector<32x32xf32>
    %405 = arith.divf %403, %404 : vector<32x32xf32>
    %406 = vector.extract_strided_slice %393 {offsets = [0, 64], sizes = [32, 32], strides = [1, 1]} : vector<32x128xf32> to vector<32x32xf32>
    %407 = math.tanh %406 : vector<32x32xf32>
    %408 = vector.extract_strided_slice %393 {offsets = [0, 96], sizes = [32, 32], strides = [1, 1]} : vector<32x128xf32> to vector<32x32xf32>
    %409 = arith.negf %408 : vector<32x32xf32>
    %410 = math.exp %409 : vector<32x32xf32>
    %cst_91 = arith.constant 1.000000e+00 : f32
    %411 = vector.broadcast %cst_91 : f32 to vector<32x32xf32>
    %412 = arith.addf %411, %410 : vector<32x32xf32>
    %413 = arith.divf %411, %412 : vector<32x32xf32>
    %414 = arith.mulf %405, %355 : vector<32x32xf32>
    %415 = arith.mulf %399, %407 : vector<32x32xf32>
    %416 = arith.addf %414, %415 : vector<32x32xf32>
    %417 = math.tanh %416 : vector<32x32xf32>
    %418 = arith.mulf %413, %417 : vector<32x32xf32>
    %419 = arith.truncf %418 : vector<32x32xf32> to vector<32x32xbf16>
    %cst_92 = arith.constant dense<0.000000e+00> : vector<32x128xf32>
    %420 = tpu.matmul %419, %2, %cst_92 {dimension_numbers = #tpu.dot_dimension_numbers<[1], [0], [0], [1], [0, 0, 1, 1], [], []>} : vector<32x32xbf16>, vector<32x128xbf16>, vector<32x128xf32> -> vector<32x128xf32>
    %421 = arith.addf %389, %420 : vector<32x128xf32>
    %422 = vector.broadcast %6 : vector<1x128xf32> to vector<32x128xf32>
    %423 = arith.addf %421, %422 : vector<32x128xf32>
    %424 = vector.extract_strided_slice %423 {offsets = [0, 0], sizes = [32, 32], strides = [1, 1]} : vector<32x128xf32> to vector<32x32xf32>
    %425 = arith.negf %424 : vector<32x32xf32>
    %426 = math.exp %425 : vector<32x32xf32>
    %cst_93 = arith.constant 1.000000e+00 : f32
    %427 = vector.broadcast %cst_93 : f32 to vector<32x32xf32>
    %428 = arith.addf %427, %426 : vector<32x32xf32>
    %429 = arith.divf %427, %428 : vector<32x32xf32>
    %430 = vector.extract_strided_slice %423 {offsets = [0, 32], sizes = [32, 32], strides = [1, 1]} : vector<32x128xf32> to vector<32x32xf32>
    %431 = arith.negf %430 : vector<32x32xf32>
    %432 = math.exp %431 : vector<32x32xf32>
    %cst_94 = arith.constant 1.000000e+00 : f32
    %433 = vector.broadcast %cst_94 : f32 to vector<32x32xf32>
    %434 = arith.addf %433, %432 : vector<32x32xf32>
    %435 = arith.divf %433, %434 : vector<32x32xf32>
    %436 = vector.extract_strided_slice %423 {offsets = [0, 64], sizes = [32, 32], strides = [1, 1]} : vector<32x128xf32> to vector<32x32xf32>
    %437 = math.tanh %436 : vector<32x32xf32>
    %438 = vector.extract_strided_slice %423 {offsets = [0, 96], sizes = [32, 32], strides = [1, 1]} : vector<32x128xf32> to vector<32x32xf32>
    %439 = arith.negf %438 : vector<32x32xf32>
    %440 = math.exp %439 : vector<32x32xf32>
    %cst_95 = arith.constant 1.000000e+00 : f32
    %441 = vector.broadcast %cst_95 : f32 to vector<32x32xf32>
    %442 = arith.addf %441, %440 : vector<32x32xf32>
    %443 = arith.divf %441, %442 : vector<32x32xf32>
    %444 = arith.mulf %435, %385 : vector<32x32xf32>
    %445 = arith.mulf %429, %437 : vector<32x32xf32>
    %446 = arith.addf %444, %445 : vector<32x32xf32>
    %447 = math.tanh %446 : vector<32x32xf32>
    %448 = arith.mulf %443, %447 : vector<32x32xf32>
    %449 = arith.truncf %448 : vector<32x32xf32> to vector<32x32xbf16>
    %cst_96 = arith.constant dense<0.000000e+00> : vector<32x128xf32>
    %450 = tpu.matmul %449, %3, %cst_96 {dimension_numbers = #tpu.dot_dimension_numbers<[1], [0], [0], [1], [0, 0, 1, 1], [], []>} : vector<32x32xbf16>, vector<32x128xbf16>, vector<32x128xf32> -> vector<32x128xf32>
    %c224 = arith.constant 224 : index
    %c0_97 = arith.constant 0 : index
    %451 = vector.load %arg7[%c224, %c0_97] : memref<256x128xf32, #tpu.memory_space<vmem>>, vector<32x128xf32>
    %452 = arith.truncf %418 : vector<32x32xf32> to vector<32x32xbf16>
    %cst_98 = arith.constant dense<0.000000e+00> : vector<32x128xf32>
    %453 = tpu.matmul %452, %1, %cst_98 {dimension_numbers = #tpu.dot_dimension_numbers<[1], [0], [0], [1], [0, 0, 1, 1], [], []>} : vector<32x32xbf16>, vector<32x128xbf16>, vector<32x128xf32> -> vector<32x128xf32>
    %454 = arith.addf %451, %453 : vector<32x128xf32>
    %455 = vector.extract_strided_slice %454 {offsets = [0, 0], sizes = [32, 32], strides = [1, 1]} : vector<32x128xf32> to vector<32x32xf32>
    %456 = arith.negf %455 : vector<32x32xf32>
    %457 = math.exp %456 : vector<32x32xf32>
    %cst_99 = arith.constant 1.000000e+00 : f32
    %458 = vector.broadcast %cst_99 : f32 to vector<32x32xf32>
    %459 = arith.addf %458, %457 : vector<32x32xf32>
    %460 = arith.divf %458, %459 : vector<32x32xf32>
    %461 = vector.extract_strided_slice %454 {offsets = [0, 32], sizes = [32, 32], strides = [1, 1]} : vector<32x128xf32> to vector<32x32xf32>
    %462 = arith.negf %461 : vector<32x32xf32>
    %463 = math.exp %462 : vector<32x32xf32>
    %cst_100 = arith.constant 1.000000e+00 : f32
    %464 = vector.broadcast %cst_100 : f32 to vector<32x32xf32>
    %465 = arith.addf %464, %463 : vector<32x32xf32>
    %466 = arith.divf %464, %465 : vector<32x32xf32>
    %467 = vector.extract_strided_slice %454 {offsets = [0, 64], sizes = [32, 32], strides = [1, 1]} : vector<32x128xf32> to vector<32x32xf32>
    %468 = math.tanh %467 : vector<32x32xf32>
    %469 = vector.extract_strided_slice %454 {offsets = [0, 96], sizes = [32, 32], strides = [1, 1]} : vector<32x128xf32> to vector<32x32xf32>
    %470 = arith.negf %469 : vector<32x32xf32>
    %471 = math.exp %470 : vector<32x32xf32>
    %cst_101 = arith.constant 1.000000e+00 : f32
    %472 = vector.broadcast %cst_101 : f32 to vector<32x32xf32>
    %473 = arith.addf %472, %471 : vector<32x32xf32>
    %474 = arith.divf %472, %473 : vector<32x32xf32>
    %475 = arith.mulf %466, %416 : vector<32x32xf32>
    %476 = arith.mulf %460, %468 : vector<32x32xf32>
    %477 = arith.addf %475, %476 : vector<32x32xf32>
    %478 = math.tanh %477 : vector<32x32xf32>
    %479 = arith.mulf %474, %478 : vector<32x32xf32>
    %480 = arith.truncf %479 : vector<32x32xf32> to vector<32x32xbf16>
    %cst_102 = arith.constant dense<0.000000e+00> : vector<32x128xf32>
    %481 = tpu.matmul %480, %2, %cst_102 {dimension_numbers = #tpu.dot_dimension_numbers<[1], [0], [0], [1], [0, 0, 1, 1], [], []>} : vector<32x32xbf16>, vector<32x128xbf16>, vector<32x128xf32> -> vector<32x128xf32>
    %482 = arith.addf %450, %481 : vector<32x128xf32>
    %483 = vector.broadcast %6 : vector<1x128xf32> to vector<32x128xf32>
    %484 = arith.addf %482, %483 : vector<32x128xf32>
    %485 = vector.extract_strided_slice %484 {offsets = [0, 0], sizes = [32, 32], strides = [1, 1]} : vector<32x128xf32> to vector<32x32xf32>
    %486 = arith.negf %485 : vector<32x32xf32>
    %487 = math.exp %486 : vector<32x32xf32>
    %cst_103 = arith.constant 1.000000e+00 : f32
    %488 = vector.broadcast %cst_103 : f32 to vector<32x32xf32>
    %489 = arith.addf %488, %487 : vector<32x32xf32>
    %490 = arith.divf %488, %489 : vector<32x32xf32>
    %491 = vector.extract_strided_slice %484 {offsets = [0, 32], sizes = [32, 32], strides = [1, 1]} : vector<32x128xf32> to vector<32x32xf32>
    %492 = arith.negf %491 : vector<32x32xf32>
    %493 = math.exp %492 : vector<32x32xf32>
    %cst_104 = arith.constant 1.000000e+00 : f32
    %494 = vector.broadcast %cst_104 : f32 to vector<32x32xf32>
    %495 = arith.addf %494, %493 : vector<32x32xf32>
    %496 = arith.divf %494, %495 : vector<32x32xf32>
    %497 = vector.extract_strided_slice %484 {offsets = [0, 64], sizes = [32, 32], strides = [1, 1]} : vector<32x128xf32> to vector<32x32xf32>
    %498 = math.tanh %497 : vector<32x32xf32>
    %499 = vector.extract_strided_slice %484 {offsets = [0, 96], sizes = [32, 32], strides = [1, 1]} : vector<32x128xf32> to vector<32x32xf32>
    %500 = arith.negf %499 : vector<32x32xf32>
    %501 = math.exp %500 : vector<32x32xf32>
    %cst_105 = arith.constant 1.000000e+00 : f32
    %502 = vector.broadcast %cst_105 : f32 to vector<32x32xf32>
    %503 = arith.addf %502, %501 : vector<32x32xf32>
    %504 = arith.divf %502, %503 : vector<32x32xf32>
    %505 = arith.mulf %496, %446 : vector<32x32xf32>
    %506 = arith.mulf %490, %498 : vector<32x32xf32>
    %507 = arith.addf %505, %506 : vector<32x32xf32>
    %508 = math.tanh %507 : vector<32x32xf32>
    %509 = arith.mulf %504, %508 : vector<32x32xf32>
    %510 = arith.truncf %509 : vector<32x32xf32> to vector<32x32xbf16>
    %cst_106 = arith.constant dense<0.000000e+00> : vector<32x128xf32>
    %511 = tpu.matmul %510, %4, %cst_106 {dimension_numbers = #tpu.dot_dimension_numbers<[1], [0], [0], [1], [0, 0, 1, 1], [], []>} : vector<32x32xbf16>, vector<32x128xbf16>, vector<32x128xf32> -> vector<32x128xf32>
    %512 = vector.broadcast %7 : vector<1x128xf32> to vector<32x128xf32>
    %513 = arith.addf %511, %512 : vector<32x128xf32>
    %c0_107 = arith.constant 0 : index
    %c0_108 = arith.constant 0 : index
    %514 = vector.load %arg6[%c0_107, %c0_108] : memref<32x128xf32, #tpu.memory_space<vmem>>, vector<32x128xf32>
    tpu.vector_store %arg6[%c0_107, %c0_108], %513 {strides = array<i32>} : memref<32x128xf32, #tpu.memory_space<vmem>>, vector<32x128xf32>,
    return
  }
  func.func @transform_0(%arg0: i32) -> (i32, i32) {
    %c0_i32 = arith.constant 0 : i32
    %c0_i32_0 = arith.constant 0 : i32
    %c0_i32_1 = arith.constant 0 : i32
    return %c0_i32, %c0_i32_0 : i32, i32
  }
  func.func @transform_1(%arg0: i32) -> (i32, i32) {
    %c0_i32 = arith.constant 0 : i32
    %c0_i32_0 = arith.constant 0 : i32
    %c0_i32_1 = arith.constant 0 : i32
    return %c0_i32, %c0_i32_0 : i32, i32
  }
  func.func @transform_2(%arg0: i32) -> (i32, i32) {
    %c0_i32 = arith.constant 0 : i32
    %c0_i32_0 = arith.constant 0 : i32
    %c0_i32_1 = arith.constant 0 : i32
    return %c0_i32, %c0_i32_0 : i32, i32
  }
  func.func @transform_3(%arg0: i32) -> (i32, i32) {
    %c0_i32 = arith.constant 0 : i32
    %c0_i32_0 = arith.constant 0 : i32
    %c0_i32_1 = arith.constant 0 : i32
    return %c0_i32, %c0_i32_0 : i32, i32
  }
  func.func @transform_4(%arg0: i32) -> (i32, i32) {
    %c0_i32 = arith.constant 0 : i32
    %c0_i32_0 = arith.constant 0 : i32
    %c0_i32_1 = arith.constant 0 : i32
    return %c0_i32, %c0_i32_0 : i32, i32
  }
  func.func @transform_5(%arg0: i32) -> (i32, i32) {
    %c0_i32 = arith.constant 0 : i32
    %c0_i32_0 = arith.constant 0 : i32
    %c0_i32_1 = arith.constant 0 : i32
    return %c0_i32, %c0_i32_0 : i32, i32
  }
}

</mosaic_0001>

<llo_original>
// kernel: dstagnn_forward.1
$region0: #{dstagnn_forward.1}
  #allocation0 [shape = 'u32[]', space=smem, size = 0x4, offset = 0x4, fixed_abs, tag = 'smem constant byte address 0x4 - core index']
  #allocation1 [shape = 'u32[144,128]{1,0:T(1,128)}', space=vmem, size = 0x12000, scoped, tag = 'internal scratch']
  #allocation2 [shape = 'f32[256,128]{1,0:T(8,128)}', space=vmem, size = 0x20000, scoped, tag = 'scratch operand']
  %s0 = inlined_call_operand.vmem [shape: bf16[256,8], index: 0, kind: input, shape index: {}]
  %s1 = inlined_call_operand.vmem [shape: bf16[8,32], index: 1, kind: input, shape index: {}]
  %s2 = inlined_call_operand.vmem [shape: bf16[256,256], index: 2, kind: input, shape index: {}]
  %s3 = inlined_call_operand.vmem [shape: bf16[160,128], index: 3, kind: input, shape index: {}]
  %s4 = inlined_call_operand.vmem [shape: f32[24,128], index: 4, kind: input, shape index: {}]
  %s5 = inlined_call_operand.vmem [shape: f32[32,128], index: 5, kind: output, shape index: {}]
  %s6 = sld [smem:[#allocation0]]
  $region30: #{dstagnn_forward.1} parent=0
    _
  %s8 = ssub.s32 1, %s6
  %s9 = scalar_select 0, %s8, %s6
  // Predicated region
  $region2: #{dstagnn_forward.1} parent=0 // pred_check
    _
  $region3: #{dstagnn_forward.1} parent=0 // pred_check_branch
    %11 = sbr.rel (0) target = $region5
  $region4: #{dstagnn_forward.1} parent=0 // pred_region
    _
  $region5: #{dstagnn_forward.1} parent=0 // pred_fallthru
    _
  // Predicated region
  $region6: #{dstagnn_forward.1} parent=0 // pred_check
    _
  $region7: #{dstagnn_forward.1} parent=0 // pred_check_branch
    %13 = sbr.rel (0) target = $region9
  $region8: #{dstagnn_forward.1} parent=0 // pred_region
    _
  $region9: #{dstagnn_forward.1} parent=0 // pred_fallthru
    _
  // Predicated region
  $region10: #{dstagnn_forward.1} parent=0 // pred_check
    _
  $region11: #{dstagnn_forward.1} parent=0 // pred_check_branch
    %15 = sbr.rel (0) target = $region13
  $region12: #{dstagnn_forward.1} parent=0 // pred_region
    _
  $region13: #{dstagnn_forward.1} parent=0 // pred_fallthru
    _
  // Predicated region
  $region14: #{dstagnn_forward.1} parent=0 // pred_check
    _
  $region15: #{dstagnn_forward.1} parent=0 // pred_check_branch
    %17 = sbr.rel (0) target = $region17
  $region16: #{dstagnn_forward.1} parent=0 // pred_region
    _
  $region17: #{dstagnn_forward.1} parent=0 // pred_fallthru
    _
  // Predicated region
  $region18: #{dstagnn_forward.1} parent=0 // pred_check
    _
  $region19: #{dstagnn_forward.1} parent=0 // pred_check_branch
    %19 = sbr.rel (0) target = $region21
  $region20: #{dstagnn_forward.1} parent=0 // pred_region
    _
  $region21: #{dstagnn_forward.1} parent=0 // pred_fallthru
    _
  %v21 = vld [vmem:[%s3] sm:$0xf]
  %v22 = vld [vmem:[%s3 + $0x4] sm:$0xf]
  %v23 = vld [vmem:[%s3 + $0x8] sm:$0xf]
  %v24 = vld [vmem:[%s3 + $0xc] sm:$0xf]
  %v25 = vld [vmem:[%s3 + $0x10] sm:$0xf]
  %v26 = vld [vmem:[%s3 + $0x14] sm:$0xf]
  %v27 = vld [vmem:[%s3 + $0x18] sm:$0xf]
  %v28 = vld [vmem:[%s3 + $0x1c] sm:$0xf]
  %v29 = vld [vmem:[%s3 + $0x20] sm:$0xf]
  %v30 = vld [vmem:[%s3 + $0x24] sm:$0xf]
  %v31 = vld [vmem:[%s3 + $0x28] sm:$0xf]
  %v32 = vld [vmem:[%s3 + $0x2c] sm:$0xf]
  %v33 = vld [vmem:[%s3 + $0x30] sm:$0xf]
  %v34 = vld [vmem:[%s3 + $0x34] sm:$0xf]
  %v35 = vld [vmem:[%s3 + $0x38] sm:$0xf]
  %v36 = vld [vmem:[%s3 + $0x3c] sm:$0xf]
  %v37 = vld [vmem:[%s3 + $0x40] sm:$0xf]
  %v38 = vld [vmem:[%s3 + $0x44] sm:$0xf]
  %v39 = vld [vmem:[%s3 + $0x48] sm:$0xf]
  %v40 = vld [vmem:[%s3 + $0x4c] sm:$0xf]
  %v41 = vld [vmem:[%s4] sm:$0x1]
  %v42 = vld [vmem:[%s4 + $0x8] sm:$0x1]
  %v43 = vld [vmem:[%s4 + $0x10] sm:$0x1]
  %v44 = vld [vmem:[%s0] sm:$0xf]
  %v45 = vld [vmem:[%s0 + $0x4] sm:$0xf]
  %v46 = vld [vmem:[%s0 + $0x8] sm:$0xf]
  %v47 = vld [vmem:[%s0 + $0xc] sm:$0xf]
  %v48 = vld [vmem:[%s0 + $0x10] sm:$0xf]
  %v49 = vld [vmem:[%s0 + $0x14] sm:$0xf]
  %v50 = vld [vmem:[%s0 + $0x18] sm:$0xf]
  %v51 = vld [vmem:[%s0 + $0x1c] sm:$0xf]
  %v52 = vld [vmem:[%s0 + $0x20] sm:$0xf]
  %v53 = vld [vmem:[%s0 + $0x24] sm:$0xf]
  %v54 = vld [vmem:[%s0 + $0x28] sm:$0xf]
  %v55 = vld [vmem:[%s0 + $0x2c] sm:$0xf]
  %v56 = vld [vmem:[%s0 + $0x30] sm:$0xf]
  %v57 = vld [vmem:[%s0 + $0x34] sm:$0xf]
  %v58 = vld [vmem:[%s0 + $0x38] sm:$0xf]
  %v59 = vld [vmem:[%s0 + $0x3c] sm:$0xf]
  %v60 = vld [vmem:[%s0 + $0x40] sm:$0xf]
  %v61 = vld [vmem:[%s0 + $0x44] sm:$0xf]
  %v62 = vld [vmem:[%s0 + $0x48] sm:$0xf]
  %v63 = vld [vmem:[%s0 + $0x4c] sm:$0xf]
  %v64 = vld [vmem:[%s0 + $0x50] sm:$0xf]
  %v65 = vld [vmem:[%s0 + $0x54] sm:$0xf]
  %v66 = vld [vmem:[%s0 + $0x58] sm:$0xf]
  %v67 = vld [vmem:[%s0 + $0x5c] sm:$0xf]
  %v68 = vld [vmem:[%s0 + $0x60] sm:$0xf]
  %v69 = vld [vmem:[%s0 + $0x64] sm:$0xf]
  %v70 = vld [vmem:[%s0 + $0x68] sm:$0xf]
  %v71 = vld [vmem:[%s0 + $0x6c] sm:$0xf]
  %v72 = vld [vmem:[%s0 + $0x70] sm:$0xf]
  %v73 = vld [vmem:[%s0 + $0x74] sm:$0xf]
  %v74 = vld [vmem:[%s0 + $0x78] sm:$0xf]
  %v75 = vld [vmem:[%s0 + $0x7c] sm:$0xf]
  %v76 = vld [vmem:[%s1] sm:$0xf]
  %v109 = vunpack.c.l.b16 %v44
  %v110 = vunpack.c.l.b16 %v45
  %v111 = vunpack.c.l.b16 %v46
  %v112 = vunpack.c.l.b16 %v47
  %v113 = vunpack.c.l.b16 %v48
  %v114 = vunpack.c.l.b16 %v49
  %v115 = vunpack.c.l.b16 %v50
  %v116 = vunpack.c.l.b16 %v51
  %v117 = vunpack.c.l.b16 %v52
  %v118 = vunpack.c.l.b16 %v53
  %v119 = vunpack.c.l.b16 %v54
  %v120 = vunpack.c.l.b16 %v55
  %v121 = vunpack.c.l.b16 %v56
  %v122 = vunpack.c.l.b16 %v57
  %v123 = vunpack.c.l.b16 %v58
  %v124 = vunpack.c.l.b16 %v59
  %v125 = vunpack.c.l.b16 %v60
  %v126 = vunpack.c.l.b16 %v61
  %v127 = vunpack.c.l.b16 %v62
  %v128 = vunpack.c.l.b16 %v63
  %v129 = vunpack.c.l.b16 %v64
  %v130 = vunpack.c.l.b16 %v65
  %v131 = vunpack.c.l.b16 %v66
  %v132 = vunpack.c.l.b16 %v67
  %v133 = vunpack.c.l.b16 %v68
  %v134 = vunpack.c.l.b16 %v69
  %v135 = vunpack.c.l.b16 %v70
  %v136 = vunpack.c.l.b16 %v71
  %v137 = vunpack.c.l.b16 %v72
  %v138 = vunpack.c.l.b16 %v73
  %v139 = vunpack.c.l.b16 %v74
  %v140 = vunpack.c.l.b16 %v75
  %v141 = vpack.c.b16 %v110, %v109
  %v142 = vpack.c.b16 %v112, %v111
  %v143 = vpack.c.b16 %v114, %v113
  %v144 = vpack.c.b16 %v116, %v115
  %v145 = vpack.c.b16 %v118, %v117
  %v146 = vpack.c.b16 %v120, %v119
  %v147 = vpack.c.b16 %v122, %v121
  %v148 = vpack.c.b16 %v124, %v123
  %v149 = vpack.c.b16 %v126, %v125
  %v150 = vpack.c.b16 %v128, %v127
  %v151 = vpack.c.b16 %v130, %v129
  %v152 = vpack.c.b16 %v132, %v131
  %v153 = vpack.c.b16 %v134, %v133
  %v154 = vpack.c.b16 %v136, %v135
  %v155 = vpack.c.b16 %v138, %v137
  %v156 = vpack.c.b16 %v140, %v139
  %vm157 = vcmask 64512
  %v159 = vsel %vm157, %v141, 0
  %v162 = vsel %vm157, %v142, 0
  %v165 = vsel %vm157, %v143, 0
  %v168 = vsel %vm157, %v144, 0
  %v171 = vsel %vm157, %v145, 0
  %v174 = vsel %vm157, %v146, 0
  %v177 = vsel %vm157, %v147, 0
  %v180 = vsel %vm157, %v148, 0
  %v183 = vsel %vm157, %v149, 0
  %v186 = vsel %vm157, %v150, 0
  %v189 = vsel %vm157, %v151, 0
  %v192 = vsel %vm157, %v152, 0
  %v195 = vsel %vm157, %v153, 0
  %v198 = vsel %vm157, %v154, 0
  %v201 = vsel %vm157, %v155, 0
  %v204 = vsel %vm157, %v156, 0
  %vm206 = vcmask 1043456
  %v208 = vsel %vm206, %v76, 0
  %210 = vmatprep.subr.bf16.mxu0 0
  %211 = vmatpush1.bf16.msra.mxu0 %v208
  %212 = vmatprep.subr.bf16.mxu0 0
  %213 = vmatpush1.bf16.msra.mxu0 0
  %214 = vmatprep.subr.bf16.mxu0 0
  %215 = vmatpush1.bf16.msra.mxu0 0
  %216 = vmatprep.subr.bf16.mxu0 0
  %217 = vmatpush1.bf16.msra.mxu0 0
  %218 = vmatprep.subr.bf16.mxu0 0
  %219 = vmatpush1.bf16.msra.mxu0 0
  %220 = vmatprep.subr.bf16.mxu0 0
  %221 = vmatpush1.bf16.msra.mxu0 0
  %222 = vmatprep.subr.bf16.mxu0 0
  %223 = vmatpush1.bf16.msra.mxu0 0
  %224 = vmatprep.subr.bf16.mxu0 0
  %225 = vmatpush1.bf16.msra.mxu0 0
  %226 = vmatprep.subr.bf16.mxu0 0
  %227 = vmatpush1.bf16.msra.mxu0 0
  %228 = vmatprep.subr.bf16.mxu0 0
  %229 = vmatpush1.bf16.msra.mxu0 0
  %230 = vmatprep.subr.bf16.mxu0 0
  %231 = vmatpush1.bf16.msra.mxu0 0
  %232 = vmatprep.subr.bf16.mxu0 0
  %233 = vmatpush1.bf16.msra.mxu0 0
  %234 = vmatprep.subr.bf16.mxu0 0
  %235 = vmatpush1.bf16.msra.mxu0 0
  %236 = vmatprep.subr.bf16.mxu0 0
  %237 = vmatpush1.bf16.msra.mxu0 0
  %238 = vmatprep.subr.bf16.mxu0 0
  %239 = vmatpush1.bf16.msra.mxu0 0
  %240 = vmatprep.subr.bf16.mxu0 0
  %241 = vmatpush1.bf16.msra.mxu0 0
  %242 = vmatprep.mubr.bf16.mxu0 0
  %243 = vmatmul.mubr.bf16.gmra.mrb[0].mxu0 %v159
  %v244 = vpop.f32.mrb[0].mxu0
  %v245 = vadd.f32 0.0, %v244
  %v246 = vpop.f32.mrb[0].mxu0
  %v247 = vpop.f32.mrb[0].mxu0
  %v248 = vadd.f32 0.0, %v247
  %v249 = vpop.f32.mrb[0].mxu0
  %250 = vmatprep.mubr.bf16.mxu0 0
  %251 = vmatmul.mubr.bf16.gmra.mrb[0].mxu0 %v162
  %v252 = vpop.f32.mrb[0].mxu0
  %v253 = vadd.f32 0.0, %v252
  %v254 = vpop.f32.mrb[0].mxu0
  %v255 = vpop.f32.mrb[0].mxu0
  %v256 = vadd.f32 0.0, %v255
  %v257 = vpop.f32.mrb[0].mxu0
  %258 = vmatprep.mubr.bf16.mxu0 0
  %259 = vmatmul.mubr.bf16.gmra.mrb[0].mxu0 %v165
  %v260 = vpop.f32.mrb[0].mxu0
  %v261 = vadd.f32 0.0, %v260
  %v262 = vpop.f32.mrb[0].mxu0
  %v263 = vpop.f32.mrb[0].mxu0
  %v264 = vadd.f32 0.0, %v263
  %v265 = vpop.f32.mrb[0].mxu0
  %266 = vmatprep.mubr.bf16.mxu0 0
  %267 = vmatmul.mubr.bf16.gmra.mrb[0].mxu0 %v168
  %v268 = vpop.f32.mrb[0].mxu0
  %v269 = vadd.f32 0.0, %v268
  %v270 = vpop.f32.mrb[0].mxu0
  %v271 = vpop.f32.mrb[0].mxu0
  %v272 = vadd.f32 0.0, %v271
  %v273 = vpop.f32.mrb[0].mxu0
  %274 = vmatprep.mubr.bf16.mxu0 0
  %275 = vmatmul.mubr.bf16.gmra.mrb[0].mxu0 %v171
  %v276 = vpop.f32.mrb[0].mxu0
  %v277 = vadd.f32 0.0, %v276
  %v278 = vpop.f32.mrb[0].mxu0
  %v279 = vpop.f32.mrb[0].mxu0
  %v280 = vadd.f32 0.0, %v279
  %v281 = vpop.f32.mrb[0].mxu0
  %282 = vmatprep.mubr.bf16.mxu0 0
  %283 = vmatmul.mubr.bf16.gmra.mrb[0].mxu0 %v174
  %v284 = vpop.f32.mrb[0].mxu0
  %v285 = vadd.f32 0.0, %v284
  %v286 = vpop.f32.mrb[0].mxu0
  %v287 = vpop.f32.mrb[0].mxu0
  %v288 = vadd.f32 0.0, %v287
  %v289 = vpop.f32.mrb[0].mxu0
  %290 = vmatprep.mubr.bf16.mxu0 0
  %291 = vmatmul.mubr.bf16.gmra.mrb[0].mxu0 %v177
  %v292 = vpop.f32.mrb[0].mxu0
  %v293 = vadd.f32 0.0, %v292
  %v294 = vpop.f32.mrb[0].mxu0
  %v295 = vpop.f32.mrb[0].mxu0
  %v296 = vadd.f32 0.0, %v295
  %v297 = vpop.f32.mrb[0].mxu0
  %298 = vmatprep.mubr.bf16.mxu0 0
  %299 = vmatmul.mubr.bf16.gmra.mrb[0].mxu0 %v180
  %v300 = vpop.f32.mrb[0].mxu0
  %v301 = vadd.f32 0.0, %v300
  %v302 = vpop.f32.mrb[0].mxu0
  %v303 = vpop.f32.mrb[0].mxu0
  %v304 = vadd.f32 0.0, %v303
  %v305 = vpop.f32.mrb[0].mxu0
  %306 = vmatprep.mubr.bf16.mxu0 0
  %307 = vmatmul.mubr.bf16.gmra.mrb[0].mxu0 %v183
  %v308 = vpop.f32.mrb[0].mxu0
  %v309 = vadd.f32 0.0, %v308
  %v310 = vpop.f32.mrb[0].mxu0
  %v311 = vpop.f32.mrb[0].mxu0
  %v312 = vadd.f32 0.0, %v311
  %v313 = vpop.f32.mrb[0].mxu0
  %314 = vmatprep.mubr.bf16.mxu0 0
  %315 = vmatmul.mubr.bf16.gmra.mrb[0].mxu0 %v186
  %v316 = vpop.f32.mrb[0].mxu0
  %v317 = vadd.f32 0.0, %v316
  %v318 = vpop.f32.mrb[0].mxu0
  %v319 = vpop.f32.mrb[0].mxu0
  %v320 = vadd.f32 0.0, %v319
  %v321 = vpop.f32.mrb[0].mxu0
  %322 = vmatprep.mubr.bf16.mxu0 0
  %323 = vmatmul.mubr.bf16.gmra.mrb[0].mxu0 %v189
  %v324 = vpop.f32.mrb[0].mxu0
  %v325 = vadd.f32 0.0, %v324
  %v326 = vpop.f32.mrb[0].mxu0
  %v327 = vpop.f32.mrb[0].mxu0
  %v328 = vadd.f32 0.0, %v327
  %v329 = vpop.f32.mrb[0].mxu0
  %330 = vmatprep.mubr.bf16.mxu0 0
  %331 = vmatmul.mubr.bf16.gmra.mrb[0].mxu0 %v192
  %v332 = vpop.f32.mrb[0].mxu0
  %v333 = vadd.f32 0.0, %v332
  %v334 = vpop.f32.mrb[0].mxu0
  %v335 = vpop.f32.mrb[0].mxu0
  %v336 = vadd.f32 0.0, %v335
  %v337 = vpop.f32.mrb[0].mxu0
  %338 = vmatprep.mubr.bf16.mxu0 0
  %339 = vmatmul.mubr.bf16.gmra.mrb[0].mxu0 %v195
  %v340 = vpop.f32.mrb[0].mxu0
  %v341 = vadd.f32 0.0, %v340
  %v342 = vpop.f32.mrb[0].mxu0
  %v343 = vpop.f32.mrb[0].mxu0
  %v344 = vadd.f32 0.0, %v343
  %v345 = vpop.f32.mrb[0].mxu0
  %346 = vmatprep.mubr.bf16.mxu0 0
  %347 = vmatmul.mubr.bf16.gmra.mrb[0].mxu0 %v198
  %v348 = vpop.f32.mrb[0].mxu0
  %v349 = vadd.f32 0.0, %v348
  %v350 = vpop.f32.mrb[0].mxu0
  %v351 = vpop.f32.mrb[0].mxu0
  %v352 = vadd.f32 0.0, %v351
  %v353 = vpop.f32.mrb[0].mxu0
  %354 = vmatprep.mubr.bf16.mxu0 0
  %355 = vmatmul.mubr.bf16.gmra.mrb[0].mxu0 %v201
  %v356 = vpop.f32.mrb[0].mxu0
  %v357 = vadd.f32 0.0, %v356
  %v358 = vpop.f32.mrb[0].mxu0
  %v359 = vpop.f32.mrb[0].mxu0
  %v360 = vadd.f32 0.0, %v359
  %v361 = vpop.f32.mrb[0].mxu0
  %362 = vmatprep.mubr.bf16.mxu0 0
  %363 = vmatmul.mubr.bf16.gmra.mrb[0].mxu0 %v204
  %v364 = vpop.f32.mrb[0].mxu0
  %v365 = vadd.f32 0.0, %v364
  %v366 = vpop.f32.mrb[0].mxu0
  %v367 = vpop.f32.mrb[0].mxu0
  %v368 = vadd.f32 0.0, %v367
  %v369 = vpop.f32.mrb[0].mxu0
  %370 = vdwg.mxu0
  %v371 = vld [vmem:[%s2] sm:$0xff]
  %v372 = vld [vmem:[%s2 + $0x8] sm:$0xff]
  %v373 = vld [vmem:[%s2 + $0x10] sm:$0xff]
  %v374 = vld [vmem:[%s2 + $0x18] sm:$0xff]
  %v375 = vld [vmem:[%s2 + $0x20] sm:$0xff]
  %v376 = vld [vmem:[%s2 + $0x28] sm:$0xff]
  %v377 = vld [vmem:[%s2 + $0x30] sm:$0xff]
  %v378 = vld [vmem:[%s2 + $0x38] sm:$0xff]
  %v379 = vld [vmem:[%s2 + $0x40] sm:$0xff]
  %v380 = vld [vmem:[%s2 + $0x48] sm:$0xff]
  %v381 = vld [vmem:[%s2 + $0x50] sm:$0xff]
  %v382 = vld [vmem:[%s2 + $0x58] sm:$0xff]
  %v383 = vld [vmem:[%s2 + $0x60] sm:$0xff]
  %v384 = vld [vmem:[%s2 + $0x68] sm:$0xff]
  %v385 = vld [vmem:[%s2 + $0x70] sm:$0xff]
  %v386 = vld [vmem:[%s2 + $0x78] sm:$0xff]
  %v387 = vld [vmem:[%s2 + $0x80] sm:$0xff]
  %v388 = vld [vmem:[%s2 + $0x88] sm:$0xff]
  %v389 = vld [vmem:[%s2 + $0x90] sm:$0xff]
  %v390 = vld [vmem:[%s2 + $0x98] sm:$0xff]
  %v391 = vld [vmem:[%s2 + $0xa0] sm:$0xff]
  %v392 = vld [vmem:[%s2 + $0xa8] sm:$0xff]
  %v393 = vld [vmem:[%s2 + $0xb0] sm:$0xff]
  %v394 = vld [vmem:[%s2 + $0xb8] sm:$0xff]
  %v395 = vld [vmem:[%s2 + $0xc0] sm:$0xff]
  %v396 = vld [vmem:[%s2 + $0xc8] sm:$0xff]
  %v397 = vld [vmem:[%s2 + $0xd0] sm:$0xff]
  %v398 = vld [vmem:[%s2 + $0xd8] sm:$0xff]
  %v399 = vld [vmem:[%s2 + $0xe0] sm:$0xff]
  %v400 = vld [vmem:[%s2 + $0xe8] sm:$0xff]
  %v401 = vld [vmem:[%s2 + $0xf0] sm:$0xff]
  %v402 = vld [vmem:[%s2 + $0xf8] sm:$0xff]
  %v403 = vpack.c.bf16 %v248, %v245
  %v404 = vpack.c.bf16 %v256, %v253
  %v405 = vpack.c.bf16 %v264, %v261
  %v406 = vpack.c.bf16 %v272, %v269
  %v407 = vpack.c.bf16 %v280, %v277
  %v408 = vpack.c.bf16 %v288, %v285
  %v409 = vpack.c.bf16 %v296, %v293
  %v410 = vpack.c.bf16 %v304, %v301
  %v411 = vpack.c.bf16 %v312, %v309
  %v412 = vpack.c.bf16 %v320, %v317
  %v413 = vpack.c.bf16 %v328, %v325
  %v414 = vpack.c.bf16 %v336, %v333
  %v415 = vpack.c.bf16 %v344, %v341
  %v416 = vpack.c.bf16 %v352, %v349
  %v417 = vpack.c.bf16 %v360, %v357
  %v418 = vpack.c.bf16 %v368, %v365
  %v451 = vunpack.c.l.b16 %v371
  %v452 = vunpack.c.h.b16 %v371
  %v453 = vunpack.c.l.b16 %v372
  %v454 = vunpack.c.h.b16 %v372
  %v455 = vunpack.c.l.b16 %v373
  %v456 = vunpack.c.h.b16 %v373
  %v457 = vunpack.c.l.b16 %v374
  %v458 = vunpack.c.h.b16 %v374
  %v459 = vunpack.c.l.b16 %v375
  %v460 = vunpack.c.h.b16 %v375
  %v461 = vunpack.c.l.b16 %v376
  %v462 = vunpack.c.h.b16 %v376
  %v463 = vunpack.c.l.b16 %v377
  %v464 = vunpack.c.h.b16 %v377
  %v465 = vunpack.c.l.b16 %v378
  %v466 = vunpack.c.h.b16 %v378
  %v467 = vunpack.c.l.b16 %v379
  %v468 = vunpack.c.h.b16 %v379
  %v469 = vunpack.c.l.b16 %v380
  %v470 = vunpack.c.h.b16 %v380
  %v471 = vunpack.c.l.b16 %v381
  %v472 = vunpack.c.h.b16 %v381
  %v473 = vunpack.c.l.b16 %v382
  %v474 = vunpack.c.h.b16 %v382
  %v475 = vunpack.c.l.b16 %v383
  %v476 = vunpack.c.h.b16 %v383
  %v477 = vunpack.c.l.b16 %v384
  %v478 = vunpack.c.h.b16 %v384
  %v479 = vunpack.c.l.b16 %v385
  %v480 = vunpack.c.h.b16 %v385
  %v481 = vunpack.c.l.b16 %v386
  %v482 = vunpack.c.h.b16 %v386
  %v483 = vunpack.c.l.b16 %v387
  %v484 = vunpack.c.h.b16 %v387
  %v485 = vunpack.c.l.b16 %v388
  %v486 = vunpack.c.h.b16 %v388
  %v487 = vunpack.c.l.b16 %v389
  %v488 = vunpack.c.h.b16 %v389
  %v489 = vunpack.c.l.b16 %v390
  %v490 = vunpack.c.h.b16 %v390
  %v491 = vunpack.c.l.b16 %v391
  %v492 = vunpack.c.h.b16 %v391
  %v493 = vunpack.c.l.b16 %v392
  %v494 = vunpack.c.h.b16 %v392
  %v495 = vunpack.c.l.b16 %v393
  %v496 = vunpack.c.h.b16 %v393
  %v497 = vunpack.c.l.b16 %v394
  %v498 = vunpack.c.h.b16 %v394
  %v499 = vunpack.c.l.b16 %v395
  %v500 = vunpack.c.h.b16 %v395
  %v501 = vunpack.c.l.b16 %v396
  %v502 = vunpack.c.h.b16 %v396
  %v503 = vunpack.c.l.b16 %v397
  %v504 = vunpack.c.h.b16 %v397
  %v505 = vunpack.c.l.b16 %v398
  %v506 = vunpack.c.h.b16 %v398
  %v507 = vunpack.c.l.b16 %v399
  %v508 = vunpack.c.h.b16 %v399
  %v509 = vunpack.c.l.b16 %v400
  %v510 = vunpack.c.h.b16 %v400
  %v511 = vunpack.c.l.b16 %v401
  %v512 = vunpack.c.h.b16 %v401
  %v513 = vunpack.c.l.b16 %v402
  %v514 = vunpack.c.h.b16 %v402
  %v515 = vpack.c.b16 %v453, %v451
  %v516 = vpack.c.b16 %v454, %v452
  %v517 = vpack.c.b16 %v457, %v455
  %v518 = vpack.c.b16 %v458, %v456
  %v519 = vpack.c.b16 %v461, %v459
  %v520 = vpack.c.b16 %v462, %v460
  %v521 = vpack.c.b16 %v465, %v463
  %v522 = vpack.c.b16 %v466, %v464
  %v523 = vpack.c.b16 %v469, %v467
  %v524 = vpack.c.b16 %v470, %v468
  %v525 = vpack.c.b16 %v473, %v471
  %v526 = vpack.c.b16 %v474, %v472
  %v527 = vpack.c.b16 %v477, %v475
  %v528 = vpack.c.b16 %v478, %v476
  %v529 = vpack.c.b16 %v481, %v479
  %v530 = vpack.c.b16 %v482, %v480
  %v531 = vpack.c.b16 %v485, %v483
  %v532 = vpack.c.b16 %v486, %v484
  %v533 = vpack.c.b16 %v489, %v487
  %v534 = vpack.c.b16 %v490, %v488
  %v535 = vpack.c.b16 %v493, %v491
  %v536 = vpack.c.b16 %v494, %v492
  %v537 = vpack.c.b16 %v497, %v495
  %v538 = vpack.c.b16 %v498, %v496
  %v539 = vpack.c.b16 %v501, %v499
  %v540 = vpack.c.b16 %v502, %v500
  %v541 = vpack.c.b16 %v505, %v503
  %v542 = vpack.c.b16 %v506, %v504
  %v543 = vpack.c.b16 %v509, %v507
  %v544 = vpack.c.b16 %v510, %v508
  %v545 = vpack.c.b16 %v513, %v511
  %v546 = vpack.c.b16 %v514, %v512
  %579 = vmatprep.subr.bf16.mxu0 0
  %580 = vmatpush1.bf16.msra.mxu0 %v403
  %581 = vmatprep.subr.bf16.mxu0 0
  %582 = vmatpush1.bf16.msra.mxu0 %v404
  %583 = vmatprep.subr.bf16.mxu0 0
  %584 = vmatpush1.bf16.msra.mxu0 %v405
  %585 = vmatprep.subr.bf16.mxu0 0
  %586 = vmatpush1.bf16.msra.mxu0 %v406
  %587 = vmatprep.subr.bf16.mxu0 0
  %588 = vmatpush1.bf16.msra.mxu0 %v407
  %589 = vmatprep.subr.bf16.mxu0 0
  %590 = vmatpush1.bf16.msra.mxu0 %v408
  %591 = vmatprep.subr.bf16.mxu0 0
  %592 = vmatpush1.bf16.msra.mxu0 %v409
  %593 = vmatprep.subr.bf16.mxu0 0
  %594 = vmatpush1.bf16.msra.mxu0 %v410
  %595 = vmatprep.subr.bf16.mxu0 0
  %596 = vmatpush1.bf16.msra.mxu0 %v411
  %597 = vmatprep.subr.bf16.mxu0 0
  %598 = vmatpush1.bf16.msra.mxu0 %v412
  %599 = vmatprep.subr.bf16.mxu0 0
  %600 = vmatpush1.bf16.msra.mxu0 %v413
  %601 = vmatprep.subr.bf16.mxu0 0
  %602 = vmatpush1.bf16.msra.mxu0 %v414
  %603 = vmatprep.subr.bf16.mxu0 0
  %604 = vmatpush1.bf16.msra.mxu0 %v415
  %605 = vmatprep.subr.bf16.mxu0 0
  %606 = vmatpush1.bf16.msra.mxu0 %v416
  %607 = vmatprep.subr.bf16.mxu0 0
  %608 = vmatpush1.bf16.msra.mxu0 %v417
  %609 = vmatprep.subr.bf16.mxu0 0
  %610 = vmatpush1.bf16.msra.mxu0 %v418
  %611 = vmatprep.mubr.bf16.mxu0 %v516
  %612 = vmatmul.mubr.bf16.gmra.mrb[0].mxu0 %v515
  %v613 = vpop.f32.mrb[0].mxu0
  %v614 = vadd.f32 0.0, %v613
  %v615 = vpop.f32.mrb[0].mxu0
  %v616 = vpop.f32.mrb[0].mxu0
  %v617 = vadd.f32 0.0, %v616
  %v618 = vpop.f32.mrb[0].mxu0
  %619 = vmatprep.mubr.bf16.mxu0 %v518
  %620 = vmatmul.mubr.bf16.gmra.mrb[0].mxu0 %v517
  %v621 = vpop.f32.mrb[0].mxu0
  %v622 = vadd.f32 0.0, %v621
  %v623 = vpop.f32.mrb[0].mxu0
  %v624 = vpop.f32.mrb[0].mxu0
  %v625 = vadd.f32 0.0, %v624
  %v626 = vpop.f32.mrb[0].mxu0
  %627 = vmatprep.mubr.bf16.mxu0 %v520
  %628 = vmatmul.mubr.bf16.gmra.mrb[0].mxu0 %v519
  %v629 = vpop.f32.mrb[0].mxu0
  %v630 = vadd.f32 0.0, %v629
  %v631 = vpop.f32.mrb[0].mxu0
  %v632 = vpop.f32.mrb[0].mxu0
  %v633 = vadd.f32 0.0, %v632
  %v634 = vpop.f32.mrb[0].mxu0
  %635 = vmatprep.mubr.bf16.mxu0 %v522
  %636 = vmatmul.mubr.bf16.gmra.mrb[0].mxu0 %v521
  %v637 = vpop.f32.mrb[0].mxu0
  %v638 = vadd.f32 0.0, %v637
  %v639 = vpop.f32.mrb[0].mxu0
  %v640 = vpop.f32.mrb[0].mxu0
  %v641 = vadd.f32 0.0, %v640
  %v642 = vpop.f32.mrb[0].mxu0
  %643 = vmatprep.mubr.bf16.mxu0 %v524
  %644 = vmatmul.mubr.bf16.gmra.mrb[0].mxu0 %v523
  %v645 = vpop.f32.mrb[0].mxu0
  %v646 = vadd.f32 0.0, %v645
  %v647 = vpop.f32.mrb[0].mxu0
  %v648 = vpop.f32.mrb[0].mxu0
  %v649 = vadd.f32 0.0, %v648
  %v650 = vpop.f32.mrb[0].mxu0
  %651 = vmatprep.mubr.bf16.mxu0 %v526
  %652 = vmatmul.mubr.bf16.gmra.mrb[0].mxu0 %v525
  %v653 = vpop.f32.mrb[0].mxu0
  %v654 = vadd.f32 0.0, %v653
  %v655 = vpop.f32.mrb[0].mxu0
  %v656 = vpop.f32.mrb[0].mxu0
  %v657 = vadd.f32 0.0, %v656
  %v658 = vpop.f32.mrb[0].mxu0
  %659 = vmatprep.mubr.bf16.mxu0 %v528
  %660 = vmatmul.mubr.bf16.gmra.mrb[0].mxu0 %v527
  %v661 = vpop.f32.mrb[0].mxu0
  %v662 = vadd.f32 0.0, %v661
  %v663 = vpop.f32.mrb[0].mxu0
  %v664 = vpop.f32.mrb[0].mxu0
  %v665 = vadd.f32 0.0, %v664
  %v666 = vpop.f32.mrb[0].mxu0
  %667 = vmatprep.mubr.bf16.mxu0 %v530
  %668 = vmatmul.mubr.bf16.gmra.mrb[0].mxu0 %v529
  %v669 = vpop.f32.mrb[0].mxu0
  %v670 = vadd.f32 0.0, %v669
  %v671 = vpop.f32.mrb[0].mxu0
  %v672 = vpop.f32.mrb[0].mxu0
  %v673 = vadd.f32 0.0, %v672
  %v674 = vpop.f32.mrb[0].mxu0
  %675 = vmatprep.mubr.bf16.mxu0 %v532
  %676 = vmatmul.mubr.bf16.gmra.mrb[0].mxu0 %v531
  %v677 = vpop.f32.mrb[0].mxu0
  %v678 = vadd.f32 0.0, %v677
  %v679 = vpop.f32.mrb[0].mxu0
  %v680 = vpop.f32.mrb[0].mxu0
  %v681 = vadd.f32 0.0, %v680
  %v682 = vpop.f32.mrb[0].mxu0
  %683 = vmatprep.mubr.bf16.mxu0 %v534
  %684 = vmatmul.mubr.bf16.gmra.mrb[0].mxu0 %v533
  %v685 = vpop.f32.mrb[0].mxu0
  %v686 = vadd.f32 0.0, %v685
  %v687 = vpop.f32.mrb[0].mxu0
  %v688 = vpop.f32.mrb[0].mxu0
  %v689 = vadd.f32 0.0, %v688
  %v690 = vpop.f32.mrb[0].mxu0
  %691 = vmatprep.mubr.bf16.mxu0 %v536
  %692 = vmatmul.mubr.bf16.gmra.mrb[0].mxu0 %v535
  %v693 = vpop.f32.mrb[0].mxu0
  %v694 = vadd.f32 0.0, %v693
  %v695 = vpop.f32.mrb[0].mxu0
  %v696 = vpop.f32.mrb[0].mxu0
  %v697 = vadd.f32 0.0, %v696
  %v698 = vpop.f32.mrb[0].mxu0
  %699 = vmatprep.mubr.bf16.mxu0 %v538
  %700 = vmatmul.mubr.bf16.gmra.mrb[0].mxu0 %v537
  %v701 = vpop.f32.mrb[0].mxu0
  %v702 = vadd.f32 0.0, %v701
  %v703 = vpop.f32.mrb[0].mxu0
  %v704 = vpop.f32.mrb[0].mxu0
  %v705 = vadd.f32 0.0, %v704
  %v706 = vpop.f32.mrb[0].mxu0
  %707 = vmatprep.mubr.bf16.mxu0 %v540
  %708 = vmatmul.mubr.bf16.gmra.mrb[0].mxu0 %v539
  %v709 = vpop.f32.mrb[0].mxu0
  %v710 = vadd.f32 0.0, %v709
  %v711 = vpop.f32.mrb[0].mxu0
  %v712 = vpop.f32.mrb[0].mxu0
  %v713 = vadd.f32 0.0, %v712
  %v714 = vpop.f32.mrb[0].mxu0
  %715 = vmatprep.mubr.bf16.mxu0 %v542
  %716 = vmatmul.mubr.bf16.gmra.mrb[0].mxu0 %v541
  %v717 = vpop.f32.mrb[0].mxu0
  %v718 = vadd.f32 0.0, %v717
  %v719 = vpop.f32.mrb[0].mxu0
  %v720 = vpop.f32.mrb[0].mxu0
  %v721 = vadd.f32 0.0, %v720
  %v722 = vpop.f32.mrb[0].mxu0
  %723 = vmatprep.mubr.bf16.mxu0 %v544
  %724 = vmatmul.mubr.bf16.gmra.mrb[0].mxu0 %v543
  %v725 = vpop.f32.mrb[0].mxu0
  %v726 = vadd.f32 0.0, %v725
  %v727 = vpop.f32.mrb[0].mxu0
  %v728 = vpop.f32.mrb[0].mxu0
  %v729 = vadd.f32 0.0, %v728
  %v730 = vpop.f32.mrb[0].mxu0
  %731 = vmatprep.mubr.bf16.mxu0 %v546
  %732 = vmatmul.mubr.bf16.gmra.mrb[0].mxu0 %v545
  %v733 = vpop.f32.mrb[0].mxu0
  %v734 = vadd.f32 0.0, %v733
  %v735 = vpop.f32.mrb[0].mxu0
  %v736 = vpop.f32.mrb[0].mxu0
  %v737 = vadd.f32 0.0, %v736
  %v738 = vpop.f32.mrb[0].mxu0
  %739 = vdwg.mxu0
  %v740 = vmax.f32 %v614, 0.0
  %v741 = vmax.f32 %v617, 0.0
  %v742 = vmax.f32 %v622, 0.0
  %v743 = vmax.f32 %v625, 0.0
  %v744 = vmax.f32 %v630, 0.0
  %v745 = vmax.f32 %v633, 0.0
  %v746 = vmax.f32 %v638, 0.0
  %v747 = vmax.f32 %v641, 0.0
  %v748 = vmax.f32 %v646, 0.0
  %v749 = vmax.f32 %v649, 0.0
  %v750 = vmax.f32 %v654, 0.0
  %v751 = vmax.f32 %v657, 0.0
  %v752 = vmax.f32 %v662, 0.0
  %v753 = vmax.f32 %v665, 0.0
  %v754 = vmax.f32 %v670, 0.0
  %v755 = vmax.f32 %v673, 0.0
  %v756 = vmax.f32 %v678, 0.0
  %v757 = vmax.f32 %v681, 0.0
  %v758 = vmax.f32 %v686, 0.0
  %v759 = vmax.f32 %v689, 0.0
  %v760 = vmax.f32 %v694, 0.0
  %v761 = vmax.f32 %v697, 0.0
  %v762 = vmax.f32 %v702, 0.0
  %v763 = vmax.f32 %v705, 0.0
  %v764 = vmax.f32 %v710, 0.0
  %v765 = vmax.f32 %v713, 0.0
  %v766 = vmax.f32 %v718, 0.0
  %v767 = vmax.f32 %v721, 0.0
  %v768 = vmax.f32 %v726, 0.0
  %v769 = vmax.f32 %v729, 0.0
  %v770 = vmax.f32 %v734, 0.0
  %v771 = vmax.f32 %v737, 0.0
  %v772 = vpack.c.bf16 %v741, %v740
  %v773 = vpack.c.bf16 %v743, %v742
  %v774 = vpack.c.bf16 %v745, %v744
  %v775 = vpack.c.bf16 %v747, %v746
  %v776 = vpack.c.bf16 %v749, %v748
  %v777 = vpack.c.bf16 %v751, %v750
  %v778 = vpack.c.bf16 %v753, %v752
  %v779 = vpack.c.bf16 %v755, %v754
  %v780 = vpack.c.bf16 %v757, %v756
  %v781 = vpack.c.bf16 %v759, %v758
  %v782 = vpack.c.bf16 %v761, %v760
  %v783 = vpack.c.bf16 %v763, %v762
  %v784 = vpack.c.bf16 %v765, %v764
  %v785 = vpack.c.bf16 %v767, %v766
  %v786 = vpack.c.bf16 %v769, %v768
  %v787 = vpack.c.bf16 %v771, %v770
  %v788 = vlaneseq
  %v789 = vshrl.u32 %v788, 7
  %v790 = vsub.s32 0, %v789
  %v791 = vrot.slane %v41, %v790
  %v796 = vunpack.c.l.b16 %v21
  %v797 = vunpack.c.l.b16 %v22
  %v798 = vunpack.c.l.b16 %v23
  %v799 = vunpack.c.l.b16 %v24
  %v800 = vpack.c.b16 %v797, %v796
  %v801 = vpack.c.b16 %v799, %v798
  %vm804 = vcmask 261120
  %v806 = vsel %vm804, %v772, 0
  %v809 = vsel %vm804, %v773, 0
  %v812 = vsel %vm804, %v774, 0
  %v815 = vsel %vm804, %v775, 0
  %v818 = vsel %vm804, %v776, 0
  %v821 = vsel %vm804, %v777, 0
  %v824 = vsel %vm804, %v778, 0
  %v827 = vsel %vm804, %v779, 0
  %v830 = vsel %vm804, %v780, 0
  %v833 = vsel %vm804, %v781, 0
  %v836 = vsel %vm804, %v782, 0
  %v839 = vsel %vm804, %v783, 0
  %v842 = vsel %vm804, %v784, 0
  %v845 = vsel %vm804, %v785, 0
  %v848 = vsel %vm804, %v786, 0
  %v851 = vsel %vm804, %v787, 0
  %853 = vmatprep.subr.bf16.mxu0 0
  %854 = vmatpush1.bf16.msra.mxu0 %v800
  %855 = vmatprep.subr.bf16.mxu0 0
  %856 = vmatpush1.bf16.msra.mxu0 %v801
  %857 = vmatprep.subr.bf16.mxu0 0
  %858 = vmatpush1.bf16.msra.mxu0 0
  %859 = vmatprep.subr.bf16.mxu0 0
  %860 = vmatpush1.bf16.msra.mxu0 0
  %861 = vmatprep.subr.bf16.mxu0 0
  %862 = vmatpush1.bf16.msra.mxu0 0
  %863 = vmatprep.subr.bf16.mxu0 0
  %864 = vmatpush1.bf16.msra.mxu0 0
  %865 = vmatprep.subr.bf16.mxu0 0
  %866 = vmatpush1.bf16.msra.mxu0 0
  %867 = vmatprep.subr.bf16.mxu0 0
  %868 = vmatpush1.bf16.msra.mxu0 0
  %869 = vmatprep.subr.bf16.mxu0 0
  %870 = vmatpush1.bf16.msra.mxu0 0
  %871 = vmatprep.subr.bf16.mxu0 0
  %872 = vmatpush1.bf16.msra.mxu0 0
  %873 = vmatprep.subr.bf16.mxu0 0
  %874 = vmatpush1.bf16.msra.mxu0 0
  %875 = vmatprep.subr.bf16.mxu0 0
  %876 = vmatpush1.bf16.msra.mxu0 0
  %877 = vmatprep.subr.bf16.mxu0 0
  %878 = vmatpush1.bf16.msra.mxu0 0
  %879 = vmatprep.subr.bf16.mxu0 0
  %880 = vmatpush1.bf16.msra.mxu0 0
  %881 = vmatprep.subr.bf16.mxu0 0
  %882 = vmatpush1.bf16.msra.mxu0 0
  %883 = vmatprep.subr.bf16.mxu0 0
  %884 = vmatpush1.bf16.msra.mxu0 0
  %885 = vmatprep.mubr.bf16.mxu0 0
  %886 = vmatmul.mubr.bf16.gmra.mrb[0].mxu0 %v806
  %v887 = vpop.f32.mrb[0].mxu0
  %v888 = vadd.f32 %v791, %v887
  %v889 = vpop.f32.mrb[0].mxu0
  %v890 = vpop.f32.mrb[0].mxu0
  %v891 = vadd.f32 %v791, %v890
  %v892 = vpop.f32.mrb[0].mxu0
  %893 = vmatprep.mubr.bf16.mxu0 0
  %894 = vmatmul.mubr.bf16.gmra.mrb[0].mxu0 %v809
  %v895 = vpop.f32.mrb[0].mxu0
  %v896 = vadd.f32 %v791, %v895
  %v897 = vpop.f32.mrb[0].mxu0
  %v898 = vpop.f32.mrb[0].mxu0
  %v899 = vadd.f32 %v791, %v898
  %v900 = vpop.f32.mrb[0].mxu0
  %901 = vmatprep.mubr.bf16.mxu0 0
  %902 = vmatmul.mubr.bf16.gmra.mrb[0].mxu0 %v812
  %v903 = vpop.f32.mrb[0].mxu0
  %v904 = vadd.f32 %v791, %v903
  %v905 = vpop.f32.mrb[0].mxu0
  %v906 = vpop.f32.mrb[0].mxu0
  %v907 = vadd.f32 %v791, %v906
  %v908 = vpop.f32.mrb[0].mxu0
  %909 = vmatprep.mubr.bf16.mxu0 0
  %910 = vmatmul.mubr.bf16.gmra.mrb[0].mxu0 %v815
  %v911 = vpop.f32.mrb[0].mxu0
  %v912 = vadd.f32 %v791, %v911
  %v913 = vpop.f32.mrb[0].mxu0
  %v914 = vpop.f32.mrb[0].mxu0
  %v915 = vadd.f32 %v791, %v914
  %v916 = vpop.f32.mrb[0].mxu0
  %917 = vmatprep.mubr.bf16.mxu0 0
  %918 = vmatmul.mubr.bf16.gmra.mrb[0].mxu0 %v818
  %v919 = vpop.f32.mrb[0].mxu0
  %v920 = vadd.f32 %v791, %v919
  %v921 = vpop.f32.mrb[0].mxu0
  %v922 = vpop.f32.mrb[0].mxu0
  %v923 = vadd.f32 %v791, %v922
  %v924 = vpop.f32.mrb[0].mxu0
  %925 = vmatprep.mubr.bf16.mxu0 0
  %926 = vmatmul.mubr.bf16.gmra.mrb[0].mxu0 %v821
  %v927 = vpop.f32.mrb[0].mxu0
  %v928 = vadd.f32 %v791, %v927
  %v929 = vpop.f32.mrb[0].mxu0
  %v930 = vpop.f32.mrb[0].mxu0
  %v931 = vadd.f32 %v791, %v930
  %v932 = vpop.f32.mrb[0].mxu0
  %933 = vmatprep.mubr.bf16.mxu0 0
  %934 = vmatmul.mubr.bf16.gmra.mrb[0].mxu0 %v824
  %v935 = vpop.f32.mrb[0].mxu0
  %v936 = vadd.f32 %v791, %v935
  %v937 = vpop.f32.mrb[0].mxu0
  %v938 = vpop.f32.mrb[0].mxu0
  %v939 = vadd.f32 %v791, %v938
  %v940 = vpop.f32.mrb[0].mxu0
  %941 = vmatprep.mubr.bf16.mxu0 0
  %942 = vmatmul.mubr.bf16.gmra.mrb[0].mxu0 %v827
  %v943 = vpop.f32.mrb[0].mxu0
  %v944 = vadd.f32 %v791, %v943
  %v945 = vpop.f32.mrb[0].mxu0
  %v946 = vpop.f32.mrb[0].mxu0
  %v947 = vadd.f32 %v791, %v946
  %v948 = vpop.f32.mrb[0].mxu0
  %949 = vmatprep.mubr.bf16.mxu0 0
  %950 = vmatmul.mubr.bf16.gmra.mrb[0].mxu0 %v830
  %v951 = vpop.f32.mrb[0].mxu0
  %v952 = vadd.f32 %v791, %v951
  %v953 = vpop.f32.mrb[0].mxu0
  %v954 = vpop.f32.mrb[0].mxu0
  %v955 = vadd.f32 %v791, %v954
  %v956 = vpop.f32.mrb[0].mxu0
  %957 = vmatprep.mubr.bf16.mxu0 0
  %958 = vmatmul.mubr.bf16.gmra.mrb[0].mxu0 %v833
  %v959 = vpop.f32.mrb[0].mxu0
  %v960 = vadd.f32 %v791, %v959
  %v961 = vpop.f32.mrb[0].mxu0
  %v962 = vpop.f32.mrb[0].mxu0
  %v963 = vadd.f32 %v791, %v962
  %v964 = vpop.f32.mrb[0].mxu0
  %965 = vmatprep.mubr.bf16.mxu0 0
  %966 = vmatmul.mubr.bf16.gmra.mrb[0].mxu0 %v836
  %v967 = vpop.f32.mrb[0].mxu0
  %v968 = vadd.f32 %v791, %v967
  %v969 = vpop.f32.mrb[0].mxu0
  %v970 = vpop.f32.mrb[0].mxu0
  %v971 = vadd.f32 %v791, %v970
  %v972 = vpop.f32.mrb[0].mxu0
  %973 = vmatprep.mubr.bf16.mxu0 0
  %974 = vmatmul.mubr.bf16.gmra.mrb[0].mxu0 %v839
  %v975 = vpop.f32.mrb[0].mxu0
  %v976 = vadd.f32 %v791, %v975
  %v977 = vpop.f32.mrb[0].mxu0
  %v978 = vpop.f32.mrb[0].mxu0
  %v979 = vadd.f32 %v791, %v978
  %v980 = vpop.f32.mrb[0].mxu0
  %981 = vmatprep.mubr.bf16.mxu0 0
  %982 = vmatmul.mubr.bf16.gmra.mrb[0].mxu0 %v842
  %v983 = vpop.f32.mrb[0].mxu0
  %v984 = vadd.f32 %v791, %v983
  %v985 = vpop.f32.mrb[0].mxu0
  %v986 = vpop.f32.mrb[0].mxu0
  %v987 = vadd.f32 %v791, %v986
  %v988 = vpop.f32.mrb[0].mxu0
  %989 = vmatprep.mubr.bf16.mxu0 0
  %990 = vmatmul.mubr.bf16.gmra.mrb[0].mxu0 %v845
  %v991 = vpop.f32.mrb[0].mxu0
  %v992 = vadd.f32 %v791, %v991
  %v993 = vpop.f32.mrb[0].mxu0
  %v994 = vpop.f32.mrb[0].mxu0
  %v995 = vadd.f32 %v791, %v994
  %v996 = vpop.f32.mrb[0].mxu0
  %997 = vmatprep.mubr.bf16.mxu0 0
  %998 = vmatmul.mubr.bf16.gmra.mrb[0].mxu0 %v848
  %v999 = vpop.f32.mrb[0].mxu0
  %v1000 = vadd.f32 %v791, %v999
  %v1001 = vpop.f32.mrb[0].mxu0
  %v1002 = vpop.f32.mrb[0].mxu0
  %v1003 = vadd.f32 %v791, %v1002
  %v1004 = vpop.f32.mrb[0].mxu0
  %1005 = vmatprep.mubr.bf16.mxu0 0
  %1006 = vmatmul.mubr.bf16.gmra.mrb[0].mxu0 %v851
  %v1007 = vpop.f32.mrb[0].mxu0
  %v1008 = vadd.f32 %v791, %v1007
  %v1009 = vpop.f32.mrb[0].mxu0
  %v1010 = vpop.f32.mrb[0].mxu0
  %v1011 = vadd.f32 %v791, %v1010
  %v1012 = vpop.f32.mrb[0].mxu0
  %1013 = vdwg.mxu0
  %1014 = vst [vmem:[#allocation2] sm:$0xff] %v888
  %1015 = vst [vmem:[#allocation2 + $0x8] sm:$0xff] %v891
  %1016 = vst [vmem:[#allocation2 + $0x10] sm:$0xff] %v896
  %1017 = vst [vmem:[#allocation2 + $0x18] sm:$0xff] %v899
  %1018 = vst [vmem:[#allocation2 + $0x20] sm:$0xff] %v904
  %1019 = vst [vmem:[#allocation2 + $0x28] sm:$0xff] %v907
  %1020 = vst [vmem:[#allocation2 + $0x30] sm:$0xff] %v912
  %1021 = vst [vmem:[#allocation2 + $0x38] sm:$0xff] %v915
  %1022 = vst [vmem:[#allocation2 + $0x40] sm:$0xff] %v920
  %1023 = vst [vmem:[#allocation2 + $0x48] sm:$0xff] %v923
  %1024 = vst [vmem:[#allocation2 + $0x50] sm:$0xff] %v928
  %1025 = vst [vmem:[#allocation2 + $0x58] sm:$0xff] %v931
  %1026 = vst [vmem:[#allocation2 + $0x60] sm:$0xff] %v936
  %1027 = vst [vmem:[#allocation2 + $0x68] sm:$0xff] %v939
  %1028 = vst [vmem:[#allocation2 + $0x70] sm:$0xff] %v944
  %1029 = vst [vmem:[#allocation2 + $0x78] sm:$0xff] %v947
  %1030 = vst [vmem:[#allocation2 + $0x80] sm:$0xff] %v952
  %1031 = vst [vmem:[#allocation2 + $0x88] sm:$0xff] %v955
  %1032 = vst [vmem:[#allocation2 + $0x90] sm:$0xff] %v960
  %1033 = vst [vmem:[#allocation2 + $0x98] sm:$0xff] %v963
  %1034 = vst [vmem:[#allocation2 + $0xa0] sm:$0xff] %v968
  %1035 = vst [vmem:[#allocation2 + $0xa8] sm:$0xff] %v971
  %1036 = vst [vmem:[#allocation2 + $0xb0] sm:$0xff] %v976
  %1037 = vst [vmem:[#allocation2 + $0xb8] sm:$0xff] %v979
  %1038 = vst [vmem:[#allocation2 + $0xc0] sm:$0xff] %v984
  %1039 = vst [vmem:[#allocation2 + $0xc8] sm:$0xff] %v987
  %1040 = vst [vmem:[#allocation2 + $0xd0] sm:$0xff] %v992
  %1041 = vst [vmem:[#allocation2 + $0xd8] sm:$0xff] %v995
  %1042 = vst [vmem:[#allocation2 + $0xe0] sm:$0xff] %v1000
  %1043 = vst [vmem:[#allocation2 + $0xe8] sm:$0xff] %v1003
  %1044 = vst [vmem:[#allocation2 + $0xf0] sm:$0xff] %v1008
  %1045 = vst [vmem:[#allocation2 + $0xf8] sm:$0xff] %v1011
  %v1046 = vld [vmem:[#allocation2] sm:$0xff]
  %v1047 = vld [vmem:[#allocation2 + $0x8] sm:$0xff]
  %v1048 = vld [vmem:[#allocation2 + $0x10] sm:$0xff]
  %v1049 = vld [vmem:[#allocation2 + $0x18] sm:$0xff]
  %v1054 = vunpack.c.l.b16 %v25
  %v1055 = vunpack.c.l.b16 %v26
  %v1056 = vunpack.c.l.b16 %v27
  %v1057 = vunpack.c.l.b16 %v28
  %v1058 = vpack.c.b16 %v1055, %v1054
  %v1059 = vpack.c.b16 %v1057, %v1056
  %v1063 = vsel %vm804, 0, 0
  %1065 = vmatprep.subr.bf16.mxu0 0
  %1066 = vmatpush1.bf16.msra.mxu0 %v1058
  %1067 = vmatprep.subr.bf16.mxu0 0
  %1068 = vmatpush1.bf16.msra.mxu0 %v1059
  %1069 = vmatprep.subr.bf16.mxu0 0
  %1070 = vmatpush1.bf16.msra.mxu0 0
  %1071 = vmatprep.subr.bf16.mxu0 0
  %1072 = vmatpush1.bf16.msra.mxu0 0
  %1073 = vmatprep.subr.bf16.mxu0 0
  %1074 = vmatpush1.bf16.msra.mxu0 0
  %1075 = vmatprep.subr.bf16.mxu0 0
  %1076 = vmatpush1.bf16.msra.mxu0 0
  %1077 = vmatprep.subr.bf16.mxu0 0
  %1078 = vmatpush1.bf16.msra.mxu0 0
  %1079 = vmatprep.subr.bf16.mxu0 0
  %1080 = vmatpush1.bf16.msra.mxu0 0
  %1081 = vmatprep.subr.bf16.mxu0 0
  %1082 = vmatpush1.bf16.msra.mxu0 0
  %1083 = vmatprep.subr.bf16.mxu0 0
  %1084 = vmatpush1.bf16.msra.mxu0 0
  %1085 = vmatprep.subr.bf16.mxu0 0
  %1086 = vmatpush1.bf16.msra.mxu0 0
  %1087 = vmatprep.subr.bf16.mxu0 0
  %1088 = vmatpush1.bf16.msra.mxu0 0
  %1089 = vmatprep.subr.bf16.mxu0 0
  %1090 = vmatpush1.bf16.msra.mxu0 0
  %1091 = vmatprep.subr.bf16.mxu0 0
  %1092 = vmatpush1.bf16.msra.mxu0 0
  %1093 = vmatprep.subr.bf16.mxu0 0
  %1094 = vmatpush1.bf16.msra.mxu0 0
  %1095 = vmatprep.subr.bf16.mxu0 0
  %1096 = vmatpush1.bf16.msra.mxu0 0
  %1097 = vmatprep.mubr.bf16.mxu0 0
  %1098 = vmatmul.mubr.bf16.gmra.mrb[0].mxu0 %v1063
  %v1099 = vpop.f32.mrb[0].mxu0
  %v1100 = vadd.f32 0.0, %v1099
  %v1101 = vpop.f32.mrb[0].mxu0
  %v1102 = vpop.f32.mrb[0].mxu0
  %v1103 = vadd.f32 0.0, %v1102
  %v1104 = vpop.f32.mrb[0].mxu0
  %1105 = vmatprep.mubr.bf16.mxu0 0
  %1106 = vmatmul.mubr.bf16.gmra.mrb[0].mxu0 %v1063
  %v1107 = vpop.f32.mrb[0].mxu0
  %v1108 = vadd.f32 0.0, %v1107
  %v1109 = vpop.f32.mrb[0].mxu0
  %v1110 = vpop.f32.mrb[0].mxu0
  %v1111 = vadd.f32 0.0, %v1110
  %v1112 = vpop.f32.mrb[0].mxu0
  %1113 = vdwg.mxu0
  %v1114 = vadd.f32 %v1046, %v1100
  %v1115 = vadd.f32 %v1047, %v1103
  %v1116 = vadd.f32 %v1048, %v1108
  %v1117 = vadd.f32 %v1049, %v1111
  %v1118 = vxor.u32 %v1114, 2147483648
  %v1119 = vxor.u32 %v1115, 2147483648
  %v1120 = vxor.u32 %v1116, 2147483648
  %v1121 = vxor.u32 %v1117, 2147483648
  %v1122 = vmul.f32 %v1118, 1.442695
  %v1123 = vpow.pop %v1122
  %v1124 = vmul.f32 %v1119, 1.442695
  %v1125 = vpow.pop %v1124
  %v1126 = vmul.f32 %v1120, 1.442695
  %v1127 = vpow.pop %v1126
  %v1128 = vmul.f32 %v1121, 1.442695
  %v1129 = vpow.pop %v1128
  %v1130 = vadd.f32 %v1123, 1.0
  %v1131 = vadd.f32 %v1125, 1.0
  %v1132 = vadd.f32 %v1127, 1.0
  %v1133 = vadd.f32 %v1129, 1.0
  %v1134 = vrcp.pop %v1130
  %v1135 = vmul.f32 1.0, %v1134
  %v1136 = vrcp.pop %v1131
  %v1137 = vmul.f32 1.0, %v1136
  %v1138 = vrcp.pop %v1132
  %v1139 = vmul.f32 1.0, %v1138
  %v1140 = vrcp.pop %v1133
  %v1141 = vmul.f32 1.0, %v1140
  %v1142 = vtanh.pop %v1114
  %v1143 = vtanh.pop %v1115
  %v1144 = vtanh.pop %v1116
  %v1145 = vtanh.pop %v1117
  %v1146 = vmul.f32 %v1135, 0.0
  %v1147 = vmul.f32 %v1137, 0.0
  %v1148 = vmul.f32 %v1139, 0.0
  %v1149 = vmul.f32 %v1141, 0.0
  %1154 = vrot.lane.b32.xlu0 %v1142, 64
  %v1155 = vpop.permute.xlu0 %1154
  %1156 = vrot.lane.b32.xlu0 %v1143, 64
  %v1157 = vpop.permute.xlu0 %1156
  %1158 = vrot.lane.b32.xlu0 %v1144, 64
  %v1159 = vpop.permute.xlu0 %1158
  %1160 = vrot.lane.b32.xlu0 %v1145, 64
  %v1161 = vpop.permute.xlu0 %1160
  %v1166 = vmul.f32 %v1135, %v1155
  %v1167 = vmul.f32 %v1137, %v1157
  %v1168 = vmul.f32 %v1139, %v1159
  %v1169 = vmul.f32 %v1141, %v1161
  %1174 = vrot.lane.b32.xlu0 %v1166, 32
  %v1175 = vpop.permute.xlu0 %1174
  %1176 = vrot.lane.b32.xlu0 %v1167, 32
  %v1177 = vpop.permute.xlu0 %1176
  %1178 = vrot.lane.b32.xlu0 %v1168, 32
  %v1179 = vpop.permute.xlu0 %1178
  %1180 = vrot.lane.b32.xlu0 %v1169, 32
  %v1181 = vpop.permute.xlu0 %1180
  %v1186 = vadd.f32 %v1146, %v1175
  %v1187 = vadd.f32 %v1147, %v1177
  %v1188 = vadd.f32 %v1148, %v1179
  %v1189 = vadd.f32 %v1149, %v1181
  %v1190 = vtanh.pop %v1186
  %v1191 = vtanh.pop %v1187
  %v1192 = vtanh.pop %v1188
  %v1193 = vtanh.pop %v1189
  %1198 = vrot.lane.b32.xlu0 %v1190, 64
  %v1199 = vpop.permute.xlu0 %1198
  %1200 = vrot.lane.b32.xlu0 %v1191, 64
  %v1201 = vpop.permute.xlu0 %1200
  %1202 = vrot.lane.b32.xlu0 %v1192, 64
  %v1203 = vpop.permute.xlu0 %1202
  %1204 = vrot.lane.b32.xlu0 %v1193, 64
  %v1205 = vpop.permute.xlu0 %1204
  %v1210 = vmul.f32 %v1135, %v1199
  %v1211 = vmul.f32 %v1137, %v1201
  %v1212 = vmul.f32 %v1139, %v1203
  %v1213 = vmul.f32 %v1141, %v1205
  %v1214 = vpack.c.bf16 %v1211, %v1210
  %v1215 = vpack.c.bf16 %v1213, %v1212
  %1218 = vrot.lane.b32.xlu0 %v1214, 32
  %v1219 = vpop.permute.xlu0 %1218
  %1220 = vrot.lane.b32.xlu0 %v1215, 32
  %v1221 = vpop.permute.xlu0 %1220
  %v1226 = vunpack.c.l.b16 %v29
  %v1227 = vunpack.c.l.b16 %v30
  %v1228 = vunpack.c.l.b16 %v31
  %v1229 = vunpack.c.l.b16 %v32
  %v1230 = vpack.c.b16 %v1227, %v1226
  %v1231 = vpack.c.b16 %v1229, %v1228
  %v1235 = vsel %vm804, %v1219, 0
  %v1238 = vsel %vm804, %v1221, 0
  %1240 = vmatprep.subr.bf16.mxu0 0
  %1241 = vmatpush1.bf16.msra.mxu0 %v1230
  %1242 = vmatprep.subr.bf16.mxu0 0
  %1243 = vmatpush1.bf16.msra.mxu0 %v1231
  %1244 = vmatprep.subr.bf16.mxu0 0
  %1245 = vmatpush1.bf16.msra.mxu0 0
  %1246 = vmatprep.subr.bf16.mxu0 0
  %1247 = vmatpush1.bf16.msra.mxu0 0
  %1248 = vmatprep.subr.bf16.mxu0 0
  %1249 = vmatpush1.bf16.msra.mxu0 0
  %1250 = vmatprep.subr.bf16.mxu0 0
  %1251 = vmatpush1.bf16.msra.mxu0 0
  %1252 = vmatprep.subr.bf16.mxu0 0
  %1253 = vmatpush1.bf16.msra.mxu0 0
  %1254 = vmatprep.subr.bf16.mxu0 0
  %1255 = vmatpush1.bf16.msra.mxu0 0
  %1256 = vmatprep.subr.bf16.mxu0 0
  %1257 = vmatpush1.bf16.msra.mxu0 0
  %1258 = vmatprep.subr.bf16.mxu0 0
  %1259 = vmatpush1.bf16.msra.mxu0 0
  %1260 = vmatprep.subr.bf16.mxu0 0
  %1261 = vmatpush1.bf16.msra.mxu0 0
  %1262 = vmatprep.subr.bf16.mxu0 0
  %1263 = vmatpush1.bf16.msra.mxu0 0
  %1264 = vmatprep.subr.bf16.mxu0 0
  %1265 = vmatpush1.bf16.msra.mxu0 0
  %1266 = vmatprep.subr.bf16.mxu0 0
  %1267 = vmatpush1.bf16.msra.mxu0 0
  %1268 = vmatprep.subr.bf16.mxu0 0
  %1269 = vmatpush1.bf16.msra.mxu0 0
  %1270 = vmatprep.subr.bf16.mxu0 0
  %1271 = vmatpush1.bf16.msra.mxu0 0
  %1272 = vmatprep.mubr.bf16.mxu0 0
  %1273 = vmatmul.mubr.bf16.gmra.mrb[0].mxu0 %v1235
  %v1274 = vpop.f32.mrb[0].mxu0
  %v1275 = vadd.f32 0.0, %v1274
  %v1276 = vpop.f32.mrb[0].mxu0
  %v1277 = vpop.f32.mrb[0].mxu0
  %v1278 = vadd.f32 0.0, %v1277
  %v1279 = vpop.f32.mrb[0].mxu0
  %1280 = vmatprep.mubr.bf16.mxu0 0
  %1281 = vmatmul.mubr.bf16.gmra.mrb[0].mxu0 %v1238
  %v1282 = vpop.f32.mrb[0].mxu0
  %v1283 = vadd.f32 0.0, %v1282
  %v1284 = vpop.f32.mrb[0].mxu0
  %v1285 = vpop.f32.mrb[0].mxu0
  %v1286 = vadd.f32 0.0, %v1285
  %v1287 = vpop.f32.mrb[0].mxu0
  %1288 = vdwg.mxu0
  %v1293 = vunpack.c.l.b16 %v33
  %v1294 = vunpack.c.l.b16 %v34
  %v1295 = vunpack.c.l.b16 %v35
  %v1296 = vunpack.c.l.b16 %v36
  %v1297 = vpack.c.b16 %v1294, %v1293
  %v1298 = vpack.c.b16 %v1296, %v1295
  %1301 = vmatprep.subr.bf16.mxu0 0
  %1302 = vmatpush1.bf16.msra.mxu0 %v1297
  %1303 = vmatprep.subr.bf16.mxu0 0
  %1304 = vmatpush1.bf16.msra.mxu0 %v1298
  %1305 = vmatprep.subr.bf16.mxu0 0
  %1306 = vmatpush1.bf16.msra.mxu0 0
  %1307 = vmatprep.subr.bf16.mxu0 0
  %1308 = vmatpush1.bf16.msra.mxu0 0
  %1309 = vmatprep.subr.bf16.mxu0 0
  %1310 = vmatpush1.bf16.msra.mxu0 0
  %1311 = vmatprep.subr.bf16.mxu0 0
  %1312 = vmatpush1.bf16.msra.mxu0 0
  %1313 = vmatprep.subr.bf16.mxu0 0
  %1314 = vmatpush1.bf16.msra.mxu0 0
  %1315 = vmatprep.subr.bf16.mxu0 0
  %1316 = vmatpush1.bf16.msra.mxu0 0
  %1317 = vmatprep.subr.bf16.mxu0 0
  %1318 = vmatpush1.bf16.msra.mxu0 0
  %1319 = vmatprep.subr.bf16.mxu0 0
  %1320 = vmatpush1.bf16.msra.mxu0 0
  %1321 = vmatprep.subr.bf16.mxu0 0
  %1322 = vmatpush1.bf16.msra.mxu0 0
  %1323 = vmatprep.subr.bf16.mxu0 0
  %1324 = vmatpush1.bf16.msra.mxu0 0
  %1325 = vmatprep.subr.bf16.mxu0 0
  %1326 = vmatpush1.bf16.msra.mxu0 0
  %1327 = vmatprep.subr.bf16.mxu0 0
  %1328 = vmatpush1.bf16.msra.mxu0 0
  %1329 = vmatprep.subr.bf16.mxu0 0
  %1330 = vmatpush1.bf16.msra.mxu0 0
  %1331 = vmatprep.subr.bf16.mxu0 0
  %1332 = vmatpush1.bf16.msra.mxu0 0
  %1333 = vmatprep.mubr.bf16.mxu0 0
  %1334 = vmatmul.mubr.bf16.gmra.mrb[0].mxu0 %v1063
  %v1335 = vpop.f32.mrb[0].mxu0
  %v1336 = vadd.f32 %v1275, %v1335
  %v1337 = vpop.f32.mrb[0].mxu0
  %v1338 = vpop.f32.mrb[0].mxu0
  %v1339 = vadd.f32 %v1278, %v1338
  %v1340 = vpop.f32.mrb[0].mxu0
  %1341 = vmatprep.mubr.bf16.mxu0 0
  %1342 = vmatmul.mubr.bf16.gmra.mrb[0].mxu0 %v1063
  %v1343 = vpop.f32.mrb[0].mxu0
  %v1344 = vadd.f32 %v1283, %v1343
  %v1345 = vpop.f32.mrb[0].mxu0
  %v1346 = vpop.f32.mrb[0].mxu0
  %v1347 = vadd.f32 %v1286, %v1346
  %v1348 = vpop.f32.mrb[0].mxu0
  %1349 = vdwg.mxu0
  %v1350 = vlaneseq
  %v1351 = vshrl.u32 %v1350, 7
  %v1352 = vsub.s32 0, %v1351
  %v1353 = vrot.slane %v42, %v1352
  %v1354 = vadd.f32 %v1336, %v1353
  %v1355 = vadd.f32 %v1339, %v1353
  %v1356 = vadd.f32 %v1344, %v1353
  %v1357 = vadd.f32 %v1347, %v1353
  %v1358 = vxor.u32 %v1354, 2147483648
  %v1359 = vxor.u32 %v1355, 2147483648
  %v1360 = vxor.u32 %v1356, 2147483648
  %v1361 = vxor.u32 %v1357, 2147483648
  %v1362 = vmul.f32 %v1358, 1.442695
  %v1363 = vpow.pop %v1362
  %v1364 = vmul.f32 %v1359, 1.442695
  %v1365 = vpow.pop %v1364
  %v1366 = vmul.f32 %v1360, 1.442695
  %v1367 = vpow.pop %v1366
  %v1368 = vmul.f32 %v1361, 1.442695
  %v1369 = vpow.pop %v1368
  %v1370 = vadd.f32 %v1363, 1.0
  %v1371 = vadd.f32 %v1365, 1.0
  %v1372 = vadd.f32 %v1367, 1.0
  %v1373 = vadd.f32 %v1369, 1.0
  %v1374 = vrcp.pop %v1370
  %v1375 = vmul.f32 1.0, %v1374
  %v1376 = vrcp.pop %v1371
  %v1377 = vmul.f32 1.0, %v1376
  %v1378 = vrcp.pop %v1372
  %v1379 = vmul.f32 1.0, %v1378
  %v1380 = vrcp.pop %v1373
  %v1381 = vmul.f32 1.0, %v1380
  %v1382 = vtanh.pop %v1354
  %v1383 = vtanh.pop %v1355
  %v1384 = vtanh.pop %v1356
  %v1385 = vtanh.pop %v1357
  %v1386 = vmul.f32 %v1375, 0.0
  %v1387 = vmul.f32 %v1377, 0.0
  %v1388 = vmul.f32 %v1379, 0.0
  %v1389 = vmul.f32 %v1381, 0.0
  %1394 = vrot.lane.b32.xlu0 %v1382, 64
  %v1395 = vpop.permute.xlu0 %1394
  %1396 = vrot.lane.b32.xlu0 %v1383, 64
  %v1397 = vpop.permute.xlu0 %1396
  %1398 = vrot.lane.b32.xlu0 %v1384, 64
  %v1399 = vpop.permute.xlu0 %1398
  %1400 = vrot.lane.b32.xlu0 %v1385, 64
  %v1401 = vpop.permute.xlu0 %1400
  %v1406 = vmul.f32 %v1375, %v1395
  %v1407 = vmul.f32 %v1377, %v1397
  %v1408 = vmul.f32 %v1379, %v1399
  %v1409 = vmul.f32 %v1381, %v1401
  %1414 = vrot.lane.b32.xlu0 %v1406, 32
  %v1415 = vpop.permute.xlu0 %1414
  %1416 = vrot.lane.b32.xlu0 %v1407, 32
  %v1417 = vpop.permute.xlu0 %1416
  %1418 = vrot.lane.b32.xlu0 %v1408, 32
  %v1419 = vpop.permute.xlu0 %1418
  %1420 = vrot.lane.b32.xlu0 %v1409, 32
  %v1421 = vpop.permute.xlu0 %1420
  %v1426 = vadd.f32 %v1386, %v1415
  %v1427 = vadd.f32 %v1387, %v1417
  %v1428 = vadd.f32 %v1388, %v1419
  %v1429 = vadd.f32 %v1389, %v1421
  %v1430 = vtanh.pop %v1426
  %v1431 = vtanh.pop %v1427
  %v1432 = vtanh.pop %v1428
  %v1433 = vtanh.pop %v1429
  %1438 = vrot.lane.b32.xlu0 %v1430, 64
  %v1439 = vpop.permute.xlu0 %1438
  %1440 = vrot.lane.b32.xlu0 %v1431, 64
  %v1441 = vpop.permute.xlu0 %1440
  %1442 = vrot.lane.b32.xlu0 %v1432, 64
  %v1443 = vpop.permute.xlu0 %1442
  %1444 = vrot.lane.b32.xlu0 %v1433, 64
  %v1445 = vpop.permute.xlu0 %1444
  %v1450 = vmul.f32 %v1375, %v1439
  %v1451 = vmul.f32 %v1377, %v1441
  %v1452 = vmul.f32 %v1379, %v1443
  %v1453 = vmul.f32 %v1381, %v1445
  %v1454 = vpack.c.bf16 %v1451, %v1450
  %v1455 = vpack.c.bf16 %v1453, %v1452
  %v1456 = vld [vmem:[#allocation2 + $0x20] sm:$0xff]
  %v1457 = vld [vmem:[#allocation2 + $0x28] sm:$0xff]
  %v1458 = vld [vmem:[#allocation2 + $0x30] sm:$0xff]
  %v1459 = vld [vmem:[#allocation2 + $0x38] sm:$0xff]
  %1460 = vmatprep.subr.bf16.mxu0 0
  %1461 = vmatpush1.bf16.msra.mxu0 %v1058
  %1462 = vmatprep.subr.bf16.mxu0 0
  %1463 = vmatpush1.bf16.msra.mxu0 %v1059
  %1464 = vmatprep.subr.bf16.mxu0 0
  %1465 = vmatpush1.bf16.msra.mxu0 0
  %1466 = vmatprep.subr.bf16.mxu0 0
  %1467 = vmatpush1.bf16.msra.mxu0 0
  %1468 = vmatprep.subr.bf16.mxu0 0
  %1469 = vmatpush1.bf16.msra.mxu0 0
  %1470 = vmatprep.subr.bf16.mxu0 0
  %1471 = vmatpush1.bf16.msra.mxu0 0
  %1472 = vmatprep.subr.bf16.mxu0 0
  %1473 = vmatpush1.bf16.msra.mxu0 0
  %1474 = vmatprep.subr.bf16.mxu0 0
  %1475 = vmatpush1.bf16.msra.mxu0 0
  %1476 = vmatprep.subr.bf16.mxu0 0
  %1477 = vmatpush1.bf16.msra.mxu0 0
  %1478 = vmatprep.subr.bf16.mxu0 0
  %1479 = vmatpush1.bf16.msra.mxu0 0
  %1480 = vmatprep.subr.bf16.mxu0 0
  %1481 = vmatpush1.bf16.msra.mxu0 0
  %1482 = vmatprep.subr.bf16.mxu0 0
  %1483 = vmatpush1.bf16.msra.mxu0 0
  %1484 = vmatprep.subr.bf16.mxu0 0
  %1485 = vmatpush1.bf16.msra.mxu0 0
  %1486 = vmatprep.subr.bf16.mxu0 0
  %1487 = vmatpush1.bf16.msra.mxu0 0
  %1488 = vmatprep.subr.bf16.mxu0 0
  %1489 = vmatpush1.bf16.msra.mxu0 0
  %1490 = vmatprep.subr.bf16.mxu0 0
  %1491 = vmatpush1.bf16.msra.mxu0 0
  %1492 = vmatprep.mubr.bf16.mxu0 0
  %1493 = vmatmul.mubr.bf16.gmra.mrb[0].mxu0 %v1235
  %v1494 = vpop.f32.mrb[0].mxu0
  %v1495 = vadd.f32 0.0, %v1494
  %v1496 = vpop.f32.mrb[0].mxu0
  %v1497 = vpop.f32.mrb[0].mxu0
  %v1498 = vadd.f32 0.0, %v1497
  %v1499 = vpop.f32.mrb[0].mxu0
  %1500 = vmatprep.mubr.bf16.mxu0 0
  %1501 = vmatmul.mubr.bf16.gmra.mrb[0].mxu0 %v1238
  %v1502 = vpop.f32.mrb[0].mxu0
  %v1503 = vadd.f32 0.0, %v1502
  %v1504 = vpop.f32.mrb[0].mxu0
  %v1505 = vpop.f32.mrb[0].mxu0
  %v1506 = vadd.f32 0.0, %v1505
  %v1507 = vpop.f32.mrb[0].mxu0
  %1508 = vdwg.mxu0
  %v1509 = vadd.f32 %v1456, %v1495
  %v1510 = vadd.f32 %v1457, %v1498
  %v1511 = vadd.f32 %v1458, %v1503
  %v1512 = vadd.f32 %v1459, %v1506
  %v1513 = vxor.u32 %v1509, 2147483648
  %v1514 = vxor.u32 %v1510, 2147483648
  %v1515 = vxor.u32 %v1511, 2147483648
  %v1516 = vxor.u32 %v1512, 2147483648
  %v1517 = vmul.f32 %v1513, 1.442695
  %v1518 = vpow.pop %v1517
  %v1519 = vmul.f32 %v1514, 1.442695
  %v1520 = vpow.pop %v1519
  %v1521 = vmul.f32 %v1515, 1.442695
  %v1522 = vpow.pop %v1521
  %v1523 = vmul.f32 %v1516, 1.442695
  %v1524 = vpow.pop %v1523
  %v1525 = vadd.f32 %v1518, 1.0
  %v1526 = vadd.f32 %v1520, 1.0
  %v1527 = vadd.f32 %v1522, 1.0
  %v1528 = vadd.f32 %v1524, 1.0
  %v1529 = vrcp.pop %v1525
  %v1530 = vmul.f32 1.0, %v1529
  %v1531 = vrcp.pop %v1526
  %v1532 = vmul.f32 1.0, %v1531
  %v1533 = vrcp.pop %v1527
  %v1534 = vmul.f32 1.0, %v1533
  %v1535 = vrcp.pop %v1528
  %v1536 = vmul.f32 1.0, %v1535
  %v1537 = vtanh.pop %v1509
  %v1538 = vtanh.pop %v1510
  %v1539 = vtanh.pop %v1511
  %v1540 = vtanh.pop %v1512
  %v1541 = vmul.f32 %v1530, %v1186
  %v1542 = vmul.f32 %v1532, %v1187
  %v1543 = vmul.f32 %v1534, %v1188
  %v1544 = vmul.f32 %v1536, %v1189
  %1549 = vrot.lane.b32.xlu0 %v1537, 64
  %v1550 = vpop.permute.xlu0 %1549
  %1551 = vrot.lane.b32.xlu0 %v1538, 64
  %v1552 = vpop.permute.xlu0 %1551
  %1553 = vrot.lane.b32.xlu0 %v1539, 64
  %v1554 = vpop.permute.xlu0 %1553
  %1555 = vrot.lane.b32.xlu0 %v1540, 64
  %v1556 = vpop.permute.xlu0 %1555
  %v1561 = vmul.f32 %v1530, %v1550
  %v1562 = vmul.f32 %v1532, %v1552
  %v1563 = vmul.f32 %v1534, %v1554
  %v1564 = vmul.f32 %v1536, %v1556
  %1569 = vrot.lane.b32.xlu0 %v1561, 32
  %v1570 = vpop.permute.xlu0 %1569
  %1571 = vrot.lane.b32.xlu0 %v1562, 32
  %v1572 = vpop.permute.xlu0 %1571
  %1573 = vrot.lane.b32.xlu0 %v1563, 32
  %v1574 = vpop.permute.xlu0 %1573
  %1575 = vrot.lane.b32.xlu0 %v1564, 32
  %v1576 = vpop.permute.xlu0 %1575
  %v1581 = vadd.f32 %v1541, %v1570
  %v1582 = vadd.f32 %v1542, %v1572
  %v1583 = vadd.f32 %v1543, %v1574
  %v1584 = vadd.f32 %v1544, %v1576
  %v1585 = vtanh.pop %v1581
  %v1586 = vtanh.pop %v1582
  %v1587 = vtanh.pop %v1583
  %v1588 = vtanh.pop %v1584
  %1593 = vrot.lane.b32.xlu0 %v1585, 64
  %v1594 = vpop.permute.xlu0 %1593
  %1595 = vrot.lane.b32.xlu0 %v1586, 64
  %v1596 = vpop.permute.xlu0 %1595
  %1597 = vrot.lane.b32.xlu0 %v1587, 64
  %v1598 = vpop.permute.xlu0 %1597
  %1599 = vrot.lane.b32.xlu0 %v1588, 64
  %v1600 = vpop.permute.xlu0 %1599
  %v1605 = vmul.f32 %v1530, %v1594
  %v1606 = vmul.f32 %v1532, %v1596
  %v1607 = vmul.f32 %v1534, %v1598
  %v1608 = vmul.f32 %v1536, %v1600
  %v1609 = vpack.c.bf16 %v1606, %v1605
  %v1610 = vpack.c.bf16 %v1608, %v1607
  %1613 = vrot.lane.b32.xlu0 %v1609, 32
  %v1614 = vpop.permute.xlu0 %1613
  %1615 = vrot.lane.b32.xlu0 %v1610, 32
  %v1616 = vpop.permute.xlu0 %1615
  %v1618 = vsel %vm804, %v1614, 0
  %v1621 = vsel %vm804, %v1616, 0
  %1623 = vmatprep.subr.bf16.mxu0 0
  %1624 = vmatpush1.bf16.msra.mxu0 %v1230
  %1625 = vmatprep.subr.bf16.mxu0 0
  %1626 = vmatpush1.bf16.msra.mxu0 %v1231
  %1627 = vmatprep.subr.bf16.mxu0 0
  %1628 = vmatpush1.bf16.msra.mxu0 0
  %1629 = vmatprep.subr.bf16.mxu0 0
  %1630 = vmatpush1.bf16.msra.mxu0 0
  %1631 = vmatprep.subr.bf16.mxu0 0
  %1632 = vmatpush1.bf16.msra.mxu0 0
  %1633 = vmatprep.subr.bf16.mxu0 0
  %1634 = vmatpush1.bf16.msra.mxu0 0
  %1635 = vmatprep.subr.bf16.mxu0 0
  %1636 = vmatpush1.bf16.msra.mxu0 0
  %1637 = vmatprep.subr.bf16.mxu0 0
  %1638 = vmatpush1.bf16.msra.mxu0 0
  %1639 = vmatprep.subr.bf16.mxu0 0
  %1640 = vmatpush1.bf16.msra.mxu0 0
  %1641 = vmatprep.subr.bf16.mxu0 0
  %1642 = vmatpush1.bf16.msra.mxu0 0
  %1643 = vmatprep.subr.bf16.mxu0 0
  %1644 = vmatpush1.bf16.msra.mxu0 0
  %1645 = vmatprep.subr.bf16.mxu0 0
  %1646 = vmatpush1.bf16.msra.mxu0 0
  %1647 = vmatprep.subr.bf16.mxu0 0
  %1648 = vmatpush1.bf16.msra.mxu0 0
  %1649 = vmatprep.subr.bf16.mxu0 0
  %1650 = vmatpush1.bf16.msra.mxu0 0
  %1651 = vmatprep.subr.bf16.mxu0 0
  %1652 = vmatpush1.bf16.msra.mxu0 0
  %1653 = vmatprep.subr.bf16.mxu0 0
  %1654 = vmatpush1.bf16.msra.mxu0 0
  %1655 = vmatprep.mubr.bf16.mxu0 0
  %1656 = vmatmul.mubr.bf16.gmra.mrb[0].mxu0 %v1618
  %v1657 = vpop.f32.mrb[0].mxu0
  %v1658 = vadd.f32 0.0, %v1657
  %v1659 = vpop.f32.mrb[0].mxu0
  %v1660 = vpop.f32.mrb[0].mxu0
  %v1661 = vadd.f32 0.0, %v1660
  %v1662 = vpop.f32.mrb[0].mxu0
  %1663 = vmatprep.mubr.bf16.mxu0 0
  %1664 = vmatmul.mubr.bf16.gmra.mrb[0].mxu0 %v1621
  %v1665 = vpop.f32.mrb[0].mxu0
  %v1666 = vadd.f32 0.0, %v1665
  %v1667 = vpop.f32.mrb[0].mxu0
  %v1668 = vpop.f32.mrb[0].mxu0
  %v1669 = vadd.f32 0.0, %v1668
  %v1670 = vpop.f32.mrb[0].mxu0
  %1671 = vdwg.mxu0
  %1674 = vrot.lane.b32.xlu0 %v1454, 32
  %v1675 = vpop.permute.xlu0 %1674
  %1676 = vrot.lane.b32.xlu0 %v1455, 32
  %v1677 = vpop.permute.xlu0 %1676
  %v1679 = vsel %vm804, %v1675, 0
  %v1682 = vsel %vm804, %v1677, 0
  %1684 = vmatprep.subr.bf16.mxu0 0
  %1685 = vmatpush1.bf16.msra.mxu0 %v1297
  %1686 = vmatprep.subr.bf16.mxu0 0
  %1687 = vmatpush1.bf16.msra.mxu0 %v1298
  %1688 = vmatprep.subr.bf16.mxu0 0
  %1689 = vmatpush1.bf16.msra.mxu0 0
  %1690 = vmatprep.subr.bf16.mxu0 0
  %1691 = vmatpush1.bf16.msra.mxu0 0
  %1692 = vmatprep.subr.bf16.mxu0 0
  %1693 = vmatpush1.bf16.msra.mxu0 0
  %1694 = vmatprep.subr.bf16.mxu0 0
  %1695 = vmatpush1.bf16.msra.mxu0 0
  %1696 = vmatprep.subr.bf16.mxu0 0
  %1697 = vmatpush1.bf16.msra.mxu0 0
  %1698 = vmatprep.subr.bf16.mxu0 0
  %1699 = vmatpush1.bf16.msra.mxu0 0
  %1700 = vmatprep.subr.bf16.mxu0 0
  %1701 = vmatpush1.bf16.msra.mxu0 0
  %1702 = vmatprep.subr.bf16.mxu0 0
  %1703 = vmatpush1.bf16.msra.mxu0 0
  %1704 = vmatprep.subr.bf16.mxu0 0
  %1705 = vmatpush1.bf16.msra.mxu0 0
  %1706 = vmatprep.subr.bf16.mxu0 0
  %1707 = vmatpush1.bf16.msra.mxu0 0
  %1708 = vmatprep.subr.bf16.mxu0 0
  %1709 = vmatpush1.bf16.msra.mxu0 0
  %1710 = vmatprep.subr.bf16.mxu0 0
  %1711 = vmatpush1.bf16.msra.mxu0 0
  %1712 = vmatprep.subr.bf16.mxu0 0
  %1713 = vmatpush1.bf16.msra.mxu0 0
  %1714 = vmatprep.subr.bf16.mxu0 0
  %1715 = vmatpush1.bf16.msra.mxu0 0
  %1716 = vmatprep.mubr.bf16.mxu0 0
  %1717 = vmatmul.mubr.bf16.gmra.mrb[0].mxu0 %v1679
  %v1718 = vpop.f32.mrb[0].mxu0
  %v1719 = vadd.f32 %v1658, %v1718
  %v1720 = vpop.f32.mrb[0].mxu0
  %v1721 = vpop.f32.mrb[0].mxu0
  %v1722 = vadd.f32 %v1661, %v1721
  %v1723 = vpop.f32.mrb[0].mxu0
  %1724 = vmatprep.mubr.bf16.mxu0 0
  %1725 = vmatmul.mubr.bf16.gmra.mrb[0].mxu0 %v1682
  %v1726 = vpop.f32.mrb[0].mxu0
  %v1727 = vadd.f32 %v1666, %v1726
  %v1728 = vpop.f32.mrb[0].mxu0
  %v1729 = vpop.f32.mrb[0].mxu0
  %v1730 = vadd.f32 %v1669, %v1729
  %v1731 = vpop.f32.mrb[0].mxu0
  %1732 = vdwg.mxu0
  %v1733 = vadd.f32 %v1719, %v1353
  %v1734 = vadd.f32 %v1722, %v1353
  %v1735 = vadd.f32 %v1727, %v1353
  %v1736 = vadd.f32 %v1730, %v1353
  %v1737 = vxor.u32 %v1733, 2147483648
  %v1738 = vxor.u32 %v1734, 2147483648
  %v1739 = vxor.u32 %v1735, 2147483648
  %v1740 = vxor.u32 %v1736, 2147483648
  %v1741 = vmul.f32 %v1737, 1.442695
  %v1742 = vpow.pop %v1741
  %v1743 = vmul.f32 %v1738, 1.442695
  %v1744 = vpow.pop %v1743
  %v1745 = vmul.f32 %v1739, 1.442695
  %v1746 = vpow.pop %v1745
  %v1747 = vmul.f32 %v1740, 1.442695
  %v1748 = vpow.pop %v1747
  %v1749 = vadd.f32 %v1742, 1.0
  %v1750 = vadd.f32 %v1744, 1.0
  %v1751 = vadd.f32 %v1746, 1.0
  %v1752 = vadd.f32 %v1748, 1.0
  %v1753 = vrcp.pop %v1749
  %v1754 = vmul.f32 1.0, %v1753
  %v1755 = vrcp.pop %v1750
  %v1756 = vmul.f32 1.0, %v1755
  %v1757 = vrcp.pop %v1751
  %v1758 = vmul.f32 1.0, %v1757
  %v1759 = vrcp.pop %v1752
  %v1760 = vmul.f32 1.0, %v1759
  %v1761 = vtanh.pop %v1733
  %v1762 = vtanh.pop %v1734
  %v1763 = vtanh.pop %v1735
  %v1764 = vtanh.pop %v1736
  %v1765 = vmul.f32 %v1754, %v1426
  %v1766 = vmul.f32 %v1756, %v1427
  %v1767 = vmul.f32 %v1758, %v1428
  %v1768 = vmul.f32 %v1760, %v1429
  %1773 = vrot.lane.b32.xlu0 %v1761, 64
  %v1774 = vpop.permute.xlu0 %1773
  %1775 = vrot.lane.b32.xlu0 %v1762, 64
  %v1776 = vpop.permute.xlu0 %1775
  %1777 = vrot.lane.b32.xlu0 %v1763, 64
  %v1778 = vpop.permute.xlu0 %1777
  %1779 = vrot.lane.b32.xlu0 %v1764, 64
  %v1780 = vpop.permute.xlu0 %1779
  %v1785 = vmul.f32 %v1754, %v1774
  %v1786 = vmul.f32 %v1756, %v1776
  %v1787 = vmul.f32 %v1758, %v1778
  %v1788 = vmul.f32 %v1760, %v1780
  %1793 = vrot.lane.b32.xlu0 %v1785, 32
  %v1794 = vpop.permute.xlu0 %1793
  %1795 = vrot.lane.b32.xlu0 %v1786, 32
  %v1796 = vpop.permute.xlu0 %1795
  %1797 = vrot.lane.b32.xlu0 %v1787, 32
  %v1798 = vpop.permute.xlu0 %1797
  %1799 = vrot.lane.b32.xlu0 %v1788, 32
  %v1800 = vpop.permute.xlu0 %1799
  %v1805 = vadd.f32 %v1765, %v1794
  %v1806 = vadd.f32 %v1766, %v1796
  %v1807 = vadd.f32 %v1767, %v1798
  %v1808 = vadd.f32 %v1768, %v1800
  %v1809 = vtanh.pop %v1805
  %v1810 = vtanh.pop %v1806
  %v1811 = vtanh.pop %v1807
  %v1812 = vtanh.pop %v1808
  %1817 = vrot.lane.b32.xlu0 %v1809, 64
  %v1818 = vpop.permute.xlu0 %1817
  %1819 = vrot.lane.b32.xlu0 %v1810, 64
  %v1820 = vpop.permute.xlu0 %1819
  %1821 = vrot.lane.b32.xlu0 %v1811, 64
  %v1822 = vpop.permute.xlu0 %1821
  %1823 = vrot.lane.b32.xlu0 %v1812, 64
  %v1824 = vpop.permute.xlu0 %1823
  %v1829 = vmul.f32 %v1754, %v1818
  %v1830 = vmul.f32 %v1756, %v1820
  %v1831 = vmul.f32 %v1758, %v1822
  %v1832 = vmul.f32 %v1760, %v1824
  %v1833 = vpack.c.bf16 %v1830, %v1829
  %v1834 = vpack.c.bf16 %v1832, %v1831
  %v1835 = vld [vmem:[#allocation2 + $0x40] sm:$0xff]
  %v1836 = vld [vmem:[#allocation2 + $0x48] sm:$0xff]
  %v1837 = vld [vmem:[#allocation2 + $0x50] sm:$0xff]
  %v1838 = vld [vmem:[#allocation2 + $0x58] sm:$0xff]
  %1839 = vmatprep.subr.bf16.mxu0 0
  %1840 = vmatpush1.bf16.msra.mxu0 %v1058
  %1841 = vmatprep.subr.bf16.mxu0 0
  %1842 = vmatpush1.bf16.msra.mxu0 %v1059
  %1843 = vmatprep.subr.bf16.mxu0 0
  %1844 = vmatpush1.bf16.msra.mxu0 0
  %1845 = vmatprep.subr.bf16.mxu0 0
  %1846 = vmatpush1.bf16.msra.mxu0 0
  %1847 = vmatprep.subr.bf16.mxu0 0
  %1848 = vmatpush1.bf16.msra.mxu0 0
  %1849 = vmatprep.subr.bf16.mxu0 0
  %1850 = vmatpush1.bf16.msra.mxu0 0
  %1851 = vmatprep.subr.bf16.mxu0 0
  %1852 = vmatpush1.bf16.msra.mxu0 0
  %1853 = vmatprep.subr.bf16.mxu0 0
  %1854 = vmatpush1.bf16.msra.mxu0 0
  %1855 = vmatprep.subr.bf16.mxu0 0
  %1856 = vmatpush1.bf16.msra.mxu0 0
  %1857 = vmatprep.subr.bf16.mxu0 0
  %1858 = vmatpush1.bf16.msra.mxu0 0
  %1859 = vmatprep.subr.bf16.mxu0 0
  %1860 = vmatpush1.bf16.msra.mxu0 0
  %1861 = vmatprep.subr.bf16.mxu0 0
  %1862 = vmatpush1.bf16.msra.mxu0 0
  %1863 = vmatprep.subr.bf16.mxu0 0
  %1864 = vmatpush1.bf16.msra.mxu0 0
  %1865 = vmatprep.subr.bf16.mxu0 0
  %1866 = vmatpush1.bf16.msra.mxu0 0
  %1867 = vmatprep.subr.bf16.mxu0 0
  %1868 = vmatpush1.bf16.msra.mxu0 0
  %1869 = vmatprep.subr.bf16.mxu0 0
  %1870 = vmatpush1.bf16.msra.mxu0 0
  %1871 = vmatprep.mubr.bf16.mxu0 0
  %1872 = vmatmul.mubr.bf16.gmra.mrb[0].mxu0 %v1618
  %v1873 = vpop.f32.mrb[0].mxu0
  %v1874 = vadd.f32 0.0, %v1873
  %v1875 = vpop.f32.mrb[0].mxu0
  %v1876 = vpop.f32.mrb[0].mxu0
  %v1877 = vadd.f32 0.0, %v1876
  %v1878 = vpop.f32.mrb[0].mxu0
  %1879 = vmatprep.mubr.bf16.mxu0 0
  %1880 = vmatmul.mubr.bf16.gmra.mrb[0].mxu0 %v1621
  %v1881 = vpop.f32.mrb[0].mxu0
  %v1882 = vadd.f32 0.0, %v1881
  %v1883 = vpop.f32.mrb[0].mxu0
  %v1884 = vpop.f32.mrb[0].mxu0
  %v1885 = vadd.f32 0.0, %v1884
  %v1886 = vpop.f32.mrb[0].mxu0
  %1887 = vdwg.mxu0
  %v1888 = vadd.f32 %v1835, %v1874
  %v1889 = vadd.f32 %v1836, %v1877
  %v1890 = vadd.f32 %v1837, %v1882
  %v1891 = vadd.f32 %v1838, %v1885
  %v1892 = vxor.u32 %v1888, 2147483648
  %v1893 = vxor.u32 %v1889, 2147483648
  %v1894 = vxor.u32 %v1890, 2147483648
  %v1895 = vxor.u32 %v1891, 2147483648
  %v1896 = vmul.f32 %v1892, 1.442695
  %v1897 = vpow.pop %v1896
  %v1898 = vmul.f32 %v1893, 1.442695
  %v1899 = vpow.pop %v1898
  %v1900 = vmul.f32 %v1894, 1.442695
  %v1901 = vpow.pop %v1900
  %v1902 = vmul.f32 %v1895, 1.442695
  %v1903 = vpow.pop %v1902
  %v1904 = vadd.f32 %v1897, 1.0
  %v1905 = vadd.f32 %v1899, 1.0
  %v1906 = vadd.f32 %v1901, 1.0
  %v1907 = vadd.f32 %v1903, 1.0
  %v1908 = vrcp.pop %v1904
  %v1909 = vmul.f32 1.0, %v1908
  %v1910 = vrcp.pop %v1905
  %v1911 = vmul.f32 1.0, %v1910
  %v1912 = vrcp.pop %v1906
  %v1913 = vmul.f32 1.0, %v1912
  %v1914 = vrcp.pop %v1907
  %v1915 = vmul.f32 1.0, %v1914
  %v1916 = vtanh.pop %v1888
  %v1917 = vtanh.pop %v1889
  %v1918 = vtanh.pop %v1890
  %v1919 = vtanh.pop %v1891
  %v1920 = vmul.f32 %v1909, %v1581
  %v1921 = vmul.f32 %v1911, %v1582
  %v1922 = vmul.f32 %v1913, %v1583
  %v1923 = vmul.f32 %v1915, %v1584
  %1928 = vrot.lane.b32.xlu0 %v1916, 64
  %v1929 = vpop.permute.xlu0 %1928
  %1930 = vrot.lane.b32.xlu0 %v1917, 64
  %v1931 = vpop.permute.xlu0 %1930
  %1932 = vrot.lane.b32.xlu0 %v1918, 64
  %v1933 = vpop.permute.xlu0 %1932
  %1934 = vrot.lane.b32.xlu0 %v1919, 64
  %v1935 = vpop.permute.xlu0 %1934
  %v1940 = vmul.f32 %v1909, %v1929
  %v1941 = vmul.f32 %v1911, %v1931
  %v1942 = vmul.f32 %v1913, %v1933
  %v1943 = vmul.f32 %v1915, %v1935
  %1948 = vrot.lane.b32.xlu0 %v1940, 32
  %v1949 = vpop.permute.xlu0 %1948
  %1950 = vrot.lane.b32.xlu0 %v1941, 32
  %v1951 = vpop.permute.xlu0 %1950
  %1952 = vrot.lane.b32.xlu0 %v1942, 32
  %v1953 = vpop.permute.xlu0 %1952
  %1954 = vrot.lane.b32.xlu0 %v1943, 32
  %v1955 = vpop.permute.xlu0 %1954
  %v1960 = vadd.f32 %v1920, %v1949
  %v1961 = vadd.f32 %v1921, %v1951
  %v1962 = vadd.f32 %v1922, %v1953
  %v1963 = vadd.f32 %v1923, %v1955
  %v1964 = vtanh.pop %v1960
  %v1965 = vtanh.pop %v1961
  %v1966 = vtanh.pop %v1962
  %v1967 = vtanh.pop %v1963
  %1972 = vrot.lane.b32.xlu0 %v1964, 64
  %v1973 = vpop.permute.xlu0 %1972
  %1974 = vrot.lane.b32.xlu0 %v1965, 64
  %v1975 = vpop.permute.xlu0 %1974
  %1976 = vrot.lane.b32.xlu0 %v1966, 64
  %v1977 = vpop.permute.xlu0 %1976
  %1978 = vrot.lane.b32.xlu0 %v1967, 64
  %v1979 = vpop.permute.xlu0 %1978
  %v1984 = vmul.f32 %v1909, %v1973
  %v1985 = vmul.f32 %v1911, %v1975
  %v1986 = vmul.f32 %v1913, %v1977
  %v1987 = vmul.f32 %v1915, %v1979
  %v1988 = vpack.c.bf16 %v1985, %v1984
  %v1989 = vpack.c.bf16 %v1987, %v1986
  %1992 = vrot.lane.b32.xlu0 %v1988, 32
  %v1993 = vpop.permute.xlu0 %1992
  %1994 = vrot.lane.b32.xlu0 %v1989, 32
  %v1995 = vpop.permute.xlu0 %1994
  %v1997 = vsel %vm804, %v1993, 0
  %v2000 = vsel %vm804, %v1995, 0
  %2002 = vmatprep.subr.bf16.mxu0 0
  %2003 = vmatpush1.bf16.msra.mxu0 %v1230
  %2004 = vmatprep.subr.bf16.mxu0 0
  %2005 = vmatpush1.bf16.msra.mxu0 %v1231
  %2006 = vmatprep.subr.bf16.mxu0 0
  %2007 = vmatpush1.bf16.msra.mxu0 0
  %2008 = vmatprep.subr.bf16.mxu0 0
  %2009 = vmatpush1.bf16.msra.mxu0 0
  %2010 = vmatprep.subr.bf16.mxu0 0
  %2011 = vmatpush1.bf16.msra.mxu0 0
  %2012 = vmatprep.subr.bf16.mxu0 0
  %2013 = vmatpush1.bf16.msra.mxu0 0
  %2014 = vmatprep.subr.bf16.mxu0 0
  %2015 = vmatpush1.bf16.msra.mxu0 0
  %2016 = vmatprep.subr.bf16.mxu0 0
  %2017 = vmatpush1.bf16.msra.mxu0 0
  %2018 = vmatprep.subr.bf16.mxu0 0
  %2019 = vmatpush1.bf16.msra.mxu0 0
  %2020 = vmatprep.subr.bf16.mxu0 0
  %2021 = vmatpush1.bf16.msra.mxu0 0
  %2022 = vmatprep.subr.bf16.mxu0 0
  %2023 = vmatpush1.bf16.msra.mxu0 0
  %2024 = vmatprep.subr.bf16.mxu0 0
  %2025 = vmatpush1.bf16.msra.mxu0 0
  %2026 = vmatprep.subr.bf16.mxu0 0
  %2027 = vmatpush1.bf16.msra.mxu0 0
  %2028 = vmatprep.subr.bf16.mxu0 0
  %2029 = vmatpush1.bf16.msra.mxu0 0
  %2030 = vmatprep.subr.bf16.mxu0 0
  %2031 = vmatpush1.bf16.msra.mxu0 0
  %2032 = vmatprep.subr.bf16.mxu0 0
  %2033 = vmatpush1.bf16.msra.mxu0 0
  %2034 = vmatprep.mubr.bf16.mxu0 0
  %2035 = vmatmul.mubr.bf16.gmra.mrb[0].mxu0 %v1997
  %v2036 = vpop.f32.mrb[0].mxu0
  %v2037 = vadd.f32 0.0, %v2036
  %v2038 = vpop.f32.mrb[0].mxu0
  %v2039 = vpop.f32.mrb[0].mxu0
  %v2040 = vadd.f32 0.0, %v2039
  %v2041 = vpop.f32.mrb[0].mxu0
  %2042 = vmatprep.mubr.bf16.mxu0 0
  %2043 = vmatmul.mubr.bf16.gmra.mrb[0].mxu0 %v2000
  %v2044 = vpop.f32.mrb[0].mxu0
  %v2045 = vadd.f32 0.0, %v2044
  %v2046 = vpop.f32.mrb[0].mxu0
  %v2047 = vpop.f32.mrb[0].mxu0
  %v2048 = vadd.f32 0.0, %v2047
  %v2049 = vpop.f32.mrb[0].mxu0
  %2050 = vdwg.mxu0
  %2053 = vrot.lane.b32.xlu0 %v1833, 32
  %v2054 = vpop.permute.xlu0 %2053
  %2055 = vrot.lane.b32.xlu0 %v1834, 32
  %v2056 = vpop.permute.xlu0 %2055
  %v2058 = vsel %vm804, %v2054, 0
  %v2061 = vsel %vm804, %v2056, 0
  %2063 = vmatprep.subr.bf16.mxu0 0
  %2064 = vmatpush1.bf16.msra.mxu0 %v1297
  %2065 = vmatprep.subr.bf16.mxu0 0
  %2066 = vmatpush1.bf16.msra.mxu0 %v1298
  %2067 = vmatprep.subr.bf16.mxu0 0
  %2068 = vmatpush1.bf16.msra.mxu0 0
  %2069 = vmatprep.subr.bf16.mxu0 0
  %2070 = vmatpush1.bf16.msra.mxu0 0
  %2071 = vmatprep.subr.bf16.mxu0 0
  %2072 = vmatpush1.bf16.msra.mxu0 0
  %2073 = vmatprep.subr.bf16.mxu0 0
  %2074 = vmatpush1.bf16.msra.mxu0 0
  %2075 = vmatprep.subr.bf16.mxu0 0
  %2076 = vmatpush1.bf16.msra.mxu0 0
  %2077 = vmatprep.subr.bf16.mxu0 0
  %2078 = vmatpush1.bf16.msra.mxu0 0
  %2079 = vmatprep.subr.bf16.mxu0 0
  %2080 = vmatpush1.bf16.msra.mxu0 0
  %2081 = vmatprep.subr.bf16.mxu0 0
  %2082 = vmatpush1.bf16.msra.mxu0 0
  %2083 = vmatprep.subr.bf16.mxu0 0
  %2084 = vmatpush1.bf16.msra.mxu0 0
  %2085 = vmatprep.subr.bf16.mxu0 0
  %2086 = vmatpush1.bf16.msra.mxu0 0
  %2087 = vmatprep.subr.bf16.mxu0 0
  %2088 = vmatpush1.bf16.msra.mxu0 0
  %2089 = vmatprep.subr.bf16.mxu0 0
  %2090 = vmatpush1.bf16.msra.mxu0 0
  %2091 = vmatprep.subr.bf16.mxu0 0
  %2092 = vmatpush1.bf16.msra.mxu0 0
  %2093 = vmatprep.subr.bf16.mxu0 0
  %2094 = vmatpush1.bf16.msra.mxu0 0
  %2095 = vmatprep.mubr.bf16.mxu0 0
  %2096 = vmatmul.mubr.bf16.gmra.mrb[0].mxu0 %v2058
  %v2097 = vpop.f32.mrb[0].mxu0
  %v2098 = vadd.f32 %v2037, %v2097
  %v2099 = vpop.f32.mrb[0].mxu0
  %v2100 = vpop.f32.mrb[0].mxu0
  %v2101 = vadd.f32 %v2040, %v2100
  %v2102 = vpop.f32.mrb[0].mxu0
  %2103 = vmatprep.mubr.bf16.mxu0 0
  %2104 = vmatmul.mubr.bf16.gmra.mrb[0].mxu0 %v2061
  %v2105 = vpop.f32.mrb[0].mxu0
  %v2106 = vadd.f32 %v2045, %v2105
  %v2107 = vpop.f32.mrb[0].mxu0
  %v2108 = vpop.f32.mrb[0].mxu0
  %v2109 = vadd.f32 %v2048, %v2108
  %v2110 = vpop.f32.mrb[0].mxu0
  %2111 = vdwg.mxu0
  %v2112 = vadd.f32 %v2098, %v1353
  %v2113 = vadd.f32 %v2101, %v1353
  %v2114 = vadd.f32 %v2106, %v1353
  %v2115 = vadd.f32 %v2109, %v1353
  %v2116 = vxor.u32 %v2112, 2147483648
  %v2117 = vxor.u32 %v2113, 2147483648
  %v2118 = vxor.u32 %v2114, 2147483648
  %v2119 = vxor.u32 %v2115, 2147483648
  %v2120 = vmul.f32 %v2116, 1.442695
  %v2121 = vpow.pop %v2120
  %v2122 = vmul.f32 %v2117, 1.442695
  %v2123 = vpow.pop %v2122
  %v2124 = vmul.f32 %v2118, 1.442695
  %v2125 = vpow.pop %v2124
  %v2126 = vmul.f32 %v2119, 1.442695
  %v2127 = vpow.pop %v2126
  %v2128 = vadd.f32 %v2121, 1.0
  %v2129 = vadd.f32 %v2123, 1.0
  %v2130 = vadd.f32 %v2125, 1.0
  %v2131 = vadd.f32 %v2127, 1.0
  %v2132 = vrcp.pop %v2128
  %v2133 = vmul.f32 1.0, %v2132
  %v2134 = vrcp.pop %v2129
  %v2135 = vmul.f32 1.0, %v2134
  %v2136 = vrcp.pop %v2130
  %v2137 = vmul.f32 1.0, %v2136
  %v2138 = vrcp.pop %v2131
  %v2139 = vmul.f32 1.0, %v2138
  %v2140 = vtanh.pop %v2112
  %v2141 = vtanh.pop %v2113
  %v2142 = vtanh.pop %v2114
  %v2143 = vtanh.pop %v2115
  %v2144 = vmul.f32 %v2133, %v1805
  %v2145 = vmul.f32 %v2135, %v1806
  %v2146 = vmul.f32 %v2137, %v1807
  %v2147 = vmul.f32 %v2139, %v1808
  %2152 = vrot.lane.b32.xlu0 %v2140, 64
  %v2153 = vpop.permute.xlu0 %2152
  %2154 = vrot.lane.b32.xlu0 %v2141, 64
  %v2155 = vpop.permute.xlu0 %2154
  %2156 = vrot.lane.b32.xlu0 %v2142, 64
  %v2157 = vpop.permute.xlu0 %2156
  %2158 = vrot.lane.b32.xlu0 %v2143, 64
  %v2159 = vpop.permute.xlu0 %2158
  %v2164 = vmul.f32 %v2133, %v2153
  %v2165 = vmul.f32 %v2135, %v2155
  %v2166 = vmul.f32 %v2137, %v2157
  %v2167 = vmul.f32 %v2139, %v2159
  %2172 = vrot.lane.b32.xlu0 %v2164, 32
  %v2173 = vpop.permute.xlu0 %2172
  %2174 = vrot.lane.b32.xlu0 %v2165, 32
  %v2175 = vpop.permute.xlu0 %2174
  %2176 = vrot.lane.b32.xlu0 %v2166, 32
  %v2177 = vpop.permute.xlu0 %2176
  %2178 = vrot.lane.b32.xlu0 %v2167, 32
  %v2179 = vpop.permute.xlu0 %2178
  %v2184 = vadd.f32 %v2144, %v2173
  %v2185 = vadd.f32 %v2145, %v2175
  %v2186 = vadd.f32 %v2146, %v2177
  %v2187 = vadd.f32 %v2147, %v2179
  %v2188 = vtanh.pop %v2184
  %v2189 = vtanh.pop %v2185
  %v2190 = vtanh.pop %v2186
  %v2191 = vtanh.pop %v2187
  %2196 = vrot.lane.b32.xlu0 %v2188, 64
  %v2197 = vpop.permute.xlu0 %2196
  %2198 = vrot.lane.b32.xlu0 %v2189, 64
  %v2199 = vpop.permute.xlu0 %2198
  %2200 = vrot.lane.b32.xlu0 %v2190, 64
  %v2201 = vpop.permute.xlu0 %2200
  %2202 = vrot.lane.b32.xlu0 %v2191, 64
  %v2203 = vpop.permute.xlu0 %2202
  %v2208 = vmul.f32 %v2133, %v2197
  %v2209 = vmul.f32 %v2135, %v2199
  %v2210 = vmul.f32 %v2137, %v2201
  %v2211 = vmul.f32 %v2139, %v2203
  %v2212 = vpack.c.bf16 %v2209, %v2208
  %v2213 = vpack.c.bf16 %v2211, %v2210
  %v2214 = vld [vmem:[#allocation2 + $0x60] sm:$0xff]
  %v2215 = vld [vmem:[#allocation2 + $0x68] sm:$0xff]
  %v2216 = vld [vmem:[#allocation2 + $0x70] sm:$0xff]
  %v2217 = vld [vmem:[#allocation2 + $0x78] sm:$0xff]
  %2218 = vmatprep.subr.bf16.mxu0 0
  %2219 = vmatpush1.bf16.msra.mxu0 %v1058
  %2220 = vmatprep.subr.bf16.mxu0 0
  %2221 = vmatpush1.bf16.msra.mxu0 %v1059
  %2222 = vmatprep.subr.bf16.mxu0 0
  %2223 = vmatpush1.bf16.msra.mxu0 0
  %2224 = vmatprep.subr.bf16.mxu0 0
  %2225 = vmatpush1.bf16.msra.mxu0 0
  %2226 = vmatprep.subr.bf16.mxu0 0
  %2227 = vmatpush1.bf16.msra.mxu0 0
  %2228 = vmatprep.subr.bf16.mxu0 0
  %2229 = vmatpush1.bf16.msra.mxu0 0
  %2230 = vmatprep.subr.bf16.mxu0 0
  %2231 = vmatpush1.bf16.msra.mxu0 0
  %2232 = vmatprep.subr.bf16.mxu0 0
  %2233 = vmatpush1.bf16.msra.mxu0 0
  %2234 = vmatprep.subr.bf16.mxu0 0
  %2235 = vmatpush1.bf16.msra.mxu0 0
  %2236 = vmatprep.subr.bf16.mxu0 0
  %2237 = vmatpush1.bf16.msra.mxu0 0
  %2238 = vmatprep.subr.bf16.mxu0 0
  %2239 = vmatpush1.bf16.msra.mxu0 0
  %2240 = vmatprep.subr.bf16.mxu0 0
  %2241 = vmatpush1.bf16.msra.mxu0 0
  %2242 = vmatprep.subr.bf16.mxu0 0
  %2243 = vmatpush1.bf16.msra.mxu0 0
  %2244 = vmatprep.subr.bf16.mxu0 0
  %2245 = vmatpush1.bf16.msra.mxu0 0
  %2246 = vmatprep.subr.bf16.mxu0 0
  %2247 = vmatpush1.bf16.msra.mxu0 0
  %2248 = vmatprep.subr.bf16.mxu0 0
  %2249 = vmatpush1.bf16.msra.mxu0 0
  %2250 = vmatprep.mubr.bf16.mxu0 0
  %2251 = vmatmul.mubr.bf16.gmra.mrb[0].mxu0 %v1997
  %v2252 = vpop.f32.mrb[0].mxu0
  %v2253 = vadd.f32 0.0, %v2252
  %v2254 = vpop.f32.mrb[0].mxu0
  %v2255 = vpop.f32.mrb[0].mxu0
  %v2256 = vadd.f32 0.0, %v2255
  %v2257 = vpop.f32.mrb[0].mxu0
  %2258 = vmatprep.mubr.bf16.mxu0 0
  %2259 = vmatmul.mubr.bf16.gmra.mrb[0].mxu0 %v2000
  %v2260 = vpop.f32.mrb[0].mxu0
  %v2261 = vadd.f32 0.0, %v2260
  %v2262 = vpop.f32.mrb[0].mxu0
  %v2263 = vpop.f32.mrb[0].mxu0
  %v2264 = vadd.f32 0.0, %v2263
  %v2265 = vpop.f32.mrb[0].mxu0
  %2266 = vdwg.mxu0
  %v2267 = vadd.f32 %v2214, %v2253
  %v2268 = vadd.f32 %v2215, %v2256
  %v2269 = vadd.f32 %v2216, %v2261
  %v2270 = vadd.f32 %v2217, %v2264
  %v2271 = vxor.u32 %v2267, 2147483648
  %v2272 = vxor.u32 %v2268, 2147483648
  %v2273 = vxor.u32 %v2269, 2147483648
  %v2274 = vxor.u32 %v2270, 2147483648
  %v2275 = vmul.f32 %v2271, 1.442695
  %v2276 = vpow.pop %v2275
  %v2277 = vmul.f32 %v2272, 1.442695
  %v2278 = vpow.pop %v2277
  %v2279 = vmul.f32 %v2273, 1.442695
  %v2280 = vpow.pop %v2279
  %v2281 = vmul.f32 %v2274, 1.442695
  %v2282 = vpow.pop %v2281
  %v2283 = vadd.f32 %v2276, 1.0
  %v2284 = vadd.f32 %v2278, 1.0
  %v2285 = vadd.f32 %v2280, 1.0
  %v2286 = vadd.f32 %v2282, 1.0
  %v2287 = vrcp.pop %v2283
  %v2288 = vmul.f32 1.0, %v2287
  %v2289 = vrcp.pop %v2284
  %v2290 = vmul.f32 1.0, %v2289
  %v2291 = vrcp.pop %v2285
  %v2292 = vmul.f32 1.0, %v2291
  %v2293 = vrcp.pop %v2286
  %v2294 = vmul.f32 1.0, %v2293
  %v2295 = vtanh.pop %v2267
  %v2296 = vtanh.pop %v2268
  %v2297 = vtanh.pop %v2269
  %v2298 = vtanh.pop %v2270
  %v2299 = vmul.f32 %v2288, %v1960
  %v2300 = vmul.f32 %v2290, %v1961
  %v2301 = vmul.f32 %v2292, %v1962
  %v2302 = vmul.f32 %v2294, %v1963
  %2307 = vrot.lane.b32.xlu0 %v2295, 64
  %v2308 = vpop.permute.xlu0 %2307
  %2309 = vrot.lane.b32.xlu0 %v2296, 64
  %v2310 = vpop.permute.xlu0 %2309
  %2311 = vrot.lane.b32.xlu0 %v2297, 64
  %v2312 = vpop.permute.xlu0 %2311
  %2313 = vrot.lane.b32.xlu0 %v2298, 64
  %v2314 = vpop.permute.xlu0 %2313
  %v2319 = vmul.f32 %v2288, %v2308
  %v2320 = vmul.f32 %v2290, %v2310
  %v2321 = vmul.f32 %v2292, %v2312
  %v2322 = vmul.f32 %v2294, %v2314
  %2327 = vrot.lane.b32.xlu0 %v2319, 32
  %v2328 = vpop.permute.xlu0 %2327
  %2329 = vrot.lane.b32.xlu0 %v2320, 32
  %v2330 = vpop.permute.xlu0 %2329
  %2331 = vrot.lane.b32.xlu0 %v2321, 32
  %v2332 = vpop.permute.xlu0 %2331
  %2333 = vrot.lane.b32.xlu0 %v2322, 32
  %v2334 = vpop.permute.xlu0 %2333
  %v2339 = vadd.f32 %v2299, %v2328
  %v2340 = vadd.f32 %v2300, %v2330
  %v2341 = vadd.f32 %v2301, %v2332
  %v2342 = vadd.f32 %v2302, %v2334
  %v2343 = vtanh.pop %v2339
  %v2344 = vtanh.pop %v2340
  %v2345 = vtanh.pop %v2341
  %v2346 = vtanh.pop %v2342
  %2351 = vrot.lane.b32.xlu0 %v2343, 64
  %v2352 = vpop.permute.xlu0 %2351
  %2353 = vrot.lane.b32.xlu0 %v2344, 64
  %v2354 = vpop.permute.xlu0 %2353
  %2355 = vrot.lane.b32.xlu0 %v2345, 64
  %v2356 = vpop.permute.xlu0 %2355
  %2357 = vrot.lane.b32.xlu0 %v2346, 64
  %v2358 = vpop.permute.xlu0 %2357
  %v2363 = vmul.f32 %v2288, %v2352
  %v2364 = vmul.f32 %v2290, %v2354
  %v2365 = vmul.f32 %v2292, %v2356
  %v2366 = vmul.f32 %v2294, %v2358
  %v2367 = vpack.c.bf16 %v2364, %v2363
  %v2368 = vpack.c.bf16 %v2366, %v2365
  %2371 = vrot.lane.b32.xlu0 %v2367, 32
  %v2372 = vpop.permute.xlu0 %2371
  %2373 = vrot.lane.b32.xlu0 %v2368, 32
  %v2374 = vpop.permute.xlu0 %2373
  %v2376 = vsel %vm804, %v2372, 0
  %v2379 = vsel %vm804, %v2374, 0
  %2381 = vmatprep.subr.bf16.mxu0 0
  %2382 = vmatpush1.bf16.msra.mxu0 %v1230
  %2383 = vmatprep.subr.bf16.mxu0 0
  %2384 = vmatpush1.bf16.msra.mxu0 %v1231
  %2385 = vmatprep.subr.bf16.mxu0 0
  %2386 = vmatpush1.bf16.msra.mxu0 0
  %2387 = vmatprep.subr.bf16.mxu0 0
  %2388 = vmatpush1.bf16.msra.mxu0 0
  %2389 = vmatprep.subr.bf16.mxu0 0
  %2390 = vmatpush1.bf16.msra.mxu0 0
  %2391 = vmatprep.subr.bf16.mxu0 0
  %2392 = vmatpush1.bf16.msra.mxu0 0
  %2393 = vmatprep.subr.bf16.mxu0 0
  %2394 = vmatpush1.bf16.msra.mxu0 0
  %2395 = vmatprep.subr.bf16.mxu0 0
  %2396 = vmatpush1.bf16.msra.mxu0 0
  %2397 = vmatprep.subr.bf16.mxu0 0
  %2398 = vmatpush1.bf16.msra.mxu0 0
  %2399 = vmatprep.subr.bf16.mxu0 0
  %2400 = vmatpush1.bf16.msra.mxu0 0
  %2401 = vmatprep.subr.bf16.mxu0 0
  %2402 = vmatpush1.bf16.msra.mxu0 0
  %2403 = vmatprep.subr.bf16.mxu0 0
  %2404 = vmatpush1.bf16.msra.mxu0 0
  %2405 = vmatprep.subr.bf16.mxu0 0
  %2406 = vmatpush1.bf16.msra.mxu0 0
  %2407 = vmatprep.subr.bf16.mxu0 0
  %2408 = vmatpush1.bf16.msra.mxu0 0
  %2409 = vmatprep.subr.bf16.mxu0 0
  %2410 = vmatpush1.bf16.msra.mxu0 0
  %2411 = vmatprep.subr.bf16.mxu0 0
  %2412 = vmatpush1.bf16.msra.mxu0 0
  %2413 = vmatprep.mubr.bf16.mxu0 0
  %2414 = vmatmul.mubr.bf16.gmra.mrb[0].mxu0 %v2376
  %v2415 = vpop.f32.mrb[0].mxu0
  %v2416 = vadd.f32 0.0, %v2415
  %v2417 = vpop.f32.mrb[0].mxu0
  %v2418 = vpop.f32.mrb[0].mxu0
  %v2419 = vadd.f32 0.0, %v2418
  %v2420 = vpop.f32.mrb[0].mxu0
  %2421 = vmatprep.mubr.bf16.mxu0 0
  %2422 = vmatmul.mubr.bf16.gmra.mrb[0].mxu0 %v2379
  %v2423 = vpop.f32.mrb[0].mxu0
  %v2424 = vadd.f32 0.0, %v2423
  %v2425 = vpop.f32.mrb[0].mxu0
  %v2426 = vpop.f32.mrb[0].mxu0
  %v2427 = vadd.f32 0.0, %v2426
  %v2428 = vpop.f32.mrb[0].mxu0
  %2429 = vdwg.mxu0
  %2432 = vrot.lane.b32.xlu0 %v2212, 32
  %v2433 = vpop.permute.xlu0 %2432
  %2434 = vrot.lane.b32.xlu0 %v2213, 32
  %v2435 = vpop.permute.xlu0 %2434
  %v2437 = vsel %vm804, %v2433, 0
  %v2440 = vsel %vm804, %v2435, 0
  %2442 = vmatprep.subr.bf16.mxu0 0
  %2443 = vmatpush1.bf16.msra.mxu0 %v1297
  %2444 = vmatprep.subr.bf16.mxu0 0
  %2445 = vmatpush1.bf16.msra.mxu0 %v1298
  %2446 = vmatprep.subr.bf16.mxu0 0
  %2447 = vmatpush1.bf16.msra.mxu0 0
  %2448 = vmatprep.subr.bf16.mxu0 0
  %2449 = vmatpush1.bf16.msra.mxu0 0
  %2450 = vmatprep.subr.bf16.mxu0 0
  %2451 = vmatpush1.bf16.msra.mxu0 0
  %2452 = vmatprep.subr.bf16.mxu0 0
  %2453 = vmatpush1.bf16.msra.mxu0 0
  %2454 = vmatprep.subr.bf16.mxu0 0
  %2455 = vmatpush1.bf16.msra.mxu0 0
  %2456 = vmatprep.subr.bf16.mxu0 0
  %2457 = vmatpush1.bf16.msra.mxu0 0
  %2458 = vmatprep.subr.bf16.mxu0 0
  %2459 = vmatpush1.bf16.msra.mxu0 0
  %2460 = vmatprep.subr.bf16.mxu0 0
  %2461 = vmatpush1.bf16.msra.mxu0 0
  %2462 = vmatprep.subr.bf16.mxu0 0
  %2463 = vmatpush1.bf16.msra.mxu0 0
  %2464 = vmatprep.subr.bf16.mxu0 0
  %2465 = vmatpush1.bf16.msra.mxu0 0
  %2466 = vmatprep.subr.bf16.mxu0 0
  %2467 = vmatpush1.bf16.msra.mxu0 0
  %2468 = vmatprep.subr.bf16.mxu0 0
  %2469 = vmatpush1.bf16.msra.mxu0 0
  %2470 = vmatprep.subr.bf16.mxu0 0
  %2471 = vmatpush1.bf16.msra.mxu0 0
  %2472 = vmatprep.subr.bf16.mxu0 0
  %2473 = vmatpush1.bf16.msra.mxu0 0
  %2474 = vmatprep.mubr.bf16.mxu0 0
  %2475 = vmatmul.mubr.bf16.gmra.mrb[0].mxu0 %v2437
  %v2476 = vpop.f32.mrb[0].mxu0
  %v2477 = vadd.f32 %v2416, %v2476
  %v2478 = vpop.f32.mrb[0].mxu0
  %v2479 = vpop.f32.mrb[0].mxu0
  %v2480 = vadd.f32 %v2419, %v2479
  %v2481 = vpop.f32.mrb[0].mxu0
  %2482 = vmatprep.mubr.bf16.mxu0 0
  %2483 = vmatmul.mubr.bf16.gmra.mrb[0].mxu0 %v2440
  %v2484 = vpop.f32.mrb[0].mxu0
  %v2485 = vadd.f32 %v2424, %v2484
  %v2486 = vpop.f32.mrb[0].mxu0
  %v2487 = vpop.f32.mrb[0].mxu0
  %v2488 = vadd.f32 %v2427, %v2487
  %v2489 = vpop.f32.mrb[0].mxu0
  %2490 = vdwg.mxu0
  %v2491 = vadd.f32 %v2477, %v1353
  %v2492 = vadd.f32 %v2480, %v1353
  %v2493 = vadd.f32 %v2485, %v1353
  %v2494 = vadd.f32 %v2488, %v1353
  %v2495 = vxor.u32 %v2491, 2147483648
  %v2496 = vxor.u32 %v2492, 2147483648
  %v2497 = vxor.u32 %v2493, 2147483648
  %v2498 = vxor.u32 %v2494, 2147483648
  %v2499 = vmul.f32 %v2495, 1.442695
  %v2500 = vpow.pop %v2499
  %v2501 = vmul.f32 %v2496, 1.442695
  %v2502 = vpow.pop %v2501
  %v2503 = vmul.f32 %v2497, 1.442695
  %v2504 = vpow.pop %v2503
  %v2505 = vmul.f32 %v2498, 1.442695
  %v2506 = vpow.pop %v2505
  %v2507 = vadd.f32 %v2500, 1.0
  %v2508 = vadd.f32 %v2502, 1.0
  %v2509 = vadd.f32 %v2504, 1.0
  %v2510 = vadd.f32 %v2506, 1.0
  %v2511 = vrcp.pop %v2507
  %v2512 = vmul.f32 1.0, %v2511
  %v2513 = vrcp.pop %v2508
  %v2514 = vmul.f32 1.0, %v2513
  %v2515 = vrcp.pop %v2509
  %v2516 = vmul.f32 1.0, %v2515
  %v2517 = vrcp.pop %v2510
  %v2518 = vmul.f32 1.0, %v2517
  %v2519 = vtanh.pop %v2491
  %v2520 = vtanh.pop %v2492
  %v2521 = vtanh.pop %v2493
  %v2522 = vtanh.pop %v2494
  %v2523 = vmul.f32 %v2512, %v2184
  %v2524 = vmul.f32 %v2514, %v2185
  %v2525 = vmul.f32 %v2516, %v2186
  %v2526 = vmul.f32 %v2518, %v2187
  %2531 = vrot.lane.b32.xlu0 %v2519, 64
  %v2532 = vpop.permute.xlu0 %2531
  %2533 = vrot.lane.b32.xlu0 %v2520, 64
  %v2534 = vpop.permute.xlu0 %2533
  %2535 = vrot.lane.b32.xlu0 %v2521, 64
  %v2536 = vpop.permute.xlu0 %2535
  %2537 = vrot.lane.b32.xlu0 %v2522, 64
  %v2538 = vpop.permute.xlu0 %2537
  %v2543 = vmul.f32 %v2512, %v2532
  %v2544 = vmul.f32 %v2514, %v2534
  %v2545 = vmul.f32 %v2516, %v2536
  %v2546 = vmul.f32 %v2518, %v2538
  %2551 = vrot.lane.b32.xlu0 %v2543, 32
  %v2552 = vpop.permute.xlu0 %2551
  %2553 = vrot.lane.b32.xlu0 %v2544, 32
  %v2554 = vpop.permute.xlu0 %2553
  %2555 = vrot.lane.b32.xlu0 %v2545, 32
  %v2556 = vpop.permute.xlu0 %2555
  %2557 = vrot.lane.b32.xlu0 %v2546, 32
  %v2558 = vpop.permute.xlu0 %2557
  %v2563 = vadd.f32 %v2523, %v2552
  %v2564 = vadd.f32 %v2524, %v2554
  %v2565 = vadd.f32 %v2525, %v2556
  %v2566 = vadd.f32 %v2526, %v2558
  %v2567 = vtanh.pop %v2563
  %v2568 = vtanh.pop %v2564
  %v2569 = vtanh.pop %v2565
  %v2570 = vtanh.pop %v2566
  %2575 = vrot.lane.b32.xlu0 %v2567, 64
  %v2576 = vpop.permute.xlu0 %2575
  %2577 = vrot.lane.b32.xlu0 %v2568, 64
  %v2578 = vpop.permute.xlu0 %2577
  %2579 = vrot.lane.b32.xlu0 %v2569, 64
  %v2580 = vpop.permute.xlu0 %2579
  %2581 = vrot.lane.b32.xlu0 %v2570, 64
  %v2582 = vpop.permute.xlu0 %2581
  %v2587 = vmul.f32 %v2512, %v2576
  %v2588 = vmul.f32 %v2514, %v2578
  %v2589 = vmul.f32 %v2516, %v2580
  %v2590 = vmul.f32 %v2518, %v2582
  %v2591 = vpack.c.bf16 %v2588, %v2587
  %v2592 = vpack.c.bf16 %v2590, %v2589
  %v2593 = vld [vmem:[#allocation2 + $0x80] sm:$0xff]
  %v2594 = vld [vmem:[#allocation2 + $0x88] sm:$0xff]
  %v2595 = vld [vmem:[#allocation2 + $0x90] sm:$0xff]
  %v2596 = vld [vmem:[#allocation2 + $0x98] sm:$0xff]
  %2597 = vmatprep.subr.bf16.mxu0 0
  %2598 = vmatpush1.bf16.msra.mxu0 %v1058
  %2599 = vmatprep.subr.bf16.mxu0 0
  %2600 = vmatpush1.bf16.msra.mxu0 %v1059
  %2601 = vmatprep.subr.bf16.mxu0 0
  %2602 = vmatpush1.bf16.msra.mxu0 0
  %2603 = vmatprep.subr.bf16.mxu0 0
  %2604 = vmatpush1.bf16.msra.mxu0 0
  %2605 = vmatprep.subr.bf16.mxu0 0
  %2606 = vmatpush1.bf16.msra.mxu0 0
  %2607 = vmatprep.subr.bf16.mxu0 0
  %2608 = vmatpush1.bf16.msra.mxu0 0
  %2609 = vmatprep.subr.bf16.mxu0 0
  %2610 = vmatpush1.bf16.msra.mxu0 0
  %2611 = vmatprep.subr.bf16.mxu0 0
  %2612 = vmatpush1.bf16.msra.mxu0 0
  %2613 = vmatprep.subr.bf16.mxu0 0
  %2614 = vmatpush1.bf16.msra.mxu0 0
  %2615 = vmatprep.subr.bf16.mxu0 0
  %2616 = vmatpush1.bf16.msra.mxu0 0
  %2617 = vmatprep.subr.bf16.mxu0 0
  %2618 = vmatpush1.bf16.msra.mxu0 0
  %2619 = vmatprep.subr.bf16.mxu0 0
  %2620 = vmatpush1.bf16.msra.mxu0 0
  %2621 = vmatprep.subr.bf16.mxu0 0
  %2622 = vmatpush1.bf16.msra.mxu0 0
  %2623 = vmatprep.subr.bf16.mxu0 0
  %2624 = vmatpush1.bf16.msra.mxu0 0
  %2625 = vmatprep.subr.bf16.mxu0 0
  %2626 = vmatpush1.bf16.msra.mxu0 0
  %2627 = vmatprep.subr.bf16.mxu0 0
  %2628 = vmatpush1.bf16.msra.mxu0 0
  %2629 = vmatprep.mubr.bf16.mxu0 0
  %2630 = vmatmul.mubr.bf16.gmra.mrb[0].mxu0 %v2376
  %v2631 = vpop.f32.mrb[0].mxu0
  %v2632 = vadd.f32 0.0, %v2631
  %v2633 = vpop.f32.mrb[0].mxu0
  %v2634 = vpop.f32.mrb[0].mxu0
  %v2635 = vadd.f32 0.0, %v2634
  %v2636 = vpop.f32.mrb[0].mxu0
  %2637 = vmatprep.mubr.bf16.mxu0 0
  %2638 = vmatmul.mubr.bf16.gmra.mrb[0].mxu0 %v2379
  %v2639 = vpop.f32.mrb[0].mxu0
  %v2640 = vadd.f32 0.0, %v2639
  %v2641 = vpop.f32.mrb[0].mxu0
  %v2642 = vpop.f32.mrb[0].mxu0
  %v2643 = vadd.f32 0.0, %v2642
  %v2644 = vpop.f32.mrb[0].mxu0
  %2645 = vdwg.mxu0
  %v2646 = vadd.f32 %v2593, %v2632
  %v2647 = vadd.f32 %v2594, %v2635
  %v2648 = vadd.f32 %v2595, %v2640
  %v2649 = vadd.f32 %v2596, %v2643
  %v2650 = vxor.u32 %v2646, 2147483648
  %v2651 = vxor.u32 %v2647, 2147483648
  %v2652 = vxor.u32 %v2648, 2147483648
  %v2653 = vxor.u32 %v2649, 2147483648
  %v2654 = vmul.f32 %v2650, 1.442695
  %v2655 = vpow.pop %v2654
  %v2656 = vmul.f32 %v2651, 1.442695
  %v2657 = vpow.pop %v2656
  %v2658 = vmul.f32 %v2652, 1.442695
  %v2659 = vpow.pop %v2658
  %v2660 = vmul.f32 %v2653, 1.442695
  %v2661 = vpow.pop %v2660
  %v2662 = vadd.f32 %v2655, 1.0
  %v2663 = vadd.f32 %v2657, 1.0
  %v2664 = vadd.f32 %v2659, 1.0
  %v2665 = vadd.f32 %v2661, 1.0
  %v2666 = vrcp.pop %v2662
  %v2667 = vmul.f32 1.0, %v2666
  %v2668 = vrcp.pop %v2663
  %v2669 = vmul.f32 1.0, %v2668
  %v2670 = vrcp.pop %v2664
  %v2671 = vmul.f32 1.0, %v2670
  %v2672 = vrcp.pop %v2665
  %v2673 = vmul.f32 1.0, %v2672
  %v2674 = vtanh.pop %v2646
  %v2675 = vtanh.pop %v2647
  %v2676 = vtanh.pop %v2648
  %v2677 = vtanh.pop %v2649
  %v2678 = vmul.f32 %v2667, %v2339
  %v2679 = vmul.f32 %v2669, %v2340
  %v2680 = vmul.f32 %v2671, %v2341
  %v2681 = vmul.f32 %v2673, %v2342
  %2686 = vrot.lane.b32.xlu0 %v2674, 64
  %v2687 = vpop.permute.xlu0 %2686
  %2688 = vrot.lane.b32.xlu0 %v2675, 64
  %v2689 = vpop.permute.xlu0 %2688
  %2690 = vrot.lane.b32.xlu0 %v2676, 64
  %v2691 = vpop.permute.xlu0 %2690
  %2692 = vrot.lane.b32.xlu0 %v2677, 64
  %v2693 = vpop.permute.xlu0 %2692
  %v2698 = vmul.f32 %v2667, %v2687
  %v2699 = vmul.f32 %v2669, %v2689
  %v2700 = vmul.f32 %v2671, %v2691
  %v2701 = vmul.f32 %v2673, %v2693
  %2706 = vrot.lane.b32.xlu0 %v2698, 32
  %v2707 = vpop.permute.xlu0 %2706
  %2708 = vrot.lane.b32.xlu0 %v2699, 32
  %v2709 = vpop.permute.xlu0 %2708
  %2710 = vrot.lane.b32.xlu0 %v2700, 32
  %v2711 = vpop.permute.xlu0 %2710
  %2712 = vrot.lane.b32.xlu0 %v2701, 32
  %v2713 = vpop.permute.xlu0 %2712
  %v2718 = vadd.f32 %v2678, %v2707
  %v2719 = vadd.f32 %v2679, %v2709
  %v2720 = vadd.f32 %v2680, %v2711
  %v2721 = vadd.f32 %v2681, %v2713
  %v2722 = vtanh.pop %v2718
  %v2723 = vtanh.pop %v2719
  %v2724 = vtanh.pop %v2720
  %v2725 = vtanh.pop %v2721
  %2730 = vrot.lane.b32.xlu0 %v2722, 64
  %v2731 = vpop.permute.xlu0 %2730
  %2732 = vrot.lane.b32.xlu0 %v2723, 64
  %v2733 = vpop.permute.xlu0 %2732
  %2734 = vrot.lane.b32.xlu0 %v2724, 64
  %v2735 = vpop.permute.xlu0 %2734
  %2736 = vrot.lane.b32.xlu0 %v2725, 64
  %v2737 = vpop.permute.xlu0 %2736
  %v2742 = vmul.f32 %v2667, %v2731
  %v2743 = vmul.f32 %v2669, %v2733
  %v2744 = vmul.f32 %v2671, %v2735
  %v2745 = vmul.f32 %v2673, %v2737
  %v2746 = vpack.c.bf16 %v2743, %v2742
  %v2747 = vpack.c.bf16 %v2745, %v2744
  %2750 = vrot.lane.b32.xlu0 %v2746, 32
  %v2751 = vpop.permute.xlu0 %2750
  %2752 = vrot.lane.b32.xlu0 %v2747, 32
  %v2753 = vpop.permute.xlu0 %2752
  %v2755 = vsel %vm804, %v2751, 0
  %v2758 = vsel %vm804, %v2753, 0
  %2760 = vmatprep.subr.bf16.mxu0 0
  %2761 = vmatpush1.bf16.msra.mxu0 %v1230
  %2762 = vmatprep.subr.bf16.mxu0 0
  %2763 = vmatpush1.bf16.msra.mxu0 %v1231
  %2764 = vmatprep.subr.bf16.mxu0 0
  %2765 = vmatpush1.bf16.msra.mxu0 0
  %2766 = vmatprep.subr.bf16.mxu0 0
  %2767 = vmatpush1.bf16.msra.mxu0 0
  %2768 = vmatprep.subr.bf16.mxu0 0
  %2769 = vmatpush1.bf16.msra.mxu0 0
  %2770 = vmatprep.subr.bf16.mxu0 0
  %2771 = vmatpush1.bf16.msra.mxu0 0
  %2772 = vmatprep.subr.bf16.mxu0 0
  %2773 = vmatpush1.bf16.msra.mxu0 0
  %2774 = vmatprep.subr.bf16.mxu0 0
  %2775 = vmatpush1.bf16.msra.mxu0 0
  %2776 = vmatprep.subr.bf16.mxu0 0
  %2777 = vmatpush1.bf16.msra.mxu0 0
  %2778 = vmatprep.subr.bf16.mxu0 0
  %2779 = vmatpush1.bf16.msra.mxu0 0
  %2780 = vmatprep.subr.bf16.mxu0 0
  %2781 = vmatpush1.bf16.msra.mxu0 0
  %2782 = vmatprep.subr.bf16.mxu0 0
  %2783 = vmatpush1.bf16.msra.mxu0 0
  %2784 = vmatprep.subr.bf16.mxu0 0
  %2785 = vmatpush1.bf16.msra.mxu0 0
  %2786 = vmatprep.subr.bf16.mxu0 0
  %2787 = vmatpush1.bf16.msra.mxu0 0
  %2788 = vmatprep.subr.bf16.mxu0 0
  %2789 = vmatpush1.bf16.msra.mxu0 0
  %2790 = vmatprep.subr.bf16.mxu0 0
  %2791 = vmatpush1.bf16.msra.mxu0 0
  %2792 = vmatprep.mubr.bf16.mxu0 0
  %2793 = vmatmul.mubr.bf16.gmra.mrb[0].mxu0 %v2755
  %v2794 = vpop.f32.mrb[0].mxu0
  %v2795 = vadd.f32 0.0, %v2794
  %v2796 = vpop.f32.mrb[0].mxu0
  %v2797 = vpop.f32.mrb[0].mxu0
  %v2798 = vadd.f32 0.0, %v2797
  %v2799 = vpop.f32.mrb[0].mxu0
  %2800 = vmatprep.mubr.bf16.mxu0 0
  %2801 = vmatmul.mubr.bf16.gmra.mrb[0].mxu0 %v2758
  %v2802 = vpop.f32.mrb[0].mxu0
  %v2803 = vadd.f32 0.0, %v2802
  %v2804 = vpop.f32.mrb[0].mxu0
  %v2805 = vpop.f32.mrb[0].mxu0
  %v2806 = vadd.f32 0.0, %v2805
  %v2807 = vpop.f32.mrb[0].mxu0
  %2808 = vdwg.mxu0
  %2811 = vrot.lane.b32.xlu0 %v2591, 32
  %v2812 = vpop.permute.xlu0 %2811
  %2813 = vrot.lane.b32.xlu0 %v2592, 32
  %v2814 = vpop.permute.xlu0 %2813
  %v2816 = vsel %vm804, %v2812, 0
  %v2819 = vsel %vm804, %v2814, 0
  %2821 = vmatprep.subr.bf16.mxu0 0
  %2822 = vmatpush1.bf16.msra.mxu0 %v1297
  %2823 = vmatprep.subr.bf16.mxu0 0
  %2824 = vmatpush1.bf16.msra.mxu0 %v1298
  %2825 = vmatprep.subr.bf16.mxu0 0
  %2826 = vmatpush1.bf16.msra.mxu0 0
  %2827 = vmatprep.subr.bf16.mxu0 0
  %2828 = vmatpush1.bf16.msra.mxu0 0
  %2829 = vmatprep.subr.bf16.mxu0 0
  %2830 = vmatpush1.bf16.msra.mxu0 0
  %2831 = vmatprep.subr.bf16.mxu0 0
  %2832 = vmatpush1.bf16.msra.mxu0 0
  %2833 = vmatprep.subr.bf16.mxu0 0
  %2834 = vmatpush1.bf16.msra.mxu0 0
  %2835 = vmatprep.subr.bf16.mxu0 0
  %2836 = vmatpush1.bf16.msra.mxu0 0
  %2837 = vmatprep.subr.bf16.mxu0 0
  %2838 = vmatpush1.bf16.msra.mxu0 0
  %2839 = vmatprep.subr.bf16.mxu0 0
  %2840 = vmatpush1.bf16.msra.mxu0 0
  %2841 = vmatprep.subr.bf16.mxu0 0
  %2842 = vmatpush1.bf16.msra.mxu0 0
  %2843 = vmatprep.subr.bf16.mxu0 0
  %2844 = vmatpush1.bf16.msra.mxu0 0
  %2845 = vmatprep.subr.bf16.mxu0 0
  %2846 = vmatpush1.bf16.msra.mxu0 0
  %2847 = vmatprep.subr.bf16.mxu0 0
  %2848 = vmatpush1.bf16.msra.mxu0 0
  %2849 = vmatprep.subr.bf16.mxu0 0
  %2850 = vmatpush1.bf16.msra.mxu0 0
  %2851 = vmatprep.subr.bf16.mxu0 0
  %2852 = vmatpush1.bf16.msra.mxu0 0
  %2853 = vmatprep.mubr.bf16.mxu0 0
  %2854 = vmatmul.mubr.bf16.gmra.mrb[0].mxu0 %v2816
  %v2855 = vpop.f32.mrb[0].mxu0
  %v2856 = vadd.f32 %v2795, %v2855
  %v2857 = vpop.f32.mrb[0].mxu0
  %v2858 = vpop.f32.mrb[0].mxu0
  %v2859 = vadd.f32 %v2798, %v2858
  %v2860 = vpop.f32.mrb[0].mxu0
  %2861 = vmatprep.mubr.bf16.mxu0 0
  %2862 = vmatmul.mubr.bf16.gmra.mrb[0].mxu0 %v2819
  %v2863 = vpop.f32.mrb[0].mxu0
  %v2864 = vadd.f32 %v2803, %v2863
  %v2865 = vpop.f32.mrb[0].mxu0
  %v2866 = vpop.f32.mrb[0].mxu0
  %v2867 = vadd.f32 %v2806, %v2866
  %v2868 = vpop.f32.mrb[0].mxu0
  %2869 = vdwg.mxu0
  %v2870 = vadd.f32 %v2856, %v1353
  %v2871 = vadd.f32 %v2859, %v1353
  %v2872 = vadd.f32 %v2864, %v1353
  %v2873 = vadd.f32 %v2867, %v1353
  %v2874 = vxor.u32 %v2870, 2147483648
  %v2875 = vxor.u32 %v2871, 2147483648
  %v2876 = vxor.u32 %v2872, 2147483648
  %v2877 = vxor.u32 %v2873, 2147483648
  %v2878 = vmul.f32 %v2874, 1.442695
  %v2879 = vpow.pop %v2878
  %v2880 = vmul.f32 %v2875, 1.442695
  %v2881 = vpow.pop %v2880
  %v2882 = vmul.f32 %v2876, 1.442695
  %v2883 = vpow.pop %v2882
  %v2884 = vmul.f32 %v2877, 1.442695
  %v2885 = vpow.pop %v2884
  %v2886 = vadd.f32 %v2879, 1.0
  %v2887 = vadd.f32 %v2881, 1.0
  %v2888 = vadd.f32 %v2883, 1.0
  %v2889 = vadd.f32 %v2885, 1.0
  %v2890 = vrcp.pop %v2886
  %v2891 = vmul.f32 1.0, %v2890
  %v2892 = vrcp.pop %v2887
  %v2893 = vmul.f32 1.0, %v2892
  %v2894 = vrcp.pop %v2888
  %v2895 = vmul.f32 1.0, %v2894
  %v2896 = vrcp.pop %v2889
  %v2897 = vmul.f32 1.0, %v2896
  %v2898 = vtanh.pop %v2870
  %v2899 = vtanh.pop %v2871
  %v2900 = vtanh.pop %v2872
  %v2901 = vtanh.pop %v2873
  %v2902 = vmul.f32 %v2891, %v2563
  %v2903 = vmul.f32 %v2893, %v2564
  %v2904 = vmul.f32 %v2895, %v2565
  %v2905 = vmul.f32 %v2897, %v2566
  %2910 = vrot.lane.b32.xlu0 %v2898, 64
  %v2911 = vpop.permute.xlu0 %2910
  %2912 = vrot.lane.b32.xlu0 %v2899, 64
  %v2913 = vpop.permute.xlu0 %2912
  %2914 = vrot.lane.b32.xlu0 %v2900, 64
  %v2915 = vpop.permute.xlu0 %2914
  %2916 = vrot.lane.b32.xlu0 %v2901, 64
  %v2917 = vpop.permute.xlu0 %2916
  %v2922 = vmul.f32 %v2891, %v2911
  %v2923 = vmul.f32 %v2893, %v2913
  %v2924 = vmul.f32 %v2895, %v2915
  %v2925 = vmul.f32 %v2897, %v2917
  %2930 = vrot.lane.b32.xlu0 %v2922, 32
  %v2931 = vpop.permute.xlu0 %2930
  %2932 = vrot.lane.b32.xlu0 %v2923, 32
  %v2933 = vpop.permute.xlu0 %2932
  %2934 = vrot.lane.b32.xlu0 %v2924, 32
  %v2935 = vpop.permute.xlu0 %2934
  %2936 = vrot.lane.b32.xlu0 %v2925, 32
  %v2937 = vpop.permute.xlu0 %2936
  %v2942 = vadd.f32 %v2902, %v2931
  %v2943 = vadd.f32 %v2903, %v2933
  %v2944 = vadd.f32 %v2904, %v2935
  %v2945 = vadd.f32 %v2905, %v2937
  %v2946 = vtanh.pop %v2942
  %v2947 = vtanh.pop %v2943
  %v2948 = vtanh.pop %v2944
  %v2949 = vtanh.pop %v2945
  %2954 = vrot.lane.b32.xlu0 %v2946, 64
  %v2955 = vpop.permute.xlu0 %2954
  %2956 = vrot.lane.b32.xlu0 %v2947, 64
  %v2957 = vpop.permute.xlu0 %2956
  %2958 = vrot.lane.b32.xlu0 %v2948, 64
  %v2959 = vpop.permute.xlu0 %2958
  %2960 = vrot.lane.b32.xlu0 %v2949, 64
  %v2961 = vpop.permute.xlu0 %2960
  %v2966 = vmul.f32 %v2891, %v2955
  %v2967 = vmul.f32 %v2893, %v2957
  %v2968 = vmul.f32 %v2895, %v2959
  %v2969 = vmul.f32 %v2897, %v2961
  %v2970 = vpack.c.bf16 %v2967, %v2966
  %v2971 = vpack.c.bf16 %v2969, %v2968
  %v2972 = vld [vmem:[#allocation2 + $0xa0] sm:$0xff]
  %v2973 = vld [vmem:[#allocation2 + $0xa8] sm:$0xff]
  %v2974 = vld [vmem:[#allocation2 + $0xb0] sm:$0xff]
  %v2975 = vld [vmem:[#allocation2 + $0xb8] sm:$0xff]
  %2976 = vmatprep.subr.bf16.mxu0 0
  %2977 = vmatpush1.bf16.msra.mxu0 %v1058
  %2978 = vmatprep.subr.bf16.mxu0 0
  %2979 = vmatpush1.bf16.msra.mxu0 %v1059
  %2980 = vmatprep.subr.bf16.mxu0 0
  %2981 = vmatpush1.bf16.msra.mxu0 0
  %2982 = vmatprep.subr.bf16.mxu0 0
  %2983 = vmatpush1.bf16.msra.mxu0 0
  %2984 = vmatprep.subr.bf16.mxu0 0
  %2985 = vmatpush1.bf16.msra.mxu0 0
  %2986 = vmatprep.subr.bf16.mxu0 0
  %2987 = vmatpush1.bf16.msra.mxu0 0
  %2988 = vmatprep.subr.bf16.mxu0 0
  %2989 = vmatpush1.bf16.msra.mxu0 0
  %2990 = vmatprep.subr.bf16.mxu0 0
  %2991 = vmatpush1.bf16.msra.mxu0 0
  %2992 = vmatprep.subr.bf16.mxu0 0
  %2993 = vmatpush1.bf16.msra.mxu0 0
  %2994 = vmatprep.subr.bf16.mxu0 0
  %2995 = vmatpush1.bf16.msra.mxu0 0
  %2996 = vmatprep.subr.bf16.mxu0 0
  %2997 = vmatpush1.bf16.msra.mxu0 0
  %2998 = vmatprep.subr.bf16.mxu0 0
  %2999 = vmatpush1.bf16.msra.mxu0 0
  %3000 = vmatprep.subr.bf16.mxu0 0
  %3001 = vmatpush1.bf16.msra.mxu0 0
  %3002 = vmatprep.subr.bf16.mxu0 0
  %3003 = vmatpush1.bf16.msra.mxu0 0
  %3004 = vmatprep.subr.bf16.mxu0 0
  %3005 = vmatpush1.bf16.msra.mxu0 0
  %3006 = vmatprep.subr.bf16.mxu0 0
  %3007 = vmatpush1.bf16.msra.mxu0 0
  %3008 = vmatprep.mubr.bf16.mxu0 0
  %3009 = vmatmul.mubr.bf16.gmra.mrb[0].mxu0 %v2755
  %v3010 = vpop.f32.mrb[0].mxu0
  %v3011 = vadd.f32 0.0, %v3010
  %v3012 = vpop.f32.mrb[0].mxu0
  %v3013 = vpop.f32.mrb[0].mxu0
  %v3014 = vadd.f32 0.0, %v3013
  %v3015 = vpop.f32.mrb[0].mxu0
  %3016 = vmatprep.mubr.bf16.mxu0 0
  %3017 = vmatmul.mubr.bf16.gmra.mrb[0].mxu0 %v2758
  %v3018 = vpop.f32.mrb[0].mxu0
  %v3019 = vadd.f32 0.0, %v3018
  %v3020 = vpop.f32.mrb[0].mxu0
  %v3021 = vpop.f32.mrb[0].mxu0
  %v3022 = vadd.f32 0.0, %v3021
  %v3023 = vpop.f32.mrb[0].mxu0
  %3024 = vdwg.mxu0
  %v3025 = vadd.f32 %v2972, %v3011
  %v3026 = vadd.f32 %v2973, %v3014
  %v3027 = vadd.f32 %v2974, %v3019
  %v3028 = vadd.f32 %v2975, %v3022
  %v3029 = vxor.u32 %v3025, 2147483648
  %v3030 = vxor.u32 %v3026, 2147483648
  %v3031 = vxor.u32 %v3027, 2147483648
  %v3032 = vxor.u32 %v3028, 2147483648
  %v3033 = vmul.f32 %v3029, 1.442695
  %v3034 = vpow.pop %v3033
  %v3035 = vmul.f32 %v3030, 1.442695
  %v3036 = vpow.pop %v3035
  %v3037 = vmul.f32 %v3031, 1.442695
  %v3038 = vpow.pop %v3037
  %v3039 = vmul.f32 %v3032, 1.442695
  %v3040 = vpow.pop %v3039
  %v3041 = vadd.f32 %v3034, 1.0
  %v3042 = vadd.f32 %v3036, 1.0
  %v3043 = vadd.f32 %v3038, 1.0
  %v3044 = vadd.f32 %v3040, 1.0
  %v3045 = vrcp.pop %v3041
  %v3046 = vmul.f32 1.0, %v3045
  %v3047 = vrcp.pop %v3042
  %v3048 = vmul.f32 1.0, %v3047
  %v3049 = vrcp.pop %v3043
  %v3050 = vmul.f32 1.0, %v3049
  %v3051 = vrcp.pop %v3044
  %v3052 = vmul.f32 1.0, %v3051
  %v3053 = vtanh.pop %v3025
  %v3054 = vtanh.pop %v3026
  %v3055 = vtanh.pop %v3027
  %v3056 = vtanh.pop %v3028
  %v3057 = vmul.f32 %v3046, %v2718
  %v3058 = vmul.f32 %v3048, %v2719
  %v3059 = vmul.f32 %v3050, %v2720
  %v3060 = vmul.f32 %v3052, %v2721
  %3065 = vrot.lane.b32.xlu0 %v3053, 64
  %v3066 = vpop.permute.xlu0 %3065
  %3067 = vrot.lane.b32.xlu0 %v3054, 64
  %v3068 = vpop.permute.xlu0 %3067
  %3069 = vrot.lane.b32.xlu0 %v3055, 64
  %v3070 = vpop.permute.xlu0 %3069
  %3071 = vrot.lane.b32.xlu0 %v3056, 64
  %v3072 = vpop.permute.xlu0 %3071
  %v3077 = vmul.f32 %v3046, %v3066
  %v3078 = vmul.f32 %v3048, %v3068
  %v3079 = vmul.f32 %v3050, %v3070
  %v3080 = vmul.f32 %v3052, %v3072
  %3085 = vrot.lane.b32.xlu0 %v3077, 32
  %v3086 = vpop.permute.xlu0 %3085
  %3087 = vrot.lane.b32.xlu0 %v3078, 32
  %v3088 = vpop.permute.xlu0 %3087
  %3089 = vrot.lane.b32.xlu0 %v3079, 32
  %v3090 = vpop.permute.xlu0 %3089
  %3091 = vrot.lane.b32.xlu0 %v3080, 32
  %v3092 = vpop.permute.xlu0 %3091
  %v3097 = vadd.f32 %v3057, %v3086
  %v3098 = vadd.f32 %v3058, %v3088
  %v3099 = vadd.f32 %v3059, %v3090
  %v3100 = vadd.f32 %v3060, %v3092
  %v3101 = vtanh.pop %v3097
  %v3102 = vtanh.pop %v3098
  %v3103 = vtanh.pop %v3099
  %v3104 = vtanh.pop %v3100
  %3109 = vrot.lane.b32.xlu0 %v3101, 64
  %v3110 = vpop.permute.xlu0 %3109
  %3111 = vrot.lane.b32.xlu0 %v3102, 64
  %v3112 = vpop.permute.xlu0 %3111
  %3113 = vrot.lane.b32.xlu0 %v3103, 64
  %v3114 = vpop.permute.xlu0 %3113
  %3115 = vrot.lane.b32.xlu0 %v3104, 64
  %v3116 = vpop.permute.xlu0 %3115
  %v3121 = vmul.f32 %v3046, %v3110
  %v3122 = vmul.f32 %v3048, %v3112
  %v3123 = vmul.f32 %v3050, %v3114
  %v3124 = vmul.f32 %v3052, %v3116
  %v3125 = vpack.c.bf16 %v3122, %v3121
  %v3126 = vpack.c.bf16 %v3124, %v3123
  %3129 = vrot.lane.b32.xlu0 %v3125, 32
  %v3130 = vpop.permute.xlu0 %3129
  %3131 = vrot.lane.b32.xlu0 %v3126, 32
  %v3132 = vpop.permute.xlu0 %3131
  %v3134 = vsel %vm804, %v3130, 0
  %v3137 = vsel %vm804, %v3132, 0
  %3139 = vmatprep.subr.bf16.mxu0 0
  %3140 = vmatpush1.bf16.msra.mxu0 %v1230
  %3141 = vmatprep.subr.bf16.mxu0 0
  %3142 = vmatpush1.bf16.msra.mxu0 %v1231
  %3143 = vmatprep.subr.bf16.mxu0 0
  %3144 = vmatpush1.bf16.msra.mxu0 0
  %3145 = vmatprep.subr.bf16.mxu0 0
  %3146 = vmatpush1.bf16.msra.mxu0 0
  %3147 = vmatprep.subr.bf16.mxu0 0
  %3148 = vmatpush1.bf16.msra.mxu0 0
  %3149 = vmatprep.subr.bf16.mxu0 0
  %3150 = vmatpush1.bf16.msra.mxu0 0
  %3151 = vmatprep.subr.bf16.mxu0 0
  %3152 = vmatpush1.bf16.msra.mxu0 0
  %3153 = vmatprep.subr.bf16.mxu0 0
  %3154 = vmatpush1.bf16.msra.mxu0 0
  %3155 = vmatprep.subr.bf16.mxu0 0
  %3156 = vmatpush1.bf16.msra.mxu0 0
  %3157 = vmatprep.subr.bf16.mxu0 0
  %3158 = vmatpush1.bf16.msra.mxu0 0
  %3159 = vmatprep.subr.bf16.mxu0 0
  %3160 = vmatpush1.bf16.msra.mxu0 0
  %3161 = vmatprep.subr.bf16.mxu0 0
  %3162 = vmatpush1.bf16.msra.mxu0 0
  %3163 = vmatprep.subr.bf16.mxu0 0
  %3164 = vmatpush1.bf16.msra.mxu0 0
  %3165 = vmatprep.subr.bf16.mxu0 0
  %3166 = vmatpush1.bf16.msra.mxu0 0
  %3167 = vmatprep.subr.bf16.mxu0 0
  %3168 = vmatpush1.bf16.msra.mxu0 0
  %3169 = vmatprep.subr.bf16.mxu0 0
  %3170 = vmatpush1.bf16.msra.mxu0 0
  %3171 = vmatprep.mubr.bf16.mxu0 0
  %3172 = vmatmul.mubr.bf16.gmra.mrb[0].mxu0 %v3134
  %v3173 = vpop.f32.mrb[0].mxu0
  %v3174 = vadd.f32 0.0, %v3173
  %v3175 = vpop.f32.mrb[0].mxu0
  %v3176 = vpop.f32.mrb[0].mxu0
  %v3177 = vadd.f32 0.0, %v3176
  %v3178 = vpop.f32.mrb[0].mxu0
  %3179 = vmatprep.mubr.bf16.mxu0 0
  %3180 = vmatmul.mubr.bf16.gmra.mrb[0].mxu0 %v3137
  %v3181 = vpop.f32.mrb[0].mxu0
  %v3182 = vadd.f32 0.0, %v3181
  %v3183 = vpop.f32.mrb[0].mxu0
  %v3184 = vpop.f32.mrb[0].mxu0
  %v3185 = vadd.f32 0.0, %v3184
  %v3186 = vpop.f32.mrb[0].mxu0
  %3187 = vdwg.mxu0
  %3190 = vrot.lane.b32.xlu0 %v2970, 32
  %v3191 = vpop.permute.xlu0 %3190
  %3192 = vrot.lane.b32.xlu0 %v2971, 32
  %v3193 = vpop.permute.xlu0 %3192
  %v3195 = vsel %vm804, %v3191, 0
  %v3198 = vsel %vm804, %v3193, 0
  %3200 = vmatprep.subr.bf16.mxu0 0
  %3201 = vmatpush1.bf16.msra.mxu0 %v1297
  %3202 = vmatprep.subr.bf16.mxu0 0
  %3203 = vmatpush1.bf16.msra.mxu0 %v1298
  %3204 = vmatprep.subr.bf16.mxu0 0
  %3205 = vmatpush1.bf16.msra.mxu0 0
  %3206 = vmatprep.subr.bf16.mxu0 0
  %3207 = vmatpush1.bf16.msra.mxu0 0
  %3208 = vmatprep.subr.bf16.mxu0 0
  %3209 = vmatpush1.bf16.msra.mxu0 0
  %3210 = vmatprep.subr.bf16.mxu0 0
  %3211 = vmatpush1.bf16.msra.mxu0 0
  %3212 = vmatprep.subr.bf16.mxu0 0
  %3213 = vmatpush1.bf16.msra.mxu0 0
  %3214 = vmatprep.subr.bf16.mxu0 0
  %3215 = vmatpush1.bf16.msra.mxu0 0
  %3216 = vmatprep.subr.bf16.mxu0 0
  %3217 = vmatpush1.bf16.msra.mxu0 0
  %3218 = vmatprep.subr.bf16.mxu0 0
  %3219 = vmatpush1.bf16.msra.mxu0 0
  %3220 = vmatprep.subr.bf16.mxu0 0
  %3221 = vmatpush1.bf16.msra.mxu0 0
  %3222 = vmatprep.subr.bf16.mxu0 0
  %3223 = vmatpush1.bf16.msra.mxu0 0
  %3224 = vmatprep.subr.bf16.mxu0 0
  %3225 = vmatpush1.bf16.msra.mxu0 0
  %3226 = vmatprep.subr.bf16.mxu0 0
  %3227 = vmatpush1.bf16.msra.mxu0 0
  %3228 = vmatprep.subr.bf16.mxu0 0
  %3229 = vmatpush1.bf16.msra.mxu0 0
  %3230 = vmatprep.subr.bf16.mxu0 0
  %3231 = vmatpush1.bf16.msra.mxu0 0
  %3232 = vmatprep.mubr.bf16.mxu0 0
  %3233 = vmatmul.mubr.bf16.gmra.mrb[0].mxu0 %v3195
  %v3234 = vpop.f32.mrb[0].mxu0
  %v3235 = vadd.f32 %v3174, %v3234
  %v3236 = vpop.f32.mrb[0].mxu0
  %v3237 = vpop.f32.mrb[0].mxu0
  %v3238 = vadd.f32 %v3177, %v3237
  %v3239 = vpop.f32.mrb[0].mxu0
  %3240 = vmatprep.mubr.bf16.mxu0 0
  %3241 = vmatmul.mubr.bf16.gmra.mrb[0].mxu0 %v3198
  %v3242 = vpop.f32.mrb[0].mxu0
  %v3243 = vadd.f32 %v3182, %v3242
  %v3244 = vpop.f32.mrb[0].mxu0
  %v3245 = vpop.f32.mrb[0].mxu0
  %v3246 = vadd.f32 %v3185, %v3245
  %v3247 = vpop.f32.mrb[0].mxu0
  %3248 = vdwg.mxu0
  %v3249 = vadd.f32 %v3235, %v1353
  %v3250 = vadd.f32 %v3238, %v1353
  %v3251 = vadd.f32 %v3243, %v1353
  %v3252 = vadd.f32 %v3246, %v1353
  %v3253 = vxor.u32 %v3249, 2147483648
  %v3254 = vxor.u32 %v3250, 2147483648
  %v3255 = vxor.u32 %v3251, 2147483648
  %v3256 = vxor.u32 %v3252, 2147483648
  %v3257 = vmul.f32 %v3253, 1.442695
  %v3258 = vpow.pop %v3257
  %v3259 = vmul.f32 %v3254, 1.442695
  %v3260 = vpow.pop %v3259
  %v3261 = vmul.f32 %v3255, 1.442695
  %v3262 = vpow.pop %v3261
  %v3263 = vmul.f32 %v3256, 1.442695
  %v3264 = vpow.pop %v3263
  %v3265 = vadd.f32 %v3258, 1.0
  %v3266 = vadd.f32 %v3260, 1.0
  %v3267 = vadd.f32 %v3262, 1.0
  %v3268 = vadd.f32 %v3264, 1.0
  %v3269 = vrcp.pop %v3265
  %v3270 = vmul.f32 1.0, %v3269
  %v3271 = vrcp.pop %v3266
  %v3272 = vmul.f32 1.0, %v3271
  %v3273 = vrcp.pop %v3267
  %v3274 = vmul.f32 1.0, %v3273
  %v3275 = vrcp.pop %v3268
  %v3276 = vmul.f32 1.0, %v3275
  %v3277 = vtanh.pop %v3249
  %v3278 = vtanh.pop %v3250
  %v3279 = vtanh.pop %v3251
  %v3280 = vtanh.pop %v3252
  %v3281 = vmul.f32 %v3270, %v2942
  %v3282 = vmul.f32 %v3272, %v2943
  %v3283 = vmul.f32 %v3274, %v2944
  %v3284 = vmul.f32 %v3276, %v2945
  %3289 = vrot.lane.b32.xlu0 %v3277, 64
  %v3290 = vpop.permute.xlu0 %3289
  %3291 = vrot.lane.b32.xlu0 %v3278, 64
  %v3292 = vpop.permute.xlu0 %3291
  %3293 = vrot.lane.b32.xlu0 %v3279, 64
  %v3294 = vpop.permute.xlu0 %3293
  %3295 = vrot.lane.b32.xlu0 %v3280, 64
  %v3296 = vpop.permute.xlu0 %3295
  %v3301 = vmul.f32 %v3270, %v3290
  %v3302 = vmul.f32 %v3272, %v3292
  %v3303 = vmul.f32 %v3274, %v3294
  %v3304 = vmul.f32 %v3276, %v3296
  %3309 = vrot.lane.b32.xlu0 %v3301, 32
  %v3310 = vpop.permute.xlu0 %3309
  %3311 = vrot.lane.b32.xlu0 %v3302, 32
  %v3312 = vpop.permute.xlu0 %3311
  %3313 = vrot.lane.b32.xlu0 %v3303, 32
  %v3314 = vpop.permute.xlu0 %3313
  %3315 = vrot.lane.b32.xlu0 %v3304, 32
  %v3316 = vpop.permute.xlu0 %3315
  %v3321 = vadd.f32 %v3281, %v3310
  %v3322 = vadd.f32 %v3282, %v3312
  %v3323 = vadd.f32 %v3283, %v3314
  %v3324 = vadd.f32 %v3284, %v3316
  %v3325 = vtanh.pop %v3321
  %v3326 = vtanh.pop %v3322
  %v3327 = vtanh.pop %v3323
  %v3328 = vtanh.pop %v3324
  %3333 = vrot.lane.b32.xlu0 %v3325, 64
  %v3334 = vpop.permute.xlu0 %3333
  %3335 = vrot.lane.b32.xlu0 %v3326, 64
  %v3336 = vpop.permute.xlu0 %3335
  %3337 = vrot.lane.b32.xlu0 %v3327, 64
  %v3338 = vpop.permute.xlu0 %3337
  %3339 = vrot.lane.b32.xlu0 %v3328, 64
  %v3340 = vpop.permute.xlu0 %3339
  %v3345 = vmul.f32 %v3270, %v3334
  %v3346 = vmul.f32 %v3272, %v3336
  %v3347 = vmul.f32 %v3274, %v3338
  %v3348 = vmul.f32 %v3276, %v3340
  %v3349 = vpack.c.bf16 %v3346, %v3345
  %v3350 = vpack.c.bf16 %v3348, %v3347
  %v3351 = vld [vmem:[#allocation2 + $0xc0] sm:$0xff]
  %v3352 = vld [vmem:[#allocation2 + $0xc8] sm:$0xff]
  %v3353 = vld [vmem:[#allocation2 + $0xd0] sm:$0xff]
  %v3354 = vld [vmem:[#allocation2 + $0xd8] sm:$0xff]
  %3355 = vmatprep.subr.bf16.mxu0 0
  %3356 = vmatpush1.bf16.msra.mxu0 %v1058
  %3357 = vmatprep.subr.bf16.mxu0 0
  %3358 = vmatpush1.bf16.msra.mxu0 %v1059
  %3359 = vmatprep.subr.bf16.mxu0 0
  %3360 = vmatpush1.bf16.msra.mxu0 0
  %3361 = vmatprep.subr.bf16.mxu0 0
  %3362 = vmatpush1.bf16.msra.mxu0 0
  %3363 = vmatprep.subr.bf16.mxu0 0
  %3364 = vmatpush1.bf16.msra.mxu0 0
  %3365 = vmatprep.subr.bf16.mxu0 0
  %3366 = vmatpush1.bf16.msra.mxu0 0
  %3367 = vmatprep.subr.bf16.mxu0 0
  %3368 = vmatpush1.bf16.msra.mxu0 0
  %3369 = vmatprep.subr.bf16.mxu0 0
  %3370 = vmatpush1.bf16.msra.mxu0 0
  %3371 = vmatprep.subr.bf16.mxu0 0
  %3372 = vmatpush1.bf16.msra.mxu0 0
  %3373 = vmatprep.subr.bf16.mxu0 0
  %3374 = vmatpush1.bf16.msra.mxu0 0
  %3375 = vmatprep.subr.bf16.mxu0 0
  %3376 = vmatpush1.bf16.msra.mxu0 0
  %3377 = vmatprep.subr.bf16.mxu0 0
  %3378 = vmatpush1.bf16.msra.mxu0 0
  %3379 = vmatprep.subr.bf16.mxu0 0
  %3380 = vmatpush1.bf16.msra.mxu0 0
  %3381 = vmatprep.subr.bf16.mxu0 0
  %3382 = vmatpush1.bf16.msra.mxu0 0
  %3383 = vmatprep.subr.bf16.mxu0 0
  %3384 = vmatpush1.bf16.msra.mxu0 0
  %3385 = vmatprep.subr.bf16.mxu0 0
  %3386 = vmatpush1.bf16.msra.mxu0 0
  %3387 = vmatprep.mubr.bf16.mxu0 0
  %3388 = vmatmul.mubr.bf16.gmra.mrb[0].mxu0 %v3134
  %v3389 = vpop.f32.mrb[0].mxu0
  %v3390 = vadd.f32 0.0, %v3389
  %v3391 = vpop.f32.mrb[0].mxu0
  %v3392 = vpop.f32.mrb[0].mxu0
  %v3393 = vadd.f32 0.0, %v3392
  %v3394 = vpop.f32.mrb[0].mxu0
  %3395 = vmatprep.mubr.bf16.mxu0 0
  %3396 = vmatmul.mubr.bf16.gmra.mrb[0].mxu0 %v3137
  %v3397 = vpop.f32.mrb[0].mxu0
  %v3398 = vadd.f32 0.0, %v3397
  %v3399 = vpop.f32.mrb[0].mxu0
  %v3400 = vpop.f32.mrb[0].mxu0
  %v3401 = vadd.f32 0.0, %v3400
  %v3402 = vpop.f32.mrb[0].mxu0
  %3403 = vdwg.mxu0
  %v3404 = vadd.f32 %v3351, %v3390
  %v3405 = vadd.f32 %v3352, %v3393
  %v3406 = vadd.f32 %v3353, %v3398
  %v3407 = vadd.f32 %v3354, %v3401
  %v3408 = vxor.u32 %v3404, 2147483648
  %v3409 = vxor.u32 %v3405, 2147483648
  %v3410 = vxor.u32 %v3406, 2147483648
  %v3411 = vxor.u32 %v3407, 2147483648
  %v3412 = vmul.f32 %v3408, 1.442695
  %v3413 = vpow.pop %v3412
  %v3414 = vmul.f32 %v3409, 1.442695
  %v3415 = vpow.pop %v3414
  %v3416 = vmul.f32 %v3410, 1.442695
  %v3417 = vpow.pop %v3416
  %v3418 = vmul.f32 %v3411, 1.442695
  %v3419 = vpow.pop %v3418
  %v3420 = vadd.f32 %v3413, 1.0
  %v3421 = vadd.f32 %v3415, 1.0
  %v3422 = vadd.f32 %v3417, 1.0
  %v3423 = vadd.f32 %v3419, 1.0
  %v3424 = vrcp.pop %v3420
  %v3425 = vmul.f32 1.0, %v3424
  %v3426 = vrcp.pop %v3421
  %v3427 = vmul.f32 1.0, %v3426
  %v3428 = vrcp.pop %v3422
  %v3429 = vmul.f32 1.0, %v3428
  %v3430 = vrcp.pop %v3423
  %v3431 = vmul.f32 1.0, %v3430
  %v3432 = vtanh.pop %v3404
  %v3433 = vtanh.pop %v3405
  %v3434 = vtanh.pop %v3406
  %v3435 = vtanh.pop %v3407
  %v3436 = vmul.f32 %v3425, %v3097
  %v3437 = vmul.f32 %v3427, %v3098
  %v3438 = vmul.f32 %v3429, %v3099
  %v3439 = vmul.f32 %v3431, %v3100
  %3444 = vrot.lane.b32.xlu0 %v3432, 64
  %v3445 = vpop.permute.xlu0 %3444
  %3446 = vrot.lane.b32.xlu0 %v3433, 64
  %v3447 = vpop.permute.xlu0 %3446
  %3448 = vrot.lane.b32.xlu0 %v3434, 64
  %v3449 = vpop.permute.xlu0 %3448
  %3450 = vrot.lane.b32.xlu0 %v3435, 64
  %v3451 = vpop.permute.xlu0 %3450
  %v3456 = vmul.f32 %v3425, %v3445
  %v3457 = vmul.f32 %v3427, %v3447
  %v3458 = vmul.f32 %v3429, %v3449
  %v3459 = vmul.f32 %v3431, %v3451
  %3464 = vrot.lane.b32.xlu0 %v3456, 32
  %v3465 = vpop.permute.xlu0 %3464
  %3466 = vrot.lane.b32.xlu0 %v3457, 32
  %v3467 = vpop.permute.xlu0 %3466
  %3468 = vrot.lane.b32.xlu0 %v3458, 32
  %v3469 = vpop.permute.xlu0 %3468
  %3470 = vrot.lane.b32.xlu0 %v3459, 32
  %v3471 = vpop.permute.xlu0 %3470
  %v3476 = vadd.f32 %v3436, %v3465
  %v3477 = vadd.f32 %v3437, %v3467
  %v3478 = vadd.f32 %v3438, %v3469
  %v3479 = vadd.f32 %v3439, %v3471
  %v3480 = vtanh.pop %v3476
  %v3481 = vtanh.pop %v3477
  %v3482 = vtanh.pop %v3478
  %v3483 = vtanh.pop %v3479
  %3488 = vrot.lane.b32.xlu0 %v3480, 64
  %v3489 = vpop.permute.xlu0 %3488
  %3490 = vrot.lane.b32.xlu0 %v3481, 64
  %v3491 = vpop.permute.xlu0 %3490
  %3492 = vrot.lane.b32.xlu0 %v3482, 64
  %v3493 = vpop.permute.xlu0 %3492
  %3494 = vrot.lane.b32.xlu0 %v3483, 64
  %v3495 = vpop.permute.xlu0 %3494
  %v3500 = vmul.f32 %v3425, %v3489
  %v3501 = vmul.f32 %v3427, %v3491
  %v3502 = vmul.f32 %v3429, %v3493
  %v3503 = vmul.f32 %v3431, %v3495
  %v3504 = vpack.c.bf16 %v3501, %v3500
  %v3505 = vpack.c.bf16 %v3503, %v3502
  %3508 = vrot.lane.b32.xlu0 %v3504, 32
  %v3509 = vpop.permute.xlu0 %3508
  %3510 = vrot.lane.b32.xlu0 %v3505, 32
  %v3511 = vpop.permute.xlu0 %3510
  %v3513 = vsel %vm804, %v3509, 0
  %v3516 = vsel %vm804, %v3511, 0
  %3518 = vmatprep.subr.bf16.mxu0 0
  %3519 = vmatpush1.bf16.msra.mxu0 %v1230
  %3520 = vmatprep.subr.bf16.mxu0 0
  %3521 = vmatpush1.bf16.msra.mxu0 %v1231
  %3522 = vmatprep.subr.bf16.mxu0 0
  %3523 = vmatpush1.bf16.msra.mxu0 0
  %3524 = vmatprep.subr.bf16.mxu0 0
  %3525 = vmatpush1.bf16.msra.mxu0 0
  %3526 = vmatprep.subr.bf16.mxu0 0
  %3527 = vmatpush1.bf16.msra.mxu0 0
  %3528 = vmatprep.subr.bf16.mxu0 0
  %3529 = vmatpush1.bf16.msra.mxu0 0
  %3530 = vmatprep.subr.bf16.mxu0 0
  %3531 = vmatpush1.bf16.msra.mxu0 0
  %3532 = vmatprep.subr.bf16.mxu0 0
  %3533 = vmatpush1.bf16.msra.mxu0 0
  %3534 = vmatprep.subr.bf16.mxu0 0
  %3535 = vmatpush1.bf16.msra.mxu0 0
  %3536 = vmatprep.subr.bf16.mxu0 0
  %3537 = vmatpush1.bf16.msra.mxu0 0
  %3538 = vmatprep.subr.bf16.mxu0 0
  %3539 = vmatpush1.bf16.msra.mxu0 0
  %3540 = vmatprep.subr.bf16.mxu0 0
  %3541 = vmatpush1.bf16.msra.mxu0 0
  %3542 = vmatprep.subr.bf16.mxu0 0
  %3543 = vmatpush1.bf16.msra.mxu0 0
  %3544 = vmatprep.subr.bf16.mxu0 0
  %3545 = vmatpush1.bf16.msra.mxu0 0
  %3546 = vmatprep.subr.bf16.mxu0 0
  %3547 = vmatpush1.bf16.msra.mxu0 0
  %3548 = vmatprep.subr.bf16.mxu0 0
  %3549 = vmatpush1.bf16.msra.mxu0 0
  %3550 = vmatprep.mubr.bf16.mxu0 0
  %3551 = vmatmul.mubr.bf16.gmra.mrb[0].mxu0 %v3513
  %v3552 = vpop.f32.mrb[0].mxu0
  %v3553 = vadd.f32 0.0, %v3552
  %v3554 = vpop.f32.mrb[0].mxu0
  %v3555 = vpop.f32.mrb[0].mxu0
  %v3556 = vadd.f32 0.0, %v3555
  %v3557 = vpop.f32.mrb[0].mxu0
  %3558 = vmatprep.mubr.bf16.mxu0 0
  %3559 = vmatmul.mubr.bf16.gmra.mrb[0].mxu0 %v3516
  %v3560 = vpop.f32.mrb[0].mxu0
  %v3561 = vadd.f32 0.0, %v3560
  %v3562 = vpop.f32.mrb[0].mxu0
  %v3563 = vpop.f32.mrb[0].mxu0
  %v3564 = vadd.f32 0.0, %v3563
  %v3565 = vpop.f32.mrb[0].mxu0
  %3566 = vdwg.mxu0
  %3569 = vrot.lane.b32.xlu0 %v3349, 32
  %v3570 = vpop.permute.xlu0 %3569
  %3571 = vrot.lane.b32.xlu0 %v3350, 32
  %v3572 = vpop.permute.xlu0 %3571
  %v3574 = vsel %vm804, %v3570, 0
  %v3577 = vsel %vm804, %v3572, 0
  %3579 = vmatprep.subr.bf16.mxu0 0
  %3580 = vmatpush1.bf16.msra.mxu0 %v1297
  %3581 = vmatprep.subr.bf16.mxu0 0
  %3582 = vmatpush1.bf16.msra.mxu0 %v1298
  %3583 = vmatprep.subr.bf16.mxu0 0
  %3584 = vmatpush1.bf16.msra.mxu0 0
  %3585 = vmatprep.subr.bf16.mxu0 0
  %3586 = vmatpush1.bf16.msra.mxu0 0
  %3587 = vmatprep.subr.bf16.mxu0 0
  %3588 = vmatpush1.bf16.msra.mxu0 0
  %3589 = vmatprep.subr.bf16.mxu0 0
  %3590 = vmatpush1.bf16.msra.mxu0 0
  %3591 = vmatprep.subr.bf16.mxu0 0
  %3592 = vmatpush1.bf16.msra.mxu0 0
  %3593 = vmatprep.subr.bf16.mxu0 0
  %3594 = vmatpush1.bf16.msra.mxu0 0
  %3595 = vmatprep.subr.bf16.mxu0 0
  %3596 = vmatpush1.bf16.msra.mxu0 0
  %3597 = vmatprep.subr.bf16.mxu0 0
  %3598 = vmatpush1.bf16.msra.mxu0 0
  %3599 = vmatprep.subr.bf16.mxu0 0
  %3600 = vmatpush1.bf16.msra.mxu0 0
  %3601 = vmatprep.subr.bf16.mxu0 0
  %3602 = vmatpush1.bf16.msra.mxu0 0
  %3603 = vmatprep.subr.bf16.mxu0 0
  %3604 = vmatpush1.bf16.msra.mxu0 0
  %3605 = vmatprep.subr.bf16.mxu0 0
  %3606 = vmatpush1.bf16.msra.mxu0 0
  %3607 = vmatprep.subr.bf16.mxu0 0
  %3608 = vmatpush1.bf16.msra.mxu0 0
  %3609 = vmatprep.subr.bf16.mxu0 0
  %3610 = vmatpush1.bf16.msra.mxu0 0
  %3611 = vmatprep.mubr.bf16.mxu0 0
  %3612 = vmatmul.mubr.bf16.gmra.mrb[0].mxu0 %v3574
  %v3613 = vpop.f32.mrb[0].mxu0
  %v3614 = vadd.f32 %v3553, %v3613
  %v3615 = vpop.f32.mrb[0].mxu0
  %v3616 = vpop.f32.mrb[0].mxu0
  %v3617 = vadd.f32 %v3556, %v3616
  %v3618 = vpop.f32.mrb[0].mxu0
  %3619 = vmatprep.mubr.bf16.mxu0 0
  %3620 = vmatmul.mubr.bf16.gmra.mrb[0].mxu0 %v3577
  %v3621 = vpop.f32.mrb[0].mxu0
  %v3622 = vadd.f32 %v3561, %v3621
  %v3623 = vpop.f32.mrb[0].mxu0
  %v3624 = vpop.f32.mrb[0].mxu0
  %v3625 = vadd.f32 %v3564, %v3624
  %v3626 = vpop.f32.mrb[0].mxu0
  %3627 = vdwg.mxu0
  %v3628 = vadd.f32 %v3614, %v1353
  %v3629 = vadd.f32 %v3617, %v1353
  %v3630 = vadd.f32 %v3622, %v1353
  %v3631 = vadd.f32 %v3625, %v1353
  %v3632 = vxor.u32 %v3628, 2147483648
  %v3633 = vxor.u32 %v3629, 2147483648
  %v3634 = vxor.u32 %v3630, 2147483648
  %v3635 = vxor.u32 %v3631, 2147483648
  %v3636 = vmul.f32 %v3632, 1.442695
  %v3637 = vpow.pop %v3636
  %v3638 = vmul.f32 %v3633, 1.442695
  %v3639 = vpow.pop %v3638
  %v3640 = vmul.f32 %v3634, 1.442695
  %v3641 = vpow.pop %v3640
  %v3642 = vmul.f32 %v3635, 1.442695
  %v3643 = vpow.pop %v3642
  %v3644 = vadd.f32 %v3637, 1.0
  %v3645 = vadd.f32 %v3639, 1.0
  %v3646 = vadd.f32 %v3641, 1.0
  %v3647 = vadd.f32 %v3643, 1.0
  %v3648 = vrcp.pop %v3644
  %v3649 = vmul.f32 1.0, %v3648
  %v3650 = vrcp.pop %v3645
  %v3651 = vmul.f32 1.0, %v3650
  %v3652 = vrcp.pop %v3646
  %v3653 = vmul.f32 1.0, %v3652
  %v3654 = vrcp.pop %v3647
  %v3655 = vmul.f32 1.0, %v3654
  %v3656 = vtanh.pop %v3628
  %v3657 = vtanh.pop %v3629
  %v3658 = vtanh.pop %v3630
  %v3659 = vtanh.pop %v3631
  %v3660 = vmul.f32 %v3649, %v3321
  %v3661 = vmul.f32 %v3651, %v3322
  %v3662 = vmul.f32 %v3653, %v3323
  %v3663 = vmul.f32 %v3655, %v3324
  %3668 = vrot.lane.b32.xlu0 %v3656, 64
  %v3669 = vpop.permute.xlu0 %3668
  %3670 = vrot.lane.b32.xlu0 %v3657, 64
  %v3671 = vpop.permute.xlu0 %3670
  %3672 = vrot.lane.b32.xlu0 %v3658, 64
  %v3673 = vpop.permute.xlu0 %3672
  %3674 = vrot.lane.b32.xlu0 %v3659, 64
  %v3675 = vpop.permute.xlu0 %3674
  %v3680 = vmul.f32 %v3649, %v3669
  %v3681 = vmul.f32 %v3651, %v3671
  %v3682 = vmul.f32 %v3653, %v3673
  %v3683 = vmul.f32 %v3655, %v3675
  %3688 = vrot.lane.b32.xlu0 %v3680, 32
  %v3689 = vpop.permute.xlu0 %3688
  %3690 = vrot.lane.b32.xlu0 %v3681, 32
  %v3691 = vpop.permute.xlu0 %3690
  %3692 = vrot.lane.b32.xlu0 %v3682, 32
  %v3693 = vpop.permute.xlu0 %3692
  %3694 = vrot.lane.b32.xlu0 %v3683, 32
  %v3695 = vpop.permute.xlu0 %3694
  %v3700 = vadd.f32 %v3660, %v3689
  %v3701 = vadd.f32 %v3661, %v3691
  %v3702 = vadd.f32 %v3662, %v3693
  %v3703 = vadd.f32 %v3663, %v3695
  %v3704 = vtanh.pop %v3700
  %v3705 = vtanh.pop %v3701
  %v3706 = vtanh.pop %v3702
  %v3707 = vtanh.pop %v3703
  %3712 = vrot.lane.b32.xlu0 %v3704, 64
  %v3713 = vpop.permute.xlu0 %3712
  %3714 = vrot.lane.b32.xlu0 %v3705, 64
  %v3715 = vpop.permute.xlu0 %3714
  %3716 = vrot.lane.b32.xlu0 %v3706, 64
  %v3717 = vpop.permute.xlu0 %3716
  %3718 = vrot.lane.b32.xlu0 %v3707, 64
  %v3719 = vpop.permute.xlu0 %3718
  %v3724 = vmul.f32 %v3649, %v3713
  %v3725 = vmul.f32 %v3651, %v3715
  %v3726 = vmul.f32 %v3653, %v3717
  %v3727 = vmul.f32 %v3655, %v3719
  %v3728 = vpack.c.bf16 %v3725, %v3724
  %v3729 = vpack.c.bf16 %v3727, %v3726
  %v3730 = vld [vmem:[#allocation2 + $0xe0] sm:$0xff]
  %v3731 = vld [vmem:[#allocation2 + $0xe8] sm:$0xff]
  %v3732 = vld [vmem:[#allocation2 + $0xf0] sm:$0xff]
  %v3733 = vld [vmem:[#allocation2 + $0xf8] sm:$0xff]
  %3734 = vmatprep.subr.bf16.mxu0 0
  %3735 = vmatpush1.bf16.msra.mxu0 %v1058
  %3736 = vmatprep.subr.bf16.mxu0 0
  %3737 = vmatpush1.bf16.msra.mxu0 %v1059
  %3738 = vmatprep.subr.bf16.mxu0 0
  %3739 = vmatpush1.bf16.msra.mxu0 0
  %3740 = vmatprep.subr.bf16.mxu0 0
  %3741 = vmatpush1.bf16.msra.mxu0 0
  %3742 = vmatprep.subr.bf16.mxu0 0
  %3743 = vmatpush1.bf16.msra.mxu0 0
  %3744 = vmatprep.subr.bf16.mxu0 0
  %3745 = vmatpush1.bf16.msra.mxu0 0
  %3746 = vmatprep.subr.bf16.mxu0 0
  %3747 = vmatpush1.bf16.msra.mxu0 0
  %3748 = vmatprep.subr.bf16.mxu0 0
  %3749 = vmatpush1.bf16.msra.mxu0 0
  %3750 = vmatprep.subr.bf16.mxu0 0
  %3751 = vmatpush1.bf16.msra.mxu0 0
  %3752 = vmatprep.subr.bf16.mxu0 0
  %3753 = vmatpush1.bf16.msra.mxu0 0
  %3754 = vmatprep.subr.bf16.mxu0 0
  %3755 = vmatpush1.bf16.msra.mxu0 0
  %3756 = vmatprep.subr.bf16.mxu0 0
  %3757 = vmatpush1.bf16.msra.mxu0 0
  %3758 = vmatprep.subr.bf16.mxu0 0
  %3759 = vmatpush1.bf16.msra.mxu0 0
  %3760 = vmatprep.subr.bf16.mxu0 0
  %3761 = vmatpush1.bf16.msra.mxu0 0
  %3762 = vmatprep.subr.bf16.mxu0 0
  %3763 = vmatpush1.bf16.msra.mxu0 0
  %3764 = vmatprep.subr.bf16.mxu0 0
  %3765 = vmatpush1.bf16.msra.mxu0 0
  %3766 = vmatprep.mubr.bf16.mxu0 0
  %3767 = vmatmul.mubr.bf16.gmra.mrb[0].mxu0 %v3513
  %v3768 = vpop.f32.mrb[0].mxu0
  %v3769 = vadd.f32 0.0, %v3768
  %v3770 = vpop.f32.mrb[0].mxu0
  %v3771 = vpop.f32.mrb[0].mxu0
  %v3772 = vadd.f32 0.0, %v3771
  %v3773 = vpop.f32.mrb[0].mxu0
  %3774 = vmatprep.mubr.bf16.mxu0 0
  %3775 = vmatmul.mubr.bf16.gmra.mrb[0].mxu0 %v3516
  %v3776 = vpop.f32.mrb[0].mxu0
  %v3777 = vadd.f32 0.0, %v3776
  %v3778 = vpop.f32.mrb[0].mxu0
  %v3779 = vpop.f32.mrb[0].mxu0
  %v3780 = vadd.f32 0.0, %v3779
  %v3781 = vpop.f32.mrb[0].mxu0
  %3782 = vdwg.mxu0
  %v3783 = vadd.f32 %v3730, %v3769
  %v3784 = vadd.f32 %v3731, %v3772
  %v3785 = vadd.f32 %v3732, %v3777
  %v3786 = vadd.f32 %v3733, %v3780
  %v3787 = vxor.u32 %v3783, 2147483648
  %v3788 = vxor.u32 %v3784, 2147483648
  %v3789 = vxor.u32 %v3785, 2147483648
  %v3790 = vxor.u32 %v3786, 2147483648
  %v3791 = vmul.f32 %v3787, 1.442695
  %v3792 = vpow.pop %v3791
  %v3793 = vmul.f32 %v3788, 1.442695
  %v3794 = vpow.pop %v3793
  %v3795 = vmul.f32 %v3789, 1.442695
  %v3796 = vpow.pop %v3795
  %v3797 = vmul.f32 %v3790, 1.442695
  %v3798 = vpow.pop %v3797
  %v3799 = vadd.f32 %v3792, 1.0
  %v3800 = vadd.f32 %v3794, 1.0
  %v3801 = vadd.f32 %v3796, 1.0
  %v3802 = vadd.f32 %v3798, 1.0
  %v3803 = vrcp.pop %v3799
  %v3804 = vmul.f32 1.0, %v3803
  %v3805 = vrcp.pop %v3800
  %v3806 = vmul.f32 1.0, %v3805
  %v3807 = vrcp.pop %v3801
  %v3808 = vmul.f32 1.0, %v3807
  %v3809 = vrcp.pop %v3802
  %v3810 = vmul.f32 1.0, %v3809
  %v3811 = vtanh.pop %v3783
  %v3812 = vtanh.pop %v3784
  %v3813 = vtanh.pop %v3785
  %v3814 = vtanh.pop %v3786
  %v3815 = vmul.f32 %v3804, %v3476
  %v3816 = vmul.f32 %v3806, %v3477
  %v3817 = vmul.f32 %v3808, %v3478
  %v3818 = vmul.f32 %v3810, %v3479
  %3823 = vrot.lane.b32.xlu0 %v3811, 64
  %v3824 = vpop.permute.xlu0 %3823
  %3825 = vrot.lane.b32.xlu0 %v3812, 64
  %v3826 = vpop.permute.xlu0 %3825
  %3827 = vrot.lane.b32.xlu0 %v3813, 64
  %v3828 = vpop.permute.xlu0 %3827
  %3829 = vrot.lane.b32.xlu0 %v3814, 64
  %v3830 = vpop.permute.xlu0 %3829
  %v3835 = vmul.f32 %v3804, %v3824
  %v3836 = vmul.f32 %v3806, %v3826
  %v3837 = vmul.f32 %v3808, %v3828
  %v3838 = vmul.f32 %v3810, %v3830
  %3843 = vrot.lane.b32.xlu0 %v3835, 32
  %v3844 = vpop.permute.xlu0 %3843
  %3845 = vrot.lane.b32.xlu0 %v3836, 32
  %v3846 = vpop.permute.xlu0 %3845
  %3847 = vrot.lane.b32.xlu0 %v3837, 32
  %v3848 = vpop.permute.xlu0 %3847
  %3849 = vrot.lane.b32.xlu0 %v3838, 32
  %v3850 = vpop.permute.xlu0 %3849
  %v3855 = vadd.f32 %v3815, %v3844
  %v3856 = vadd.f32 %v3816, %v3846
  %v3857 = vadd.f32 %v3817, %v3848
  %v3858 = vadd.f32 %v3818, %v3850
  %v3859 = vtanh.pop %v3855
  %v3860 = vtanh.pop %v3856
  %v3861 = vtanh.pop %v3857
  %v3862 = vtanh.pop %v3858
  %3867 = vrot.lane.b32.xlu0 %v3859, 64
  %v3868 = vpop.permute.xlu0 %3867
  %3869 = vrot.lane.b32.xlu0 %v3860, 64
  %v3870 = vpop.permute.xlu0 %3869
  %3871 = vrot.lane.b32.xlu0 %v3861, 64
  %v3872 = vpop.permute.xlu0 %3871
  %3873 = vrot.lane.b32.xlu0 %v3862, 64
  %v3874 = vpop.permute.xlu0 %3873
  %v3879 = vmul.f32 %v3804, %v3868
  %v3880 = vmul.f32 %v3806, %v3870
  %v3881 = vmul.f32 %v3808, %v3872
  %v3882 = vmul.f32 %v3810, %v3874
  %v3883 = vpack.c.bf16 %v3880, %v3879
  %v3884 = vpack.c.bf16 %v3882, %v3881
  %3887 = vrot.lane.b32.xlu0 %v3883, 32
  %v3888 = vpop.permute.xlu0 %3887
  %3889 = vrot.lane.b32.xlu0 %v3884, 32
  %v3890 = vpop.permute.xlu0 %3889
  %v3892 = vsel %vm804, %v3888, 0
  %v3895 = vsel %vm804, %v3890, 0
  %3897 = vmatprep.subr.bf16.mxu0 0
  %3898 = vmatpush1.bf16.msra.mxu0 %v1230
  %3899 = vmatprep.subr.bf16.mxu0 0
  %3900 = vmatpush1.bf16.msra.mxu0 %v1231
  %3901 = vmatprep.subr.bf16.mxu0 0
  %3902 = vmatpush1.bf16.msra.mxu0 0
  %3903 = vmatprep.subr.bf16.mxu0 0
  %3904 = vmatpush1.bf16.msra.mxu0 0
  %3905 = vmatprep.subr.bf16.mxu0 0
  %3906 = vmatpush1.bf16.msra.mxu0 0
  %3907 = vmatprep.subr.bf16.mxu0 0
  %3908 = vmatpush1.bf16.msra.mxu0 0
  %3909 = vmatprep.subr.bf16.mxu0 0
  %3910 = vmatpush1.bf16.msra.mxu0 0
  %3911 = vmatprep.subr.bf16.mxu0 0
  %3912 = vmatpush1.bf16.msra.mxu0 0
  %3913 = vmatprep.subr.bf16.mxu0 0
  %3914 = vmatpush1.bf16.msra.mxu0 0
  %3915 = vmatprep.subr.bf16.mxu0 0
  %3916 = vmatpush1.bf16.msra.mxu0 0
  %3917 = vmatprep.subr.bf16.mxu0 0
  %3918 = vmatpush1.bf16.msra.mxu0 0
  %3919 = vmatprep.subr.bf16.mxu0 0
  %3920 = vmatpush1.bf16.msra.mxu0 0
  %3921 = vmatprep.subr.bf16.mxu0 0
  %3922 = vmatpush1.bf16.msra.mxu0 0
  %3923 = vmatprep.subr.bf16.mxu0 0
  %3924 = vmatpush1.bf16.msra.mxu0 0
  %3925 = vmatprep.subr.bf16.mxu0 0
  %3926 = vmatpush1.bf16.msra.mxu0 0
  %3927 = vmatprep.subr.bf16.mxu0 0
  %3928 = vmatpush1.bf16.msra.mxu0 0
  %3929 = vmatprep.mubr.bf16.mxu0 0
  %3930 = vmatmul.mubr.bf16.gmra.mrb[0].mxu0 %v3892
  %v3931 = vpop.f32.mrb[0].mxu0
  %v3932 = vadd.f32 0.0, %v3931
  %v3933 = vpop.f32.mrb[0].mxu0
  %v3934 = vpop.f32.mrb[0].mxu0
  %v3935 = vadd.f32 0.0, %v3934
  %v3936 = vpop.f32.mrb[0].mxu0
  %3937 = vmatprep.mubr.bf16.mxu0 0
  %3938 = vmatmul.mubr.bf16.gmra.mrb[0].mxu0 %v3895
  %v3939 = vpop.f32.mrb[0].mxu0
  %v3940 = vadd.f32 0.0, %v3939
  %v3941 = vpop.f32.mrb[0].mxu0
  %v3942 = vpop.f32.mrb[0].mxu0
  %v3943 = vadd.f32 0.0, %v3942
  %v3944 = vpop.f32.mrb[0].mxu0
  %3945 = vdwg.mxu0
  %3948 = vrot.lane.b32.xlu0 %v3728, 32
  %v3949 = vpop.permute.xlu0 %3948
  %3950 = vrot.lane.b32.xlu0 %v3729, 32
  %v3951 = vpop.permute.xlu0 %3950
  %v3953 = vsel %vm804, %v3949, 0
  %v3956 = vsel %vm804, %v3951, 0
  %3958 = vmatprep.subr.bf16.mxu0 0
  %3959 = vmatpush1.bf16.msra.mxu0 %v1297
  %3960 = vmatprep.subr.bf16.mxu0 0
  %3961 = vmatpush1.bf16.msra.mxu0 %v1298
  %3962 = vmatprep.subr.bf16.mxu0 0
  %3963 = vmatpush1.bf16.msra.mxu0 0
  %3964 = vmatprep.subr.bf16.mxu0 0
  %3965 = vmatpush1.bf16.msra.mxu0 0
  %3966 = vmatprep.subr.bf16.mxu0 0
  %3967 = vmatpush1.bf16.msra.mxu0 0
  %3968 = vmatprep.subr.bf16.mxu0 0
  %3969 = vmatpush1.bf16.msra.mxu0 0
  %3970 = vmatprep.subr.bf16.mxu0 0
  %3971 = vmatpush1.bf16.msra.mxu0 0
  %3972 = vmatprep.subr.bf16.mxu0 0
  %3973 = vmatpush1.bf16.msra.mxu0 0
  %3974 = vmatprep.subr.bf16.mxu0 0
  %3975 = vmatpush1.bf16.msra.mxu0 0
  %3976 = vmatprep.subr.bf16.mxu0 0
  %3977 = vmatpush1.bf16.msra.mxu0 0
  %3978 = vmatprep.subr.bf16.mxu0 0
  %3979 = vmatpush1.bf16.msra.mxu0 0
  %3980 = vmatprep.subr.bf16.mxu0 0
  %3981 = vmatpush1.bf16.msra.mxu0 0
  %3982 = vmatprep.subr.bf16.mxu0 0
  %3983 = vmatpush1.bf16.msra.mxu0 0
  %3984 = vmatprep.subr.bf16.mxu0 0
  %3985 = vmatpush1.bf16.msra.mxu0 0
  %3986 = vmatprep.subr.bf16.mxu0 0
  %3987 = vmatpush1.bf16.msra.mxu0 0
  %3988 = vmatprep.subr.bf16.mxu0 0
  %3989 = vmatpush1.bf16.msra.mxu0 0
  %3990 = vmatprep.mubr.bf16.mxu0 0
  %3991 = vmatmul.mubr.bf16.gmra.mrb[0].mxu0 %v3953
  %v3992 = vpop.f32.mrb[0].mxu0
  %v3993 = vadd.f32 %v3932, %v3992
  %v3994 = vpop.f32.mrb[0].mxu0
  %v3995 = vpop.f32.mrb[0].mxu0
  %v3996 = vadd.f32 %v3935, %v3995
  %v3997 = vpop.f32.mrb[0].mxu0
  %3998 = vmatprep.mubr.bf16.mxu0 0
  %3999 = vmatmul.mubr.bf16.gmra.mrb[0].mxu0 %v3956
  %v4000 = vpop.f32.mrb[0].mxu0
  %v4001 = vadd.f32 %v3940, %v4000
  %v4002 = vpop.f32.mrb[0].mxu0
  %v4003 = vpop.f32.mrb[0].mxu0
  %v4004 = vadd.f32 %v3943, %v4003
  %v4005 = vpop.f32.mrb[0].mxu0
  %4006 = vdwg.mxu0
  %v4007 = vadd.f32 %v3993, %v1353
  %v4008 = vadd.f32 %v3996, %v1353
  %v4009 = vadd.f32 %v4001, %v1353
  %v4010 = vadd.f32 %v4004, %v1353
  %v4011 = vxor.u32 %v4007, 2147483648
  %v4012 = vxor.u32 %v4008, 2147483648
  %v4013 = vxor.u32 %v4009, 2147483648
  %v4014 = vxor.u32 %v4010, 2147483648
  %v4015 = vmul.f32 %v4011, 1.442695
  %v4016 = vpow.pop %v4015
  %v4017 = vmul.f32 %v4012, 1.442695
  %v4018 = vpow.pop %v4017
  %v4019 = vmul.f32 %v4013, 1.442695
  %v4020 = vpow.pop %v4019
  %v4021 = vmul.f32 %v4014, 1.442695
  %v4022 = vpow.pop %v4021
  %v4023 = vadd.f32 %v4016, 1.0
  %v4024 = vadd.f32 %v4018, 1.0
  %v4025 = vadd.f32 %v4020, 1.0
  %v4026 = vadd.f32 %v4022, 1.0
  %v4027 = vrcp.pop %v4023
  %v4028 = vmul.f32 1.0, %v4027
  %v4029 = vrcp.pop %v4024
  %v4030 = vmul.f32 1.0, %v4029
  %v4031 = vrcp.pop %v4025
  %v4032 = vmul.f32 1.0, %v4031
  %v4033 = vrcp.pop %v4026
  %v4034 = vmul.f32 1.0, %v4033
  %v4035 = vtanh.pop %v4007
  %v4036 = vtanh.pop %v4008
  %v4037 = vtanh.pop %v4009
  %v4038 = vtanh.pop %v4010
  %v4039 = vmul.f32 %v4028, %v3700
  %v4040 = vmul.f32 %v4030, %v3701
  %v4041 = vmul.f32 %v4032, %v3702
  %v4042 = vmul.f32 %v4034, %v3703
  %4047 = vrot.lane.b32.xlu0 %v4035, 64
  %v4048 = vpop.permute.xlu0 %4047
  %4049 = vrot.lane.b32.xlu0 %v4036, 64
  %v4050 = vpop.permute.xlu0 %4049
  %4051 = vrot.lane.b32.xlu0 %v4037, 64
  %v4052 = vpop.permute.xlu0 %4051
  %4053 = vrot.lane.b32.xlu0 %v4038, 64
  %v4054 = vpop.permute.xlu0 %4053
  %v4059 = vmul.f32 %v4028, %v4048
  %v4060 = vmul.f32 %v4030, %v4050
  %v4061 = vmul.f32 %v4032, %v4052
  %v4062 = vmul.f32 %v4034, %v4054
  %4067 = vrot.lane.b32.xlu0 %v4059, 32
  %v4068 = vpop.permute.xlu0 %4067
  %4069 = vrot.lane.b32.xlu0 %v4060, 32
  %v4070 = vpop.permute.xlu0 %4069
  %4071 = vrot.lane.b32.xlu0 %v4061, 32
  %v4072 = vpop.permute.xlu0 %4071
  %4073 = vrot.lane.b32.xlu0 %v4062, 32
  %v4074 = vpop.permute.xlu0 %4073
  %v4079 = vadd.f32 %v4039, %v4068
  %v4080 = vadd.f32 %v4040, %v4070
  %v4081 = vadd.f32 %v4041, %v4072
  %v4082 = vadd.f32 %v4042, %v4074
  %v4083 = vtanh.pop %v4079
  %v4084 = vtanh.pop %v4080
  %v4085 = vtanh.pop %v4081
  %v4086 = vtanh.pop %v4082
  %4091 = vrot.lane.b32.xlu0 %v4083, 64
  %v4092 = vpop.permute.xlu0 %4091
  %4093 = vrot.lane.b32.xlu0 %v4084, 64
  %v4094 = vpop.permute.xlu0 %4093
  %4095 = vrot.lane.b32.xlu0 %v4085, 64
  %v4096 = vpop.permute.xlu0 %4095
  %4097 = vrot.lane.b32.xlu0 %v4086, 64
  %v4098 = vpop.permute.xlu0 %4097
  %v4103 = vmul.f32 %v4028, %v4092
  %v4104 = vmul.f32 %v4030, %v4094
  %v4105 = vmul.f32 %v4032, %v4096
  %v4106 = vmul.f32 %v4034, %v4098
  %v4107 = vpack.c.bf16 %v4104, %v4103
  %v4108 = vpack.c.bf16 %v4106, %v4105
  %v4109 = vlaneseq
  %v4110 = vshrl.u32 %v4109, 7
  %v4111 = vsub.s32 0, %v4110
  %v4112 = vrot.slane %v43, %v4111
  %4115 = vrot.lane.b32.xlu0 %v4107, 32
  %v4116 = vpop.permute.xlu0 %4115
  %4117 = vrot.lane.b32.xlu0 %v4108, 32
  %v4118 = vpop.permute.xlu0 %4117
  %v4123 = vunpack.c.l.b16 %v37
  %v4124 = vunpack.c.l.b16 %v38
  %v4125 = vunpack.c.l.b16 %v39
  %v4126 = vunpack.c.l.b16 %v40
  %v4127 = vpack.c.b16 %v4124, %v4123
  %v4128 = vpack.c.b16 %v4126, %v4125
  %v4132 = vsel %vm804, %v4116, 0
  %v4135 = vsel %vm804, %v4118, 0
  %4137 = vmatprep.subr.bf16.mxu0 0
  %4138 = vmatpush1.bf16.msra.mxu0 %v4127
  %4139 = vmatprep.subr.bf16.mxu0 0
  %4140 = vmatpush1.bf16.msra.mxu0 %v4128
  %4141 = vmatprep.subr.bf16.mxu0 0
  %4142 = vmatpush1.bf16.msra.mxu0 0
  %4143 = vmatprep.subr.bf16.mxu0 0
  %4144 = vmatpush1.bf16.msra.mxu0 0
  %4145 = vmatprep.subr.bf16.mxu0 0
  %4146 = vmatpush1.bf16.msra.mxu0 0
  %4147 = vmatprep.subr.bf16.mxu0 0
  %4148 = vmatpush1.bf16.msra.mxu0 0
  %4149 = vmatprep.subr.bf16.mxu0 0
  %4150 = vmatpush1.bf16.msra.mxu0 0
  %4151 = vmatprep.subr.bf16.mxu0 0
  %4152 = vmatpush1.bf16.msra.mxu0 0
  %4153 = vmatprep.subr.bf16.mxu0 0
  %4154 = vmatpush1.bf16.msra.mxu0 0
  %4155 = vmatprep.subr.bf16.mxu0 0
  %4156 = vmatpush1.bf16.msra.mxu0 0
  %4157 = vmatprep.subr.bf16.mxu0 0
  %4158 = vmatpush1.bf16.msra.mxu0 0
  %4159 = vmatprep.subr.bf16.mxu0 0
  %4160 = vmatpush1.bf16.msra.mxu0 0
  %4161 = vmatprep.subr.bf16.mxu0 0
  %4162 = vmatpush1.bf16.msra.mxu0 0
  %4163 = vmatprep.subr.bf16.mxu0 0
  %4164 = vmatpush1.bf16.msra.mxu0 0
  %4165 = vmatprep.subr.bf16.mxu0 0
  %4166 = vmatpush1.bf16.msra.mxu0 0
  %4167 = vmatprep.subr.bf16.mxu0 0
  %4168 = vmatpush1.bf16.msra.mxu0 0
  %4169 = vmatprep.mubr.bf16.mxu0 0
  %4170 = vmatmul.mubr.bf16.gmra.mrb[0].mxu0 %v4132
  %v4171 = vpop.f32.mrb[0].mxu0
  %v4172 = vadd.f32 %v4112, %v4171
  %v4173 = vpop.f32.mrb[0].mxu0
  %v4174 = vpop.f32.mrb[0].mxu0
  %v4175 = vadd.f32 %v4112, %v4174
  %v4176 = vpop.f32.mrb[0].mxu0
  %4177 = vmatprep.mubr.bf16.mxu0 0
  %4178 = vmatmul.mubr.bf16.gmra.mrb[0].mxu0 %v4135
  %v4179 = vpop.f32.mrb[0].mxu0
  %v4180 = vadd.f32 %v4112, %v4179
  %v4181 = vpop.f32.mrb[0].mxu0
  %v4182 = vpop.f32.mrb[0].mxu0
  %v4183 = vadd.f32 %v4112, %v4182
  %v4184 = vpop.f32.mrb[0].mxu0
  %4185 = vdwg.mxu0
  %4186 = vst [vmem:[%s5] sm:$0xff] %v4172
  %4187 = vst [vmem:[%s5 + $0x8] sm:$0xff] %v4175
  %4188 = vst [vmem:[%s5 + $0x10] sm:$0xff] %v4180
  %4189 = vst [vmem:[%s5 + $0x18] sm:$0xff] %v4183
  // Predicated region
  $region22: #{dstagnn_forward.1} parent=0 // pred_check
    _
  $region23: #{dstagnn_forward.1} parent=0 // pred_check_branch
    %4191 = sbr.rel (0) target = $region25
  $region24: #{dstagnn_forward.1} parent=0 // pred_region
    _
  $region25: #{dstagnn_forward.1} parent=0 // pred_fallthru
    _
  // Predicated region
  $region26: #{dstagnn_forward.1} parent=0 // pred_check
    _
  $region27: #{dstagnn_forward.1} parent=0 // pred_check_branch
    %4193 = sbr.rel (0) target = $region29
  $region28: #{dstagnn_forward.1} parent=0 // pred_region
    _
  $region29: #{dstagnn_forward.1} parent=0 // pred_fallthru
    _

</llo_original>
